<compile_context>
chip_gen: v7x
topology: tpu7x:2x2x1
jax: 0.10.0
libtpu: 0.0.40
codegen_flags: <defaults>
</compile_context>

<pallas_src>
import functools
import math

import jax
import jax.numpy as jnp
import numpy as np
from jax import lax
from jax.experimental import pallas as pl
from jax.experimental.pallas import tpu as pltpu

# Safe everywhere; raise to ~96 MiB on v5e/v6e (128 MiB VMEM) for larger tiles,
# keep <= ~48 MiB on v7x (64 MiB VMEM).
_VMEM_LIMIT = 48 * 1024 * 1024


# ----------------------------- shared math helpers ----------------------------
def _rms_norm(t, eps=1e-6):
    return t * jax.lax.rsqrt(jnp.mean(t * t, axis=-1, keepdims=True) + eps)


def _gelu_tanh(t):
    c = 0.7978845608028654  # sqrt(2/pi)
    return 0.5 * t * (1.0 + jnp.tanh(c * (t + 0.044715 * t * t * t)))


def _silu(t):
    return t * jax.nn.sigmoid(t)


def _pick_heads_per_step(num_heads, head_dim):
    """Smallest head-group size G dividing num_heads with G*head_dim % 128 == 0."""
    for g in range(1, num_heads + 1):
        if num_heads % g == 0 and (g * head_dim) % 128 == 0:
            return g
    return num_heads


# ------------------------ adaLN modulation (both streams) ----------------------
def adaln_kernel(c_ref, w_ref, b_ref, out_ref):
    # out[stream, :, n-tile] = SiLU(c) @ W_ada[stream][:, n-tile] + b_ada[stream][n-tile]
    cs = _silu(c_ref[...]).astype(jnp.bfloat16)
    out_ref[0] = jnp.dot(cs, w_ref[0], preferred_element_type=jnp.float32) + b_ref[0]


def adaln(c, w_ada2, b_ada2, *, block_n):
    """c: (B,H) f32; w_ada2: (2,H,6H) bf16; b_ada2: (2,1,6H) f32 -> (2,B,6H) f32."""
    B, H = c.shape
    N = w_ada2.shape[-1]
    return pl.pallas_call(
        adaln_kernel,
        out_shape=jax.ShapeDtypeStruct((2, B, N), jnp.float32),
        grid=(2, N // block_n),
        in_specs=[
            pl.BlockSpec((B, H), lambda s, n: (0, 0)),
            pl.BlockSpec((1, H, block_n), lambda s, n: (s, 0, n)),
            pl.BlockSpec((1, 1, block_n), lambda s, n: (s, 0, n)),
        ],
        out_specs=pl.BlockSpec((1, B, block_n), lambda s, n: (s, 0, n)),
        compiler_params=pltpu.CompilerParams(
            dimension_semantics=("parallel", "parallel"),
            vmem_limit_bytes=_VMEM_LIMIT),
    )(c, w_ada2, b_ada2)


# ---------------- fused RMSNorm + modulate + QKV (joint layout) ----------------
def pre_qkv_kernel(blk_ref, seq_ref, mods_ref, w_ref, qkv_ref):
    del blk_ref  # block->stream map is only consumed by the index_maps
    x = seq_ref[0].astype(jnp.float32)           # (bs, H)
    m = mods_ref[0, 0]                           # (6, H) f32, rows = mod vectors
    shift_msa = m[0:1, :]
    scale_msa = m[1:2, :]
    xm = (_rms_norm(x) * (1.0 + scale_msa) + shift_msa).astype(jnp.bfloat16)
    # single (H, 3H) matmul; softmax scale already folded into the q columns
    qkv_ref[0] = jnp.dot(xm, w_ref[0],
                         preferred_element_type=jnp.float32).astype(jnp.bfloat16)


def pre_qkv(seq, mods4, w_qkv2, blk_map, *, block_seq):
    """seq: (B,St,H) bf16 -> qkv: (B,St,3H) bf16 (joint sequence layout)."""
    B, St, H = seq.shape
    N3 = w_qkv2.shape[-1]
    nblk = St // block_seq
    # grid order (seq-block, batch): the (H,3H) weight block index only changes
    # at the single ctx<->x stream boundary -> weights DMA'd twice total.
    gs = pltpu.PrefetchScalarGridSpec(
        num_scalar_prefetch=1,
        grid=(nblk, B),
        in_specs=[
            pl.BlockSpec((1, block_seq, H), lambda s, b, blk: (b, s, 0)),
            pl.BlockSpec((1, 1, 6, H), lambda s, b, blk: (blk[s], b, 0, 0)),
            pl.BlockSpec((1, H, N3), lambda s, b, blk: (blk[s], 0, 0)),
        ],
        out_specs=pl.BlockSpec((1, block_seq, N3), lambda s, b, blk: (b, s, 0)),
    )
    return pl.pallas_call(
        pre_qkv_kernel,
        grid_spec=gs,
        out_shape=jax.ShapeDtypeStruct((B, St, N3), jnp.bfloat16),
        compiler_params=pltpu.CompilerParams(
            dimension_semantics=("parallel", "parallel"),
            vmem_limit_bytes=_VMEM_LIMIT),
    )(blk_map, seq, mods4, w_qkv2)


# ------------------------- flash (online-softmax) attention --------------------
def flash_attn_kernel(q_ref, k_ref, v_ref, o_ref, m_scr, l_scr, acc_scr,
                      *, heads_per_step, head_dim):
    ki = pl.program_id(3)

    @pl.when(ki == 0)
    def _():
        m_scr[...] = jnp.full_like(m_scr, -jnp.inf)
        l_scr[...] = jnp.zeros_like(l_scr)
        acc_scr[...] = jnp.zeros_like(acc_scr)

    q = q_ref[0]          # (bq,  G*hd) bf16, softmax scale already folded in
    k = k_ref[0]          # (bkv, G*hd) bf16
    v = v_ref[0]          # (bkv, G*hd) bf16
    dims = (((1,), (1,)), ((), ()))   # contract last dims: q @ k^T without k.T

    for g in range(heads_per_step):   # static, small (typically 2)
        sl = slice(g * head_dim, (g + 1) * head_dim)
        s = lax.dot_general(q[:, sl], k[:, sl], dims,
                            preferred_element_type=jnp.float32)   # (bq, bkv)
        m_prev = m_scr[g]
        m_new = jnp.maximum(m_prev, jnp.max(s, axis=-1, keepdims=True))
        alpha = jnp.exp(m_prev - m_new)
        p = jnp.exp(s - m_new)
        l_scr[g] = alpha * l_scr[g] + jnp.sum(p, axis=-1, keepdims=True)
        acc_scr[g] = alpha * acc_scr[g] + jnp.dot(
            p.astype(jnp.bfloat16), v[:, sl], preferred_element_type=jnp.float32)
        m_scr[g] = m_new

    @pl.when(ki == pl.num_programs(3) - 1)
    def _():
        outs = []
        for g in range(heads_per_step):
            inv = pl.reciprocal(l_scr[g], approx=True)
            outs.append(acc_scr[g] * inv)
        # heads of the group concatenated along lanes -> 128-lane unmasked store
        o_ref[0] = jnp.concatenate(outs, axis=-1).astype(o_ref.dtype)


def flash_attention(qkv, *, num_heads, head_dim, heads_per_step, block_q, block_kv):
    """qkv: (B, St, 3H) bf16 joint layout -> attn: (B, St, H) bf16 (head-major cols)."""
    B, St, _ = qkv.shape
    H = num_heads * head_dim
    G = heads_per_step
    n_hgrp = num_heads // G
    ghd = G * head_dim
    kernel = functools.partial(flash_attn_kernel, heads_per_step=G, head_dim=head_dim)
    # q / k / v are column slices of the same qkv buffer (block index along last axis)
    q_spec = pl.BlockSpec((1, block_q, ghd), lambda b, h, qi, ki: (b, qi, h))
    k_spec = pl.BlockSpec((1, block_kv, ghd), lambda b, h, qi, ki: (b, ki, n_hgrp + h))
    v_spec = pl.BlockSpec((1, block_kv, ghd),
                          lambda b, h, qi, ki: (b, ki, 2 * n_hgrp + h))
    return pl.pallas_call(
        kernel,
        out_shape=jax.ShapeDtypeStruct((B, St, H), jnp.bfloat16),
        grid=(B, n_hgrp, St // block_q, St // block_kv),
        in_specs=[q_spec, k_spec, v_spec],
        out_specs=pl.BlockSpec((1, block_q, ghd), lambda b, h, qi, ki: (b, qi, h)),
        scratch_shapes=[
            pltpu.VMEM((G, block_q, 1), jnp.float32),        # m
            pltpu.VMEM((G, block_q, 1), jnp.float32),        # l
            pltpu.VMEM((G, block_q, head_dim), jnp.float32), # acc
        ],
        compiler_params=pltpu.CompilerParams(
            dimension_semantics=("parallel", "parallel", "parallel", "arbitrary"),
            vmem_limit_bytes=_VMEM_LIMIT),
    )(qkv, qkv, qkv)


# -------- post-attention: proj + gate + residual + RMSNorm + MLP + residual -----
def post_kernel(attn_ref, res_ref, mods_ref, wproj_ref, bproj_ref,
                wfc1_ref, bfc1_ref, wfc2_ref, bfc2_ref, out_ref,
                y1_scr, am_scr, acc_scr):
    mi = pl.program_id(2)

    @pl.when(mi == 0)
    def _():
        m = mods_ref[0, 0]                       # (6, H)
        gate_msa = m[2:3, :]
        shift_mlp = m[3:4, :]
        scale_mlp = m[4:5, :]
        a = attn_ref[0]                          # (bs, H) bf16
        proj = jnp.dot(a, wproj_ref[...],
                       preferred_element_type=jnp.float32) + bproj_ref[...]
        y1 = proj * gate_msa + res_ref[0].astype(jnp.float32)
        y1_scr[...] = y1
        am_scr[...] = (_rms_norm(y1) * (1.0 + scale_mlp)
                       + shift_mlp).astype(jnp.bfloat16)
        acc_scr[...] = jnp.zeros_like(acc_scr)

    # streamed MLP-hidden tile: fc1 + gelu(tanh) + fc2 accumulation (f32)
    h1 = jnp.dot(am_scr[...], wfc1_ref[...],
                 preferred_element_type=jnp.float32) + bfc1_ref[...]
    h1 = _gelu_tanh(h1).astype(jnp.bfloat16)
    acc_scr[...] += jnp.dot(h1, wfc2_ref[...], preferred_element_type=jnp.float32)

    @pl.when(mi == pl.num_programs(2) - 1)
    def _():
        gate_mlp = mods_ref[0, 0][5:6, :]
        out_ref[0] = ((acc_scr[...] + bfc2_ref[...]) * gate_mlp
                      + y1_scr[...]).astype(out_ref.dtype)


def post_attention(attn_joint, residual, mods4, params, *, stream,
                   seq_block_offset, block_seq, block_mlp, out_dtype):
    B, S, H = residual.shape
    M = params["w_fc1"].shape[1]
    return pl.pallas_call(
        post_kernel,
        out_shape=jax.ShapeDtypeStruct((B, S, H), out_dtype),
        grid=(B, S // block_seq, M // block_mlp),
        in_specs=[
            # joint-layout attention output, offset into this stream's rows
            pl.BlockSpec((1, block_seq, H),
                         lambda b, s, mi: (b, s + seq_block_offset, 0)),
            pl.BlockSpec((1, block_seq, H), lambda b, s, mi: (b, s, 0)),
            pl.BlockSpec((1, 1, 6, H), lambda b, s, mi: (stream, b, 0, 0)),
            pl.BlockSpec((H, H), lambda b, s, mi: (0, 0)),
            pl.BlockSpec((1, H), lambda b, s, mi: (0, 0)),
            pl.BlockSpec((H, block_mlp), lambda b, s, mi: (0, mi)),
            pl.BlockSpec((1, block_mlp), lambda b, s, mi: (0, mi)),
            pl.BlockSpec((block_mlp, H), lambda b, s, mi: (mi, 0)),
            pl.BlockSpec((1, H), lambda b, s, mi: (0, 0)),
        ],
        out_specs=pl.BlockSpec((1, block_seq, H), lambda b, s, mi: (b, s, 0)),
        scratch_shapes=[
            pltpu.VMEM((block_seq, H), jnp.float32),   # y1 (post-attn residual)
            pltpu.VMEM((block_seq, H), jnp.bfloat16),  # modulated MLP input
            pltpu.VMEM((block_seq, H), jnp.float32),   # MLP accumulator
        ],
        compiler_params=pltpu.CompilerParams(
            dimension_semantics=("parallel", "parallel", "arbitrary"),
            vmem_limit_bytes=_VMEM_LIMIT),
    )(
        attn_joint, residual, mods4,
        params["w_proj"], params["b_proj"],
        params["w_fc1"], params["b_fc1"],
        params["w_fc2"], params["b_fc2"],
    )


# -------------------- one-time parameter preprocessing (outside jit) -----------
def prepare_joint_block_params(p_ctx, p_x, *, num_heads):
    """Stack / cast / scale-fold all weights once at load time (NOT inside jit)."""
    bf = jnp.bfloat16
    H = p_ctx["w_qkv"].shape[0]
    M = p_ctx["w_fc1"].shape[1]
    hd = H // num_heads
    scale = 1.0 / math.sqrt(hd)

    def fold_qkv(w):   # fold 1/sqrt(hd) into the q columns
        return jnp.concatenate([w[:, :H] * scale, w[:, H:]], axis=1).astype(bf)

    def prep_post(p):
        return dict(
            w_proj=p["w_proj"].astype(bf), b_proj=p["b_proj"].reshape(1, H),
            w_fc1=p["w_fc1"].astype(bf), b_fc1=p["b_fc1"].reshape(1, M),
            w_fc2=p["w_fc2"].astype(bf), b_fc2=p["b_fc2"].reshape(1, H),
        )

    return dict(
        w_ada2=jnp.stack([p_ctx["w_ada"], p_x["w_ada"]]).astype(bf),
        b_ada2=jnp.stack([p_ctx["b_ada"], p_x["b_ada"]]).reshape(2, 1, 6 * H),
        w_qkv2=jnp.stack([fold_qkv(p_ctx["w_qkv"]), fold_qkv(p_x["w_qkv"])]),
        post_ctx=prep_post(p_ctx),
        post_x=prep_post(p_x),
    )


# --------------------------------- full block ----------------------------------
def joint_block_forward(context, x, c, params, *, num_heads,
                        block_seq, block_q, block_kv, block_mlp, block_ada_n,
                        out_dtype=jnp.float32):
    """block_mixing(context, x, context_block, x_block, c) -> (context, x)."""
    B, Sc, H = context.shape
    Sx = x.shape[1]
    St = Sc + Sx
    hd = H // num_heads
    M = params["post_ctx"]["w_fc1"].shape[1]

    G = _pick_heads_per_step(num_heads, hd)
    ghd = G * hd
    assert H % num_heads == 0
    assert ghd % 128 == 0, "need a head group of 128 lanes (e.g. 2 heads at hd=64)"
    assert Sc % block_seq == 0 and Sx % block_seq == 0 and block_seq % 8 == 0
    assert St % block_q == 0 and St % block_kv == 0
    assert block_q % 8 == 0 and block_kv % 8 == 0
    assert M % block_mlp == 0 and (block_mlp % 128 == 0 or block_mlp == M)
    assert (6 * H) % block_ada_n == 0 and (block_ada_n % 128 == 0 or block_ada_n == 6 * H)

    # --- adaLN modulation for both streams, row-indexed layout (2, B, 6, H) ---
    mods = adaln(c, params["w_ada2"], params["b_ada2"],
                 block_n=block_ada_n).reshape(2, B, 6, H)

    # --- fused RMSNorm+modulate+QKV, joint (B, St, 3H) bf16 qkv buffer ---
    seq = jnp.concatenate(
        [context.astype(jnp.bfloat16), x.astype(jnp.bfloat16)], axis=1)  # bf16 concat
    sc_blocks = Sc // block_seq
    blk_map = jnp.asarray(
        np.array([0] * sc_blocks + [1] * (Sx // block_seq), dtype=np.int32))
    qkv = pre_qkv(seq, mods, params["w_qkv2"], blk_map, block_seq=block_seq)

    # --- flash attention directly on the joint qkv buffer (no head transposes) ---
    attn = flash_attention(qkv, num_heads=num_heads, head_dim=hd,
                           heads_per_step=G, block_q=block_q, block_kv=block_kv)

    # --- per-stream post-attention reading the joint attn via offset index_map ---
    ctx_out = post_attention(attn, context, mods, params["post_ctx"], stream=0,
                             seq_block_offset=0, block_seq=block_seq,
                             block_mlp=block_mlp, out_dtype=out_dtype)
    x_out = post_attention(attn, x, mods, params["post_x"], stream=1,
                           seq_block_offset=sc_blocks, block_seq=block_seq,
                           block_mlp=block_mlp, out_dtype=out_dtype)
    return ctx_out, x_out


# ------------------------------ pure-JAX reference ------------------------------
def ref_joint_block(context, x, c, p_ctx, p_x, num_heads):
    def pre(t, p):
        mods = _silu(c) @ p["w_ada"] + p["b_ada"]
        sh, sc, g, shm, scm, gm = jnp.split(mods, 6, axis=1)
        tm = _rms_norm(t) * (1 + sc[:, None, :]) + sh[:, None, :]
        return tm @ p["w_qkv"], (g, shm, scm, gm)

    def attn_ref(q, k, v):
        B, S, H = q.shape
        hd = H // num_heads
        qh = q.reshape(B, S, num_heads, hd).transpose(0, 2, 1, 3)
        kh = k.reshape(B, S, num_heads, hd).transpose(0, 2, 1, 3)
        vh = v.reshape(B, S, num_heads, hd).transpose(0, 2, 1, 3)
        s = jnp.einsum("bhqd,bhkd->bhqk", qh, kh) / (hd ** 0.5)
        p = jax.nn.softmax(s, axis=-1)
        o = jnp.einsum("bhqk,bhkd->bhqd", p, vh)
        return o.transpose(0, 2, 1, 3).reshape(B, S, H)

    def post(a, res, inter, p):
        g, shm, scm, gm = inter
        a = a @ p["w_proj"] + p["b_proj"]
        a = a * g[:, None, :] + res
        x1 = a
        am = _rms_norm(a) * (1 + scm[:, None, :]) + shm[:, None, :]
        h = _gelu_tanh(am @ p["w_fc1"] + p["b_fc1"]) @ p["w_fc2"] + p["b_fc2"]
        return h * gm[:, None, :] + x1

    H = context.shape[-1]
    Sc = context.shape[1]
    qkv_c, ic = pre(context, p_ctx)
    qkv_x, ix = pre(x, p_x)
    q = jnp.concatenate([qkv_c[..., 0:H], qkv_x[..., 0:H]], axis=1)
    k = jnp.concatenate([qkv_c[..., H:2 * H], qkv_x[..., H:2 * H]], axis=1)
    v = jnp.concatenate([qkv_c[..., 2 * H:], qkv_x[..., 2 * H:]], axis=1)
    a = attn_ref(q, k, v)
    return post(a[:, :Sc], context, ic, p_ctx), post(a[:, Sc:], x, ix, p_x)


# ------------------------------------ main --------------------------------------
if __name__ == "__main__":
    B, Sc, Sx, H, NUM_HEADS, MLP_RATIO = 2, 16, 48, 128, 2, 4
    M = H * MLP_RATIO

    key = jax.random.PRNGKey(0)
    keys = jax.random.split(key, 32)

    def init_block(ks):
        return dict(
            w_ada=jax.random.normal(ks[0], (H, 6 * H), jnp.float32) * 0.02,
            b_ada=jax.random.normal(ks[1], (6 * H,), jnp.float32) * 0.02,
            w_qkv=jax.random.normal(ks[2], (H, 3 * H), jnp.float32) * 0.05,
            w_proj=jax.random.normal(ks[3], (H, H), jnp.float32) * 0.05,
            b_proj=jax.random.normal(ks[4], (H,), jnp.float32) * 0.02,
            w_fc1=jax.random.normal(ks[5], (H, M), jnp.float32) * 0.05,
            b_fc1=jax.random.normal(ks[6], (M,), jnp.float32) * 0.02,
            w_fc2=jax.random.normal(ks[7], (M, H), jnp.float32) * 0.05,
            b_fc2=jax.random.normal(ks[8], (H,), jnp.float32) * 0.02,
        )

    p_ctx = init_block(keys[0:9])
    p_x = init_block(keys[9:18])

    context = jax.random.normal(keys[18], (B, Sc, H), jnp.float32)
    x = jax.random.normal(keys[19], (B, Sx, H), jnp.float32)
    c = jax.random.normal(keys[20], (B, H), jnp.float32)

    # One-time parameter prep (cast/stack/scale-fold) OUTSIDE the jitted forward.
    params = prepare_joint_block_params(p_ctx, p_x, num_heads=NUM_HEADS)
    jax.block_until_ready(jax.tree_util.tree_leaves(params))

    # Small tiles so the demo shapes exercise the multi-block (flash / streamed-MLP
    # / stream-switch) paths; at SD3 sizes (H=1536, hd=64) use e.g. block_seq=256,
    # block_q=256..512, block_kv=1024, block_mlp=512..1024, block_ada_n=1024, and
    # pass out_dtype=jnp.bfloat16 if the surrounding model is bf16.
    fwd = jax.jit(functools.partial(
        joint_block_forward, num_heads=NUM_HEADS,
        block_seq=16, block_q=16, block_kv=32, block_mlp=128, block_ada_n=128,
        out_dtype=jnp.float32))
    ctx_out, x_out = fwd(context, x, c, params)
    jax.block_until_ready((ctx_out, x_out))

    ctx_ref, x_ref_out = ref_joint_block(context, x, c, p_ctx, p_x, NUM_HEADS)
    assert ctx_out.shape == (B, Sc, H) and x_out.shape == (B, Sx, H)
    # bf16 matmuls + bf16 activation concat + approx reciprocal vs f32 reference
    np.testing.assert_allclose(np.asarray(ctx_out), np.asarray(ctx_ref),
                               rtol=2e-2, atol=3e-2)
    np.testing.assert_allclose(np.asarray(x_out), np.asarray(x_ref_out),
                               rtol=2e-2, atol=3e-2)

    print("KERNEL_OK")
</pallas_src>

<mosaic_0001>
module attributes {stable_mosaic.version = 11 : i64} {
  func.func @adaln_kernel(%arg0: i32, %arg1: i32, %arg2: memref<2x128xf32, #tpu.memory_space<vmem>>, %arg3: memref<1x128x128xbf16, #tpu.memory_space<vmem>>, %arg4: memref<1x1x128xf32, #tpu.memory_space<vmem>>, %arg5: memref<1x2x128xf32, #tpu.memory_space<vmem>>) attributes {dimension_semantics = [#tpu.dimension_semantics<parallel>, #tpu.dimension_semantics<parallel>], iteration_bounds = array<i64: 2, 6>, scalar_prefetch = 0 : i64, scratch_operands = 0 : i64, tpu.core_type = #tpu.core_type<tc>, window_params = [{pipeline_mode = #tpu.pipeline_mode<synchronous>, transform_indices = @transform_0, window_bounds = array<i64: 2, 128>}, {transform_indices = @transform_1, window_bounds = array<i64: 1, 128, 128>}, {transform_indices = @transform_2, window_bounds = array<i64: 1, 1, 128>}, {transform_indices = @transform_3, window_bounds = array<i64: 1, 2, 128>}]} {
    %c0 = arith.constant 0 : index
    %c0_0 = arith.constant 0 : index
    %0 = vector.load %arg2[%c0, %c0_0] : memref<2x128xf32, #tpu.memory_space<vmem>>, vector<2x128xf32>
    %1 = arith.negf %0 : vector<2x128xf32>
    %2 = math.exp %1 : vector<2x128xf32>
    %cst = arith.constant 1.000000e+00 : f32
    %3 = vector.broadcast %cst : f32 to vector<2x128xf32>
    %4 = arith.addf %3, %2 : vector<2x128xf32>
    %5 = arith.divf %3, %4 : vector<2x128xf32>
    %6 = arith.mulf %0, %5 : vector<2x128xf32>
    %7 = arith.truncf %6 : vector<2x128xf32> to vector<2x128xbf16>
    %c0_1 = arith.constant 0 : index
    %c0_2 = arith.constant 0 : index
    %c0_3 = arith.constant 0 : index
    %8 = vector.load %arg3[%c0_1, %c0_2, %c0_3] : memref<1x128x128xbf16, #tpu.memory_space<vmem>>, vector<1x128x128xbf16>
    %9 = vector.shape_cast %8 : vector<1x128x128xbf16> to vector<128x128xbf16>
    %cst_4 = arith.constant dense<0.000000e+00> : vector<2x128xf32>
    %10 = tpu.matmul %7, %9, %cst_4 {dimension_numbers = #tpu.dot_dimension_numbers<[1], [0], [0], [1], [0, 0, 1, 1], [], []>} : vector<2x128xbf16>, vector<128x128xbf16>, vector<2x128xf32> -> vector<2x128xf32>
    %c0_5 = arith.constant 0 : index
    %c0_6 = arith.constant 0 : index
    %c0_7 = arith.constant 0 : index
    %11 = vector.load %arg4[%c0_5, %c0_6, %c0_7] : memref<1x1x128xf32, #tpu.memory_space<vmem>>, vector<1x1x128xf32>
    %12 = vector.shape_cast %11 : vector<1x1x128xf32> to vector<1x128xf32>
    %13 = vector.broadcast %12 : vector<1x128xf32> to vector<2x128xf32>
    %14 = arith.addf %10, %13 : vector<2x128xf32>
    %c0_8 = arith.constant 0 : index
    %c0_9 = arith.constant 0 : index
    %c0_10 = arith.constant 0 : index
    %15 = vector.load %arg5[%c0_8, %c0_9, %c0_10] : memref<1x2x128xf32, #tpu.memory_space<vmem>>, vector<1x2x128xf32>
    %16 = vector.shape_cast %15 : vector<1x2x128xf32> to vector<2x128xf32>
    %17 = vector.shape_cast %14 : vector<2x128xf32> to vector<1x2x128xf32>
    tpu.vector_store %arg5[%c0_8, %c0_9, %c0_10], %17 {strides = array<i32>} : memref<1x2x128xf32, #tpu.memory_space<vmem>>, vector<1x2x128xf32>,
    return
  }
  func.func @transform_0(%arg0: i32, %arg1: i32) -> (i32, i32) {
    %c0_i32 = arith.constant 0 : i32
    %c0_i32_0 = arith.constant 0 : i32
    %c0_i32_1 = arith.constant 0 : i32
    return %c0_i32, %c0_i32_0 : i32, i32
  }
  func.func @transform_1(%arg0: i32, %arg1: i32) -> (i32, i32, i32) {
    %c0_i32 = arith.constant 0 : i32
    %c0_i32_0 = arith.constant 0 : i32
    return %arg0, %c0_i32, %arg1 : i32, i32, i32
  }
  func.func @transform_2(%arg0: i32, %arg1: i32) -> (i32, i32, i32) {
    %c0_i32 = arith.constant 0 : i32
    %c0_i32_0 = arith.constant 0 : i32
    return %arg0, %c0_i32, %arg1 : i32, i32, i32
  }
  func.func @transform_3(%arg0: i32, %arg1: i32) -> (i32, i32, i32) {
    %c0_i32 = arith.constant 0 : i32
    %c0_i32_0 = arith.constant 0 : i32
    return %arg0, %c0_i32, %arg1 : i32, i32, i32
  }
}

module attributes {stable_mosaic.version = 11 : i64} {
  func.func @pre_qkv_kernel(%arg0: i32, %arg1: i32, %arg2: memref<4xi32, #tpu.memory_space<smem>>, %arg3: memref<1x16x128xbf16, #tpu.memory_space<vmem>>, %arg4: memref<1x1x6x128xf32, #tpu.memory_space<vmem>>, %arg5: memref<1x128x384xbf16, #tpu.memory_space<vmem>>, %arg6: memref<1x16x384xbf16, #tpu.memory_space<vmem>>) attributes {dimension_semantics = [#tpu.dimension_semantics<parallel>, #tpu.dimension_semantics<parallel>], iteration_bounds = array<i64: 4, 2>, scalar_prefetch = 1 : i64, scratch_operands = 0 : i64, tpu.core_type = #tpu.core_type<tc>, window_params = [{transform_indices = @transform_0, window_bounds = array<i64: 1, 16, 128>}, {transform_indices = @transform_1, window_bounds = array<i64: 1, 1, 6, 128>}, {transform_indices = @transform_2, window_bounds = array<i64: 1, 128, 384>}, {transform_indices = @transform_3, window_bounds = array<i64: 1, 16, 384>}]} {
    %c0 = arith.constant 0 : index
    %c0_0 = arith.constant 0 : index
    %c0_1 = arith.constant 0 : index
    %0 = vector.load %arg3[%c0, %c0_0, %c0_1] : memref<1x16x128xbf16, #tpu.memory_space<vmem>>, vector<1x16x128xbf16>
    %1 = vector.shape_cast %0 : vector<1x16x128xbf16> to vector<16x128xbf16>
    %2 = arith.extf %1 : vector<16x128xbf16> to vector<16x128xf32>
    %c0_2 = arith.constant 0 : index
    %c0_3 = arith.constant 0 : index
    %c0_4 = arith.constant 0 : index
    %c0_5 = arith.constant 0 : index
    %3 = vector.load %arg4[%c0_2, %c0_3, %c0_4, %c0_5] : memref<1x1x6x128xf32, #tpu.memory_space<vmem>>, vector<1x1x6x128xf32>
    %4 = vector.shape_cast %3 : vector<1x1x6x128xf32> to vector<6x128xf32>
    %5 = vector.extract_strided_slice %4 {offsets = [0, 0], sizes = [1, 128], strides = [1, 1]} : vector<6x128xf32> to vector<1x128xf32>
    %6 = vector.extract_strided_slice %4 {offsets = [1, 0], sizes = [1, 128], strides = [1, 1]} : vector<6x128xf32> to vector<1x128xf32>
    %7 = arith.mulf %2, %2 : vector<16x128xf32>
    %cst = arith.constant dense<0.000000e+00> : vector<16xf32>
    %8 = vector.multi_reduction <add>, %7, %cst [1] : vector<16x128xf32> to vector<16xf32>
    %9 = vector.shape_cast %8 : vector<16xf32> to vector<16x1xf32>
    %cst_6 = arith.constant 1.280000e+02 : f32
    %10 = vector.broadcast %cst_6 : f32 to vector<16x1xf32>
    %11 = arith.divf %9, %10 : vector<16x1xf32>
    %cst_7 = arith.constant 9.99999997E-7 : f32
    %12 = vector.broadcast %cst_7 : f32 to vector<16x1xf32>
    %13 = arith.addf %11, %12 : vector<16x1xf32>
    %14 = math.rsqrt %13 : vector<16x1xf32>
    %15 = vector.broadcast %14 : vector<16x1xf32> to vector<16x128xf32>
    %16 = arith.mulf %2, %15 : vector<16x128xf32>
    %cst_8 = arith.constant 1.000000e+00 : f32
    %17 = vector.broadcast %cst_8 : f32 to vector<1x128xf32>
    %18 = arith.addf %17, %6 : vector<1x128xf32>
    %19 = vector.broadcast %18 : vector<1x128xf32> to vector<16x128xf32>
    %20 = arith.mulf %16, %19 : vector<16x128xf32>
    %21 = vector.broadcast %5 : vector<1x128xf32> to vector<16x128xf32>
    %22 = arith.addf %20, %21 : vector<16x128xf32>
    %23 = arith.truncf %22 : vector<16x128xf32> to vector<16x128xbf16>
    %c0_9 = arith.constant 0 : index
    %c0_10 = arith.constant 0 : index
    %c0_11 = arith.constant 0 : index
    %24 = vector.load %arg5[%c0_9, %c0_10, %c0_11] : memref<1x128x384xbf16, #tpu.memory_space<vmem>>, vector<1x128x384xbf16>
    %25 = vector.shape_cast %24 : vector<1x128x384xbf16> to vector<128x384xbf16>
    %cst_12 = arith.constant dense<0.000000e+00> : vector<16x384xf32>
    %26 = tpu.matmul %23, %25, %cst_12 {dimension_numbers = #tpu.dot_dimension_numbers<[1], [0], [0], [1], [0, 0, 1, 1], [], []>} : vector<16x128xbf16>, vector<128x384xbf16>, vector<16x384xf32> -> vector<16x384xf32>
    %27 = arith.truncf %26 : vector<16x384xf32> to vector<16x384xbf16>
    %c0_13 = arith.constant 0 : index
    %c0_14 = arith.constant 0 : index
    %c0_15 = arith.constant 0 : index
    %28 = vector.load %arg6[%c0_13, %c0_14, %c0_15] : memref<1x16x384xbf16, #tpu.memory_space<vmem>>, vector<1x16x384xbf16>
    %29 = vector.shape_cast %28 : vector<1x16x384xbf16> to vector<16x384xbf16>
    %30 = vector.shape_cast %27 : vector<16x384xbf16> to vector<1x16x384xbf16>
    tpu.vector_store %arg6[%c0_13, %c0_14, %c0_15], %30 {strides = array<i32>} : memref<1x16x384xbf16, #tpu.memory_space<vmem>>, vector<1x16x384xbf16>,
    return
  }
  func.func @transform_0(%arg0: i32, %arg1: i32, %arg2: memref<4xi32, #tpu.memory_space<smem>>) -> (i32, i32, i32) {
    %c0_i32 = arith.constant 0 : i32
    %c0_i32_0 = arith.constant 0 : i32
    return %arg1, %arg0, %c0_i32 : i32, i32, i32
  }
  func.func @transform_1(%arg0: i32, %arg1: i32, %arg2: memref<4xi32, #tpu.memory_space<smem>>) -> (i32, i32, i32, i32) {
    %0 = arith.index_cast %arg0 : i32 to index
    %1 = memref.load %arg2[%0] : memref<4xi32, #tpu.memory_space<smem>>
    %c0_i32 = arith.constant 0 : i32
    %c0_i32_0 = arith.constant 0 : i32
    %c0_i32_1 = arith.constant 0 : i32
    return %1, %arg1, %c0_i32, %c0_i32_0 : i32, i32, i32, i32
  }
  func.func @transform_2(%arg0: i32, %arg1: i32, %arg2: memref<4xi32, #tpu.memory_space<smem>>) -> (i32, i32, i32) {
    %0 = arith.index_cast %arg0 : i32 to index
    %1 = memref.load %arg2[%0] : memref<4xi32, #tpu.memory_space<smem>>
    %c0_i32 = arith.constant 0 : i32
    %c0_i32_0 = arith.constant 0 : i32
    %c0_i32_1 = arith.constant 0 : i32
    return %1, %c0_i32, %c0_i32_0 : i32, i32, i32
  }
  func.func @transform_3(%arg0: i32, %arg1: i32, %arg2: memref<4xi32, #tpu.memory_space<smem>>) -> (i32, i32, i32) {
    %c0_i32 = arith.constant 0 : i32
    %c0_i32_0 = arith.constant 0 : i32
    return %arg1, %arg0, %c0_i32 : i32, i32, i32
  }
}

module attributes {stable_mosaic.version = 11 : i64} {
  func.func @flash_attn_kernel(%arg0: i32, %arg1: i32, %arg2: i32, %arg3: i32, %arg4: memref<1x16x128xbf16, #tpu.memory_space<vmem>>, %arg5: memref<1x32x128xbf16, #tpu.memory_space<vmem>>, %arg6: memref<1x32x128xbf16, #tpu.memory_space<vmem>>, %arg7: memref<1x16x128xbf16, #tpu.memory_space<vmem>>, %arg8: memref<2x16x1xf32, #tpu.memory_space<vmem>>, %arg9: memref<2x16x1xf32, #tpu.memory_space<vmem>>, %arg10: memref<2x16x64xf32, #tpu.memory_space<vmem>>) attributes {dimension_semantics = [#tpu.dimension_semantics<parallel>, #tpu.dimension_semantics<parallel>, #tpu.dimension_semantics<parallel>, #tpu.dimension_semantics<arbitrary>], iteration_bounds = array<i64: 2, 1, 4, 2>, scalar_prefetch = 0 : i64, scratch_operands = 3 : i64, tpu.core_type = #tpu.core_type<tc>, window_params = [{transform_indices = @transform_0, window_bounds = array<i64: 1, 16, 128>}, {transform_indices = @transform_1, window_bounds = array<i64: 1, 32, 128>}, {transform_indices = @transform_2, window_bounds = array<i64: 1, 32, 128>}, {transform_indices = @transform_3, window_bounds = array<i64: 1, 16, 128>}]} {
    %c0_i32 = arith.constant 0 : i32
    %0 = arith.cmpi eq, %arg3, %c0_i32 : i32
    %1 = arith.extui %0 : i1 to i32
    %c0_i32_0 = arith.constant 0 : i32
    %2 = arith.cmpi ne, %1, %c0_i32_0 : i32
    scf.if %2 {
      %cst_52 = arith.constant 0xFF800000 : f32
      %84 = vector.broadcast %cst_52 : f32 to vector<2x16x1xf32>
      %c0_53 = arith.constant 0 : index
      %c0_54 = arith.constant 0 : index
      %c0_55 = arith.constant 0 : index
      %85 = vector.load %arg8[%c0_53, %c0_54, %c0_55] : memref<2x16x1xf32, #tpu.memory_space<vmem>>, vector<2x16x1xf32>
      tpu.vector_store %arg8[%c0_53, %c0_54, %c0_55], %84 {strides = array<i32>} : memref<2x16x1xf32, #tpu.memory_space<vmem>>, vector<2x16x1xf32>,
      %cst_56 = arith.constant 0.000000e+00 : f32
      %86 = vector.broadcast %cst_56 : f32 to vector<2x16x1xf32>
      %c0_57 = arith.constant 0 : index
      %c0_58 = arith.constant 0 : index
      %c0_59 = arith.constant 0 : index
      %87 = vector.load %arg9[%c0_57, %c0_58, %c0_59] : memref<2x16x1xf32, #tpu.memory_space<vmem>>, vector<2x16x1xf32>
      tpu.vector_store %arg9[%c0_57, %c0_58, %c0_59], %86 {strides = array<i32>} : memref<2x16x1xf32, #tpu.memory_space<vmem>>, vector<2x16x1xf32>,
      %cst_60 = arith.constant 0.000000e+00 : f32
      %88 = vector.broadcast %cst_60 : f32 to vector<2x16x64xf32>
      %c0_61 = arith.constant 0 : index
      %c0_62 = arith.constant 0 : index
      %c0_63 = arith.constant 0 : index
      %89 = vector.load %arg10[%c0_61, %c0_62, %c0_63] : memref<2x16x64xf32, #tpu.memory_space<vmem>>, vector<2x16x64xf32>
      tpu.vector_store %arg10[%c0_61, %c0_62, %c0_63], %88 {strides = array<i32>} : memref<2x16x64xf32, #tpu.memory_space<vmem>>, vector<2x16x64xf32>,
    } else {
    }
    %c0 = arith.constant 0 : index
    %c0_1 = arith.constant 0 : index
    %c0_2 = arith.constant 0 : index
    %3 = vector.load %arg4[%c0, %c0_1, %c0_2] : memref<1x16x128xbf16, #tpu.memory_space<vmem>>, vector<1x16x128xbf16>
    %4 = vector.shape_cast %3 : vector<1x16x128xbf16> to vector<16x128xbf16>
    %c0_3 = arith.constant 0 : index
    %c0_4 = arith.constant 0 : index
    %c0_5 = arith.constant 0 : index
    %5 = vector.load %arg5[%c0_3, %c0_4, %c0_5] : memref<1x32x128xbf16, #tpu.memory_space<vmem>>, vector<1x32x128xbf16>
    %6 = vector.shape_cast %5 : vector<1x32x128xbf16> to vector<32x128xbf16>
    %c0_6 = arith.constant 0 : index
    %c0_7 = arith.constant 0 : index
    %c0_8 = arith.constant 0 : index
    %7 = vector.load %arg6[%c0_6, %c0_7, %c0_8] : memref<1x32x128xbf16, #tpu.memory_space<vmem>>, vector<1x32x128xbf16>
    %8 = vector.shape_cast %7 : vector<1x32x128xbf16> to vector<32x128xbf16>
    %9 = vector.extract_strided_slice %4 {offsets = [0, 0], sizes = [16, 64], strides = [1, 1]} : vector<16x128xbf16> to vector<16x64xbf16>
    %10 = vector.extract_strided_slice %6 {offsets = [0, 0], sizes = [32, 64], strides = [1, 1]} : vector<32x128xbf16> to vector<32x64xbf16>
    %cst = arith.constant dense<0.000000e+00> : vector<16x32xf32>
    %11 = tpu.matmul %9, %10, %cst {dimension_numbers = #tpu.dot_dimension_numbers<[1], [1], [0], [0], [0, 0, 1, 0], [], []>} : vector<16x64xbf16>, vector<32x64xbf16>, vector<16x32xf32> -> vector<16x32xf32>
    %c0_9 = arith.constant 0 : index
    %c0_10 = arith.constant 0 : index
    %c0_11 = arith.constant 0 : index
    %12 = vector.load %arg8[%c0_9, %c0_10, %c0_11] : memref<2x16x1xf32, #tpu.memory_space<vmem>>, vector<1x16x1xf32>
    %13 = vector.shape_cast %12 : vector<1x16x1xf32> to vector<16x1xf32>
    %cst_12 = arith.constant dense<0xFF800000> : vector<16xf32>
    %14 = vector.multi_reduction <maximumf>, %11, %cst_12 [1] : vector<16x32xf32> to vector<16xf32>
    %15 = vector.shape_cast %14 : vector<16xf32> to vector<16x1xf32>
    %16 = arith.maximumf %13, %15 : vector<16x1xf32>
    %17 = arith.subf %13, %16 : vector<16x1xf32>
    %18 = math.exp %17 : vector<16x1xf32>
    %19 = vector.broadcast %16 : vector<16x1xf32> to vector<16x32xf32>
    %20 = arith.subf %11, %19 : vector<16x32xf32>
    %21 = math.exp %20 : vector<16x32xf32>
    %c0_13 = arith.constant 0 : index
    %c0_14 = arith.constant 0 : index
    %c0_15 = arith.constant 0 : index
    %22 = vector.load %arg9[%c0_13, %c0_14, %c0_15] : memref<2x16x1xf32, #tpu.memory_space<vmem>>, vector<1x16x1xf32>
    %23 = vector.shape_cast %22 : vector<1x16x1xf32> to vector<16x1xf32>
    %24 = arith.mulf %18, %23 : vector<16x1xf32>
    %cst_16 = arith.constant dense<0.000000e+00> : vector<16xf32>
    %25 = vector.multi_reduction <add>, %21, %cst_16 [1] : vector<16x32xf32> to vector<16xf32>
    %26 = vector.shape_cast %25 : vector<16xf32> to vector<16x1xf32>
    %27 = arith.addf %24, %26 : vector<16x1xf32>
    %c0_17 = arith.constant 0 : index
    %c0_18 = arith.constant 0 : index
    %c0_19 = arith.constant 0 : index
    %28 = vector.load %arg9[%c0_17, %c0_18, %c0_19] : memref<2x16x1xf32, #tpu.memory_space<vmem>>, vector<1x16x1xf32>
    %29 = vector.shape_cast %28 : vector<1x16x1xf32> to vector<16x1xf32>
    %30 = vector.shape_cast %27 : vector<16x1xf32> to vector<1x16x1xf32>
    tpu.vector_store %arg9[%c0_17, %c0_18, %c0_19], %30 {strides = array<i32>} : memref<2x16x1xf32, #tpu.memory_space<vmem>>, vector<1x16x1xf32>,
    %c0_20 = arith.constant 0 : index
    %c0_21 = arith.constant 0 : index
    %c0_22 = arith.constant 0 : index
    %31 = vector.load %arg10[%c0_20, %c0_21, %c0_22] : memref<2x16x64xf32, #tpu.memory_space<vmem>>, vector<1x16x64xf32>
    %32 = vector.shape_cast %31 : vector<1x16x64xf32> to vector<16x64xf32>
    %33 = vector.broadcast %18 : vector<16x1xf32> to vector<16x64xf32>
    %34 = arith.mulf %33, %32 : vector<16x64xf32>
    %35 = arith.truncf %21 : vector<16x32xf32> to vector<16x32xbf16>
    %36 = vector.extract_strided_slice %8 {offsets = [0, 0], sizes = [32, 64], strides = [1, 1]} : vector<32x128xbf16> to vector<32x64xbf16>
    %cst_23 = arith.constant dense<0.000000e+00> : vector<16x64xf32>
    %37 = tpu.matmul %35, %36, %cst_23 {dimension_numbers = #tpu.dot_dimension_numbers<[1], [0], [0], [1], [0, 0, 1, 1], [], []>} : vector<16x32xbf16>, vector<32x64xbf16>, vector<16x64xf32> -> vector<16x64xf32>
    %38 = arith.addf %34, %37 : vector<16x64xf32>
    %c0_24 = arith.constant 0 : index
    %c0_25 = arith.constant 0 : index
    %c0_26 = arith.constant 0 : index
    %39 = vector.load %arg10[%c0_24, %c0_25, %c0_26] : memref<2x16x64xf32, #tpu.memory_space<vmem>>, vector<1x16x64xf32>
    %40 = vector.shape_cast %39 : vector<1x16x64xf32> to vector<16x64xf32>
    %41 = vector.shape_cast %38 : vector<16x64xf32> to vector<1x16x64xf32>
    tpu.vector_store %arg10[%c0_24, %c0_25, %c0_26], %41 {strides = array<i32>} : memref<2x16x64xf32, #tpu.memory_space<vmem>>, vector<1x16x64xf32>,
    %c0_27 = arith.constant 0 : index
    %c0_28 = arith.constant 0 : index
    %c0_29 = arith.constant 0 : index
    %42 = vector.load %arg8[%c0_27, %c0_28, %c0_29] : memref<2x16x1xf32, #tpu.memory_space<vmem>>, vector<1x16x1xf32>
    %43 = vector.shape_cast %42 : vector<1x16x1xf32> to vector<16x1xf32>
    %44 = vector.shape_cast %16 : vector<16x1xf32> to vector<1x16x1xf32>
    tpu.vector_store %arg8[%c0_27, %c0_28, %c0_29], %44 {strides = array<i32>} : memref<2x16x1xf32, #tpu.memory_space<vmem>>, vector<1x16x1xf32>,
    %45 = vector.extract_strided_slice %4 {offsets = [0, 64], sizes = [16, 64], strides = [1, 1]} : vector<16x128xbf16> to vector<16x64xbf16>
    %46 = vector.extract_strided_slice %6 {offsets = [0, 64], sizes = [32, 64], strides = [1, 1]} : vector<32x128xbf16> to vector<32x64xbf16>
    %cst_30 = arith.constant dense<0.000000e+00> : vector<16x32xf32>
    %47 = tpu.matmul %45, %46, %cst_30 {dimension_numbers = #tpu.dot_dimension_numbers<[1], [1], [0], [0], [0, 0, 1, 0], [], []>} : vector<16x64xbf16>, vector<32x64xbf16>, vector<16x32xf32> -> vector<16x32xf32>
    %c1 = arith.constant 1 : index
    %c0_31 = arith.constant 0 : index
    %c0_32 = arith.constant 0 : index
    %48 = vector.load %arg8[%c1, %c0_31, %c0_32] : memref<2x16x1xf32, #tpu.memory_space<vmem>>, vector<1x16x1xf32>
    %49 = vector.shape_cast %48 : vector<1x16x1xf32> to vector<16x1xf32>
    %cst_33 = arith.constant dense<0xFF800000> : vector<16xf32>
    %50 = vector.multi_reduction <maximumf>, %47, %cst_33 [1] : vector<16x32xf32> to vector<16xf32>
    %51 = vector.shape_cast %50 : vector<16xf32> to vector<16x1xf32>
    %52 = arith.maximumf %49, %51 : vector<16x1xf32>
    %53 = arith.subf %49, %52 : vector<16x1xf32>
    %54 = math.exp %53 : vector<16x1xf32>
    %55 = vector.broadcast %52 : vector<16x1xf32> to vector<16x32xf32>
    %56 = arith.subf %47, %55 : vector<16x32xf32>
    %57 = math.exp %56 : vector<16x32xf32>
    %c1_34 = arith.constant 1 : index
    %c0_35 = arith.constant 0 : index
    %c0_36 = arith.constant 0 : index
    %58 = vector.load %arg9[%c1_34, %c0_35, %c0_36] : memref<2x16x1xf32, #tpu.memory_space<vmem>>, vector<1x16x1xf32>
    %59 = vector.shape_cast %58 : vector<1x16x1xf32> to vector<16x1xf32>
    %60 = arith.mulf %54, %59 : vector<16x1xf32>
    %cst_37 = arith.constant dense<0.000000e+00> : vector<16xf32>
    %61 = vector.multi_reduction <add>, %57, %cst_37 [1] : vector<16x32xf32> to vector<16xf32>
    %62 = vector.shape_cast %61 : vector<16xf32> to vector<16x1xf32>
    %63 = arith.addf %60, %62 : vector<16x1xf32>
    %c1_38 = arith.constant 1 : index
    %c0_39 = arith.constant 0 : index
    %c0_40 = arith.constant 0 : index
    %64 = vector.load %arg9[%c1_38, %c0_39, %c0_40] : memref<2x16x1xf32, #tpu.memory_space<vmem>>, vector<1x16x1xf32>
    %65 = vector.shape_cast %64 : vector<1x16x1xf32> to vector<16x1xf32>
    %66 = vector.shape_cast %63 : vector<16x1xf32> to vector<1x16x1xf32>
    tpu.vector_store %arg9[%c1_38, %c0_39, %c0_40], %66 {strides = array<i32>} : memref<2x16x1xf32, #tpu.memory_space<vmem>>, vector<1x16x1xf32>,
    %c1_41 = arith.constant 1 : index
    %c0_42 = arith.constant 0 : index
    %c0_43 = arith.constant 0 : index
    %67 = vector.load %arg10[%c1_41, %c0_42, %c0_43] : memref<2x16x64xf32, #tpu.memory_space<vmem>>, vector<1x16x64xf32>
    %68 = vector.shape_cast %67 : vector<1x16x64xf32> to vector<16x64xf32>
    %69 = vector.broadcast %54 : vector<16x1xf32> to vector<16x64xf32>
    %70 = arith.mulf %69, %68 : vector<16x64xf32>
    %71 = arith.truncf %57 : vector<16x32xf32> to vector<16x32xbf16>
    %72 = vector.extract_strided_slice %8 {offsets = [0, 64], sizes = [32, 64], strides = [1, 1]} : vector<32x128xbf16> to vector<32x64xbf16>
    %cst_44 = arith.constant dense<0.000000e+00> : vector<16x64xf32>
    %73 = tpu.matmul %71, %72, %cst_44 {dimension_numbers = #tpu.dot_dimension_numbers<[1], [0], [0], [1], [0, 0, 1, 1], [], []>} : vector<16x32xbf16>, vector<32x64xbf16>, vector<16x64xf32> -> vector<16x64xf32>
    %74 = arith.addf %70, %73 : vector<16x64xf32>
    %c1_45 = arith.constant 1 : index
    %c0_46 = arith.constant 0 : index
    %c0_47 = arith.constant 0 : index
    %75 = vector.load %arg10[%c1_45, %c0_46, %c0_47] : memref<2x16x64xf32, #tpu.memory_space<vmem>>, vector<1x16x64xf32>
    %76 = vector.shape_cast %75 : vector<1x16x64xf32> to vector<16x64xf32>
    %77 = vector.shape_cast %74 : vector<16x64xf32> to vector<1x16x64xf32>
    tpu.vector_store %arg10[%c1_45, %c0_46, %c0_47], %77 {strides = array<i32>} : memref<2x16x64xf32, #tpu.memory_space<vmem>>, vector<1x16x64xf32>,
    %c1_48 = arith.constant 1 : index
    %c0_49 = arith.constant 0 : index
    %c0_50 = arith.constant 0 : index
    %78 = vector.load %arg8[%c1_48, %c0_49, %c0_50] : memref<2x16x1xf32, #tpu.memory_space<vmem>>, vector<1x16x1xf32>
    %79 = vector.shape_cast %78 : vector<1x16x1xf32> to vector<16x1xf32>
    %80 = vector.shape_cast %52 : vector<16x1xf32> to vector<1x16x1xf32>
    tpu.vector_store %arg8[%c1_48, %c0_49, %c0_50], %80 {strides = array<i32>} : memref<2x16x1xf32, #tpu.memory_space<vmem>>, vector<1x16x1xf32>,
    %c1_i32 = arith.constant 1 : i32
    %81 = arith.cmpi eq, %arg3, %c1_i32 : i32
    %82 = arith.extui %81 : i1 to i32
    %c0_i32_51 = arith.constant 0 : i32
    %83 = arith.cmpi ne, %82, %c0_i32_51 : i32
    scf.if %83 {
      %c0_52 = arith.constant 0 : index
      %c0_53 = arith.constant 0 : index
      %c0_54 = arith.constant 0 : index
      %84 = vector.load %arg9[%c0_52, %c0_53, %c0_54] : memref<2x16x1xf32, #tpu.memory_space<vmem>>, vector<1x16x1xf32>
      %85 = vector.shape_cast %84 : vector<1x16x1xf32> to vector<16x1xf32>
      %86 = tpu.reciprocal %85 {approx = true} : vector<16x1xf32> -> vector<16x1xf32>
      %c0_55 = arith.constant 0 : index
      %c0_56 = arith.constant 0 : index
      %c0_57 = arith.constant 0 : index
      %87 = vector.load %arg10[%c0_55, %c0_56, %c0_57] : memref<2x16x64xf32, #tpu.memory_space<vmem>>, vector<1x16x64xf32>
      %88 = vector.shape_cast %87 : vector<1x16x64xf32> to vector<16x64xf32>
      %89 = vector.broadcast %86 : vector<16x1xf32> to vector<16x64xf32>
      %90 = arith.mulf %88, %89 : vector<16x64xf32>
      %c1_58 = arith.constant 1 : index
      %c0_59 = arith.constant 0 : index
      %c0_60 = arith.constant 0 : index
      %91 = vector.load %arg9[%c1_58, %c0_59, %c0_60] : memref<2x16x1xf32, #tpu.memory_space<vmem>>, vector<1x16x1xf32>
      %92 = vector.shape_cast %91 : vector<1x16x1xf32> to vector<16x1xf32>
      %93 = tpu.reciprocal %92 {approx = true} : vector<16x1xf32> -> vector<16x1xf32>
      %c1_61 = arith.constant 1 : index
      %c0_62 = arith.constant 0 : index
      %c0_63 = arith.constant 0 : index
      %94 = vector.load %arg10[%c1_61, %c0_62, %c0_63] : memref<2x16x64xf32, #tpu.memory_space<vmem>>, vector<1x16x64xf32>
      %95 = vector.shape_cast %94 : vector<1x16x64xf32> to vector<16x64xf32>
      %96 = vector.broadcast %93 : vector<16x1xf32> to vector<16x64xf32>
      %97 = arith.mulf %95, %96 : vector<16x64xf32>
      %98 = tpu.concatenate %90, %97 in 1 : vector<16x64xf32>, vector<16x64xf32> -> vector<16x128xf32>
      %99 = arith.truncf %98 : vector<16x128xf32> to vector<16x128xbf16>
      %c0_64 = arith.constant 0 : index
      %c0_65 = arith.constant 0 : index
      %c0_66 = arith.constant 0 : index
      %100 = vector.load %arg7[%c0_64, %c0_65, %c0_66] : memref<1x16x128xbf16, #tpu.memory_space<vmem>>, vector<1x16x128xbf16>
      %101 = vector.shape_cast %100 : vector<1x16x128xbf16> to vector<16x128xbf16>
      %102 = vector.shape_cast %99 : vector<16x128xbf16> to vector<1x16x128xbf16>
      tpu.vector_store %arg7[%c0_64, %c0_65, %c0_66], %102 {strides = array<i32>} : memref<1x16x128xbf16, #tpu.memory_space<vmem>>, vector<1x16x128xbf16>,
    } else {
    }
    return
  }
  func.func @transform_0(%arg0: i32, %arg1: i32, %arg2: i32, %arg3: i32) -> (i32, i32, i32) {
    %c0_i32 = arith.constant 0 : i32
    return %arg0, %arg2, %arg1 : i32, i32, i32
  }
  func.func @transform_1(%arg0: i32, %arg1: i32, %arg2: i32, %arg3: i32) -> (i32, i32, i32) {
    %c1_i32 = arith.constant 1 : i32
    %0 = arith.addi %c1_i32, %arg1 : i32
    %c0_i32 = arith.constant 0 : i32
    return %arg0, %arg3, %0 : i32, i32, i32
  }
  func.func @transform_2(%arg0: i32, %arg1: i32, %arg2: i32, %arg3: i32) -> (i32, i32, i32) {
    %c2_i32 = arith.constant 2 : i32
    %0 = arith.addi %c2_i32, %arg1 : i32
    %c0_i32 = arith.constant 0 : i32
    return %arg0, %arg3, %0 : i32, i32, i32
  }
  func.func @transform_3(%arg0: i32, %arg1: i32, %arg2: i32, %arg3: i32) -> (i32, i32, i32) {
    %c0_i32 = arith.constant 0 : i32
    return %arg0, %arg2, %arg1 : i32, i32, i32
  }
}

module attributes {stable_mosaic.version = 11 : i64} {
  func.func @post_kernel(%arg0: i32, %arg1: i32, %arg2: i32, %arg3: memref<1x16x128xbf16, #tpu.memory_space<vmem>>, %arg4: memref<1x16x128xf32, #tpu.memory_space<vmem>>, %arg5: memref<1x1x6x128xf32, #tpu.memory_space<vmem>>, %arg6: memref<128x128xbf16, #tpu.memory_space<vmem>>, %arg7: memref<1x128xf32, #tpu.memory_space<vmem>>, %arg8: memref<128x128xbf16, #tpu.memory_space<vmem>>, %arg9: memref<1x128xf32, #tpu.memory_space<vmem>>, %arg10: memref<128x128xbf16, #tpu.memory_space<vmem>>, %arg11: memref<1x128xf32, #tpu.memory_space<vmem>>, %arg12: memref<1x16x128xf32, #tpu.memory_space<vmem>>, %arg13: memref<16x128xf32, #tpu.memory_space<vmem>>, %arg14: memref<16x128xbf16, #tpu.memory_space<vmem>>, %arg15: memref<16x128xf32, #tpu.memory_space<vmem>>) attributes {dimension_semantics = [#tpu.dimension_semantics<parallel>, #tpu.dimension_semantics<parallel>, #tpu.dimension_semantics<arbitrary>], iteration_bounds = array<i64: 2, 1, 4>, scalar_prefetch = 0 : i64, scratch_operands = 3 : i64, tpu.core_type = #tpu.core_type<tc>, window_params = [{transform_indices = @transform_0, window_bounds = array<i64: 1, 16, 128>}, {transform_indices = @transform_1, window_bounds = array<i64: 1, 16, 128>}, {transform_indices = @transform_2, window_bounds = array<i64: 1, 1, 6, 128>}, {pipeline_mode = #tpu.pipeline_mode<synchronous>, transform_indices = @transform_3, window_bounds = array<i64: 128, 128>}, {pipeline_mode = #tpu.pipeline_mode<synchronous>, transform_indices = @transform_4, window_bounds = array<i64: 1, 128>}, {transform_indices = @transform_5, window_bounds = array<i64: 128, 128>}, {transform_indices = @transform_6, window_bounds = array<i64: 1, 128>}, {transform_indices = @transform_7, window_bounds = array<i64: 128, 128>}, {pipeline_mode = #tpu.pipeline_mode<synchronous>, transform_indices = @transform_8, window_bounds = array<i64: 1, 128>}, {transform_indices = @transform_9, window_bounds = array<i64: 1, 16, 128>}]} {
    %c0_i32 = arith.constant 0 : i32
    %0 = arith.cmpi eq, %arg2, %c0_i32 : i32
    %1 = arith.extui %0 : i1 to i32
    %c0_i32_0 = arith.constant 0 : i32
    %2 = arith.cmpi ne, %1, %c0_i32_0 : i32
    scf.if %2 {
      %c0_18 = arith.constant 0 : index
      %c0_19 = arith.constant 0 : index
      %c0_20 = arith.constant 0 : index
      %c0_21 = arith.constant 0 : index
      %31 = vector.load %arg5[%c0_18, %c0_19, %c0_20, %c0_21] : memref<1x1x6x128xf32, #tpu.memory_space<vmem>>, vector<1x1x6x128xf32>
      %32 = vector.shape_cast %31 : vector<1x1x6x128xf32> to vector<6x128xf32>
      %33 = vector.extract_strided_slice %32 {offsets = [2, 0], sizes = [1, 128], strides = [1, 1]} : vector<6x128xf32> to vector<1x128xf32>
      %34 = vector.extract_strided_slice %32 {offsets = [3, 0], sizes = [1, 128], strides = [1, 1]} : vector<6x128xf32> to vector<1x128xf32>
      %35 = vector.extract_strided_slice %32 {offsets = [4, 0], sizes = [1, 128], strides = [1, 1]} : vector<6x128xf32> to vector<1x128xf32>
      %c0_22 = arith.constant 0 : index
      %c0_23 = arith.constant 0 : index
      %c0_24 = arith.constant 0 : index
      %36 = vector.load %arg3[%c0_22, %c0_23, %c0_24] : memref<1x16x128xbf16, #tpu.memory_space<vmem>>, vector<1x16x128xbf16>
      %37 = vector.shape_cast %36 : vector<1x16x128xbf16> to vector<16x128xbf16>
      %c0_25 = arith.constant 0 : index
      %c0_26 = arith.constant 0 : index
      %38 = vector.load %arg6[%c0_25, %c0_26] : memref<128x128xbf16, #tpu.memory_space<vmem>>, vector<128x128xbf16>
      %cst_27 = arith.constant dense<0.000000e+00> : vector<16x128xf32>
      %39 = tpu.matmul %37, %38, %cst_27 {dimension_numbers = #tpu.dot_dimension_numbers<[1], [0], [0], [1], [0, 0, 1, 1], [], []>} : vector<16x128xbf16>, vector<128x128xbf16>, vector<16x128xf32> -> vector<16x128xf32>
      %c0_28 = arith.constant 0 : index
      %c0_29 = arith.constant 0 : index
      %40 = vector.load %arg7[%c0_28, %c0_29] : memref<1x128xf32, #tpu.memory_space<vmem>>, vector<1x128xf32>
      %41 = vector.broadcast %40 : vector<1x128xf32> to vector<16x128xf32>
      %42 = arith.addf %39, %41 : vector<16x128xf32>
      %43 = vector.broadcast %33 : vector<1x128xf32> to vector<16x128xf32>
      %44 = arith.mulf %42, %43 : vector<16x128xf32>
      %c0_30 = arith.constant 0 : index
      %c0_31 = arith.constant 0 : index
      %c0_32 = arith.constant 0 : index
      %45 = vector.load %arg4[%c0_30, %c0_31, %c0_32] : memref<1x16x128xf32, #tpu.memory_space<vmem>>, vector<1x16x128xf32>
      %46 = vector.shape_cast %45 : vector<1x16x128xf32> to vector<16x128xf32>
      %47 = arith.addf %44, %46 : vector<16x128xf32>
      %c0_33 = arith.constant 0 : index
      %c0_34 = arith.constant 0 : index
      %48 = vector.load %arg13[%c0_33, %c0_34] : memref<16x128xf32, #tpu.memory_space<vmem>>, vector<16x128xf32>
      tpu.vector_store %arg13[%c0_33, %c0_34], %47 {strides = array<i32>} : memref<16x128xf32, #tpu.memory_space<vmem>>, vector<16x128xf32>,
      %49 = arith.mulf %47, %47 : vector<16x128xf32>
      %cst_35 = arith.constant dense<0.000000e+00> : vector<16xf32>
      %50 = vector.multi_reduction <add>, %49, %cst_35 [1] : vector<16x128xf32> to vector<16xf32>
      %51 = vector.shape_cast %50 : vector<16xf32> to vector<16x1xf32>
      %cst_36 = arith.constant 1.280000e+02 : f32
      %52 = vector.broadcast %cst_36 : f32 to vector<16x1xf32>
      %53 = arith.divf %51, %52 : vector<16x1xf32>
      %cst_37 = arith.constant 9.99999997E-7 : f32
      %54 = vector.broadcast %cst_37 : f32 to vector<16x1xf32>
      %55 = arith.addf %53, %54 : vector<16x1xf32>
      %56 = math.rsqrt %55 : vector<16x1xf32>
      %57 = vector.broadcast %56 : vector<16x1xf32> to vector<16x128xf32>
      %58 = arith.mulf %47, %57 : vector<16x128xf32>
      %cst_38 = arith.constant 1.000000e+00 : f32
      %59 = vector.broadcast %cst_38 : f32 to vector<1x128xf32>
      %60 = arith.addf %59, %35 : vector<1x128xf32>
      %61 = vector.broadcast %60 : vector<1x128xf32> to vector<16x128xf32>
      %62 = arith.mulf %58, %61 : vector<16x128xf32>
      %63 = vector.broadcast %34 : vector<1x128xf32> to vector<16x128xf32>
      %64 = arith.addf %62, %63 : vector<16x128xf32>
      %65 = arith.truncf %64 : vector<16x128xf32> to vector<16x128xbf16>
      %c0_39 = arith.constant 0 : index
      %c0_40 = arith.constant 0 : index
      %66 = vector.load %arg14[%c0_39, %c0_40] : memref<16x128xbf16, #tpu.memory_space<vmem>>, vector<16x128xbf16>
      tpu.vector_store %arg14[%c0_39, %c0_40], %65 {strides = array<i32>} : memref<16x128xbf16, #tpu.memory_space<vmem>>, vector<16x128xbf16>,
      %cst_41 = arith.constant 0.000000e+00 : f32
      %67 = vector.broadcast %cst_41 : f32 to vector<16x128xf32>
      %c0_42 = arith.constant 0 : index
      %c0_43 = arith.constant 0 : index
      %68 = vector.load %arg15[%c0_42, %c0_43] : memref<16x128xf32, #tpu.memory_space<vmem>>, vector<16x128xf32>
      tpu.vector_store %arg15[%c0_42, %c0_43], %67 {strides = array<i32>} : memref<16x128xf32, #tpu.memory_space<vmem>>, vector<16x128xf32>,
    } else {
    }
    %c0 = arith.constant 0 : index
    %c0_1 = arith.constant 0 : index
    %3 = vector.load %arg14[%c0, %c0_1] : memref<16x128xbf16, #tpu.memory_space<vmem>>, vector<16x128xbf16>
    %c0_2 = arith.constant 0 : index
    %c0_3 = arith.constant 0 : index
    %4 = vector.load %arg8[%c0_2, %c0_3] : memref<128x128xbf16, #tpu.memory_space<vmem>>, vector<128x128xbf16>
    %cst = arith.constant dense<0.000000e+00> : vector<16x128xf32>
    %5 = tpu.matmul %3, %4, %cst {dimension_numbers = #tpu.dot_dimension_numbers<[1], [0], [0], [1], [0, 0, 1, 1], [], []>} : vector<16x128xbf16>, vector<128x128xbf16>, vector<16x128xf32> -> vector<16x128xf32>
    %c0_4 = arith.constant 0 : index
    %c0_5 = arith.constant 0 : index
    %6 = vector.load %arg9[%c0_4, %c0_5] : memref<1x128xf32, #tpu.memory_space<vmem>>, vector<1x128xf32>
    %7 = vector.broadcast %6 : vector<1x128xf32> to vector<16x128xf32>
    %8 = arith.addf %5, %7 : vector<16x128xf32>
    %cst_6 = arith.constant 5.000000e-01 : f32
    %9 = vector.broadcast %cst_6 : f32 to vector<16x128xf32>
    %10 = arith.mulf %9, %8 : vector<16x128xf32>
    %cst_7 = arith.constant 4.471500e-02 : f32
    %11 = vector.broadcast %cst_7 : f32 to vector<16x128xf32>
    %12 = arith.mulf %11, %8 : vector<16x128xf32>
    %13 = arith.mulf %12, %8 : vector<16x128xf32>
    %14 = arith.mulf %13, %8 : vector<16x128xf32>
    %15 = arith.addf %8, %14 : vector<16x128xf32>
    %cst_8 = arith.constant 0.797884583 : f32
    %16 = vector.broadcast %cst_8 : f32 to vector<16x128xf32>
    %17 = arith.mulf %16, %15 : vector<16x128xf32>
    %18 = math.tanh %17 : vector<16x128xf32>
    %cst_9 = arith.constant 1.000000e+00 : f32
    %19 = vector.broadcast %cst_9 : f32 to vector<16x128xf32>
    %20 = arith.addf %19, %18 : vector<16x128xf32>
    %21 = arith.mulf %10, %20 : vector<16x128xf32>
    %22 = arith.truncf %21 : vector<16x128xf32> to vector<16x128xbf16>
    %c0_10 = arith.constant 0 : index
    %c0_11 = arith.constant 0 : index
    %23 = vector.load %arg15[%c0_10, %c0_11] : memref<16x128xf32, #tpu.memory_space<vmem>>, vector<16x128xf32>
    %c0_12 = arith.constant 0 : index
    %c0_13 = arith.constant 0 : index
    %24 = vector.load %arg10[%c0_12, %c0_13] : memref<128x128xbf16, #tpu.memory_space<vmem>>, vector<128x128xbf16>
    %cst_14 = arith.constant dense<0.000000e+00> : vector<16x128xf32>
    %25 = tpu.matmul %22, %24, %cst_14 {dimension_numbers = #tpu.dot_dimension_numbers<[1], [0], [0], [1], [0, 0, 1, 1], [], []>} : vector<16x128xbf16>, vector<128x128xbf16>, vector<16x128xf32> -> vector<16x128xf32>
    %26 = arith.addf %23, %25 : vector<16x128xf32>
    %c0_15 = arith.constant 0 : index
    %c0_16 = arith.constant 0 : index
    %27 = vector.load %arg15[%c0_15, %c0_16] : memref<16x128xf32, #tpu.memory_space<vmem>>, vector<16x128xf32>
    tpu.vector_store %arg15[%c0_15, %c0_16], %26 {strides = array<i32>} : memref<16x128xf32, #tpu.memory_space<vmem>>, vector<16x128xf32>,
    %c3_i32 = arith.constant 3 : i32
    %28 = arith.cmpi eq, %arg2, %c3_i32 : i32
    %29 = arith.extui %28 : i1 to i32
    %c0_i32_17 = arith.constant 0 : i32
    %30 = arith.cmpi ne, %29, %c0_i32_17 : i32
    scf.if %30 {
      %c0_18 = arith.constant 0 : index
      %c0_19 = arith.constant 0 : index
      %c0_20 = arith.constant 0 : index
      %c0_21 = arith.constant 0 : index
      %31 = vector.load %arg5[%c0_18, %c0_19, %c0_20, %c0_21] : memref<1x1x6x128xf32, #tpu.memory_space<vmem>>, vector<1x1x6x128xf32>
      %32 = vector.shape_cast %31 : vector<1x1x6x128xf32> to vector<6x128xf32>
      %33 = vector.extract_strided_slice %32 {offsets = [5, 0], sizes = [1, 128], strides = [1, 1]} : vector<6x128xf32> to vector<1x128xf32>
      %c0_22 = arith.constant 0 : index
      %c0_23 = arith.constant 0 : index
      %34 = vector.load %arg15[%c0_22, %c0_23] : memref<16x128xf32, #tpu.memory_space<vmem>>, vector<16x128xf32>
      %c0_24 = arith.constant 0 : index
      %c0_25 = arith.constant 0 : index
      %35 = vector.load %arg11[%c0_24, %c0_25] : memref<1x128xf32, #tpu.memory_space<vmem>>, vector<1x128xf32>
      %36 = vector.broadcast %35 : vector<1x128xf32> to vector<16x128xf32>
      %37 = arith.addf %34, %36 : vector<16x128xf32>
      %38 = vector.broadcast %33 : vector<1x128xf32> to vector<16x128xf32>
      %39 = arith.mulf %37, %38 : vector<16x128xf32>
      %c0_26 = arith.constant 0 : index
      %c0_27 = arith.constant 0 : index
      %40 = vector.load %arg13[%c0_26, %c0_27] : memref<16x128xf32, #tpu.memory_space<vmem>>, vector<16x128xf32>
      %41 = arith.addf %39, %40 : vector<16x128xf32>
      %c0_28 = arith.constant 0 : index
      %c0_29 = arith.constant 0 : index
      %c0_30 = arith.constant 0 : index
      %42 = vector.load %arg12[%c0_28, %c0_29, %c0_30] : memref<1x16x128xf32, #tpu.memory_space<vmem>>, vector<1x16x128xf32>
      %43 = vector.shape_cast %42 : vector<1x16x128xf32> to vector<16x128xf32>
      %44 = vector.shape_cast %41 : vector<16x128xf32> to vector<1x16x128xf32>
      tpu.vector_store %arg12[%c0_28, %c0_29, %c0_30], %44 {strides = array<i32>} : memref<1x16x128xf32, #tpu.memory_space<vmem>>, vector<1x16x128xf32>,
    } else {
    }
    return
  }
  func.func @transform_0(%arg0: i32, %arg1: i32, %arg2: i32) -> (i32, i32, i32) {
    %c0_i32 = arith.constant 0 : i32
    %0 = arith.addi %arg1, %c0_i32 : i32
    %c0_i32_0 = arith.constant 0 : i32
    %c0_i32_1 = arith.constant 0 : i32
    return %arg0, %0, %c0_i32_0 : i32, i32, i32
  }
  func.func @transform_1(%arg0: i32, %arg1: i32, %arg2: i32) -> (i32, i32, i32) {
    %c0_i32 = arith.constant 0 : i32
    %c0_i32_0 = arith.constant 0 : i32
    return %arg0, %arg1, %c0_i32 : i32, i32, i32
  }
  func.func @transform_2(%arg0: i32, %arg1: i32, %arg2: i32) -> (i32, i32, i32, i32) {
    %c0_i32 = arith.constant 0 : i32
    %c0_i32_0 = arith.constant 0 : i32
    %c0_i32_1 = arith.constant 0 : i32
    %c0_i32_2 = arith.constant 0 : i32
    return %c0_i32, %arg0, %c0_i32_0, %c0_i32_1 : i32, i32, i32, i32
  }
  func.func @transform_3(%arg0: i32, %arg1: i32, %arg2: i32) -> (i32, i32) {
    %c0_i32 = arith.constant 0 : i32
    %c0_i32_0 = arith.constant 0 : i32
    %c0_i32_1 = arith.constant 0 : i32
    return %c0_i32, %c0_i32_0 : i32, i32
  }
  func.func @transform_4(%arg0: i32, %arg1: i32, %arg2: i32) -> (i32, i32) {
    %c0_i32 = arith.constant 0 : i32
    %c0_i32_0 = arith.constant 0 : i32
    %c0_i32_1 = arith.constant 0 : i32
    return %c0_i32, %c0_i32_0 : i32, i32
  }
  func.func @transform_5(%arg0: i32, %arg1: i32, %arg2: i32) -> (i32, i32) {
    %c0_i32 = arith.constant 0 : i32
    %c0_i32_0 = arith.constant 0 : i32
    return %c0_i32, %arg2 : i32, i32
  }
  func.func @transform_6(%arg0: i32, %arg1: i32, %arg2: i32) -> (i32, i32) {
    %c0_i32 = arith.constant 0 : i32
    %c0_i32_0 = arith.constant 0 : i32
    return %c0_i32, %arg2 : i32, i32
  }
  func.func @transform_7(%arg0: i32, %arg1: i32, %arg2: i32) -> (i32, i32) {
    %c0_i32 = arith.constant 0 : i32
    %c0_i32_0 = arith.constant 0 : i32
    return %arg2, %c0_i32 : i32, i32
  }
  func.func @transform_8(%arg0: i32, %arg1: i32, %arg2: i32) -> (i32, i32) {
    %c0_i32 = arith.constant 0 : i32
    %c0_i32_0 = arith.constant 0 : i32
    %c0_i32_1 = arith.constant 0 : i32
    return %c0_i32, %c0_i32_0 : i32, i32
  }
  func.func @transform_9(%arg0: i32, %arg1: i32, %arg2: i32) -> (i32, i32, i32) {
    %c0_i32 = arith.constant 0 : i32
    %c0_i32_0 = arith.constant 0 : i32
    return %arg0, %arg1, %c0_i32 : i32, i32, i32
  }
}

module attributes {stable_mosaic.version = 11 : i64} {
  func.func @post_kernel(%arg0: i32, %arg1: i32, %arg2: i32, %arg3: memref<1x16x128xbf16, #tpu.memory_space<vmem>>, %arg4: memref<1x16x128xf32, #tpu.memory_space<vmem>>, %arg5: memref<1x1x6x128xf32, #tpu.memory_space<vmem>>, %arg6: memref<128x128xbf16, #tpu.memory_space<vmem>>, %arg7: memref<1x128xf32, #tpu.memory_space<vmem>>, %arg8: memref<128x128xbf16, #tpu.memory_space<vmem>>, %arg9: memref<1x128xf32, #tpu.memory_space<vmem>>, %arg10: memref<128x128xbf16, #tpu.memory_space<vmem>>, %arg11: memref<1x128xf32, #tpu.memory_space<vmem>>, %arg12: memref<1x16x128xf32, #tpu.memory_space<vmem>>, %arg13: memref<16x128xf32, #tpu.memory_space<vmem>>, %arg14: memref<16x128xbf16, #tpu.memory_space<vmem>>, %arg15: memref<16x128xf32, #tpu.memory_space<vmem>>) attributes {dimension_semantics = [#tpu.dimension_semantics<parallel>, #tpu.dimension_semantics<parallel>, #tpu.dimension_semantics<arbitrary>], iteration_bounds = array<i64: 2, 3, 4>, scalar_prefetch = 0 : i64, scratch_operands = 3 : i64, tpu.core_type = #tpu.core_type<tc>, window_params = [{transform_indices = @transform_0, window_bounds = array<i64: 1, 16, 128>}, {transform_indices = @transform_1, window_bounds = array<i64: 1, 16, 128>}, {transform_indices = @transform_2, window_bounds = array<i64: 1, 1, 6, 128>}, {pipeline_mode = #tpu.pipeline_mode<synchronous>, transform_indices = @transform_3, window_bounds = array<i64: 128, 128>}, {pipeline_mode = #tpu.pipeline_mode<synchronous>, transform_indices = @transform_4, window_bounds = array<i64: 1, 128>}, {transform_indices = @transform_5, window_bounds = array<i64: 128, 128>}, {transform_indices = @transform_6, window_bounds = array<i64: 1, 128>}, {transform_indices = @transform_7, window_bounds = array<i64: 128, 128>}, {pipeline_mode = #tpu.pipeline_mode<synchronous>, transform_indices = @transform_8, window_bounds = array<i64: 1, 128>}, {transform_indices = @transform_9, window_bounds = array<i64: 1, 16, 128>}]} {
    %c0_i32 = arith.constant 0 : i32
    %0 = arith.cmpi eq, %arg2, %c0_i32 : i32
    %1 = arith.extui %0 : i1 to i32
    %c0_i32_0 = arith.constant 0 : i32
    %2 = arith.cmpi ne, %1, %c0_i32_0 : i32
    scf.if %2 {
      %c0_18 = arith.constant 0 : index
      %c0_19 = arith.constant 0 : index
      %c0_20 = arith.constant 0 : index
      %c0_21 = arith.constant 0 : index
      %31 = vector.load %arg5[%c0_18, %c0_19, %c0_20, %c0_21] : memref<1x1x6x128xf32, #tpu.memory_space<vmem>>, vector<1x1x6x128xf32>
      %32 = vector.shape_cast %31 : vector<1x1x6x128xf32> to vector<6x128xf32>
      %33 = vector.extract_strided_slice %32 {offsets = [2, 0], sizes = [1, 128], strides = [1, 1]} : vector<6x128xf32> to vector<1x128xf32>
      %34 = vector.extract_strided_slice %32 {offsets = [3, 0], sizes = [1, 128], strides = [1, 1]} : vector<6x128xf32> to vector<1x128xf32>
      %35 = vector.extract_strided_slice %32 {offsets = [4, 0], sizes = [1, 128], strides = [1, 1]} : vector<6x128xf32> to vector<1x128xf32>
      %c0_22 = arith.constant 0 : index
      %c0_23 = arith.constant 0 : index
      %c0_24 = arith.constant 0 : index
      %36 = vector.load %arg3[%c0_22, %c0_23, %c0_24] : memref<1x16x128xbf16, #tpu.memory_space<vmem>>, vector<1x16x128xbf16>
      %37 = vector.shape_cast %36 : vector<1x16x128xbf16> to vector<16x128xbf16>
      %c0_25 = arith.constant 0 : index
      %c0_26 = arith.constant 0 : index
      %38 = vector.load %arg6[%c0_25, %c0_26] : memref<128x128xbf16, #tpu.memory_space<vmem>>, vector<128x128xbf16>
      %cst_27 = arith.constant dense<0.000000e+00> : vector<16x128xf32>
      %39 = tpu.matmul %37, %38, %cst_27 {dimension_numbers = #tpu.dot_dimension_numbers<[1], [0], [0], [1], [0, 0, 1, 1], [], []>} : vector<16x128xbf16>, vector<128x128xbf16>, vector<16x128xf32> -> vector<16x128xf32>
      %c0_28 = arith.constant 0 : index
      %c0_29 = arith.constant 0 : index
      %40 = vector.load %arg7[%c0_28, %c0_29] : memref<1x128xf32, #tpu.memory_space<vmem>>, vector<1x128xf32>
      %41 = vector.broadcast %40 : vector<1x128xf32> to vector<16x128xf32>
      %42 = arith.addf %39, %41 : vector<16x128xf32>
      %43 = vector.broadcast %33 : vector<1x128xf32> to vector<16x128xf32>
      %44 = arith.mulf %42, %43 : vector<16x128xf32>
      %c0_30 = arith.constant 0 : index
      %c0_31 = arith.constant 0 : index
      %c0_32 = arith.constant 0 : index
      %45 = vector.load %arg4[%c0_30, %c0_31, %c0_32] : memref<1x16x128xf32, #tpu.memory_space<vmem>>, vector<1x16x128xf32>
      %46 = vector.shape_cast %45 : vector<1x16x128xf32> to vector<16x128xf32>
      %47 = arith.addf %44, %46 : vector<16x128xf32>
      %c0_33 = arith.constant 0 : index
      %c0_34 = arith.constant 0 : index
      %48 = vector.load %arg13[%c0_33, %c0_34] : memref<16x128xf32, #tpu.memory_space<vmem>>, vector<16x128xf32>
      tpu.vector_store %arg13[%c0_33, %c0_34], %47 {strides = array<i32>} : memref<16x128xf32, #tpu.memory_space<vmem>>, vector<16x128xf32>,
      %49 = arith.mulf %47, %47 : vector<16x128xf32>
      %cst_35 = arith.constant dense<0.000000e+00> : vector<16xf32>
      %50 = vector.multi_reduction <add>, %49, %cst_35 [1] : vector<16x128xf32> to vector<16xf32>
      %51 = vector.shape_cast %50 : vector<16xf32> to vector<16x1xf32>
      %cst_36 = arith.constant 1.280000e+02 : f32
      %52 = vector.broadcast %cst_36 : f32 to vector<16x1xf32>
      %53 = arith.divf %51, %52 : vector<16x1xf32>
      %cst_37 = arith.constant 9.99999997E-7 : f32
      %54 = vector.broadcast %cst_37 : f32 to vector<16x1xf32>
      %55 = arith.addf %53, %54 : vector<16x1xf32>
      %56 = math.rsqrt %55 : vector<16x1xf32>
      %57 = vector.broadcast %56 : vector<16x1xf32> to vector<16x128xf32>
      %58 = arith.mulf %47, %57 : vector<16x128xf32>
      %cst_38 = arith.constant 1.000000e+00 : f32
      %59 = vector.broadcast %cst_38 : f32 to vector<1x128xf32>
      %60 = arith.addf %59, %35 : vector<1x128xf32>
      %61 = vector.broadcast %60 : vector<1x128xf32> to vector<16x128xf32>
      %62 = arith.mulf %58, %61 : vector<16x128xf32>
      %63 = vector.broadcast %34 : vector<1x128xf32> to vector<16x128xf32>
      %64 = arith.addf %62, %63 : vector<16x128xf32>
      %65 = arith.truncf %64 : vector<16x128xf32> to vector<16x128xbf16>
      %c0_39 = arith.constant 0 : index
      %c0_40 = arith.constant 0 : index
      %66 = vector.load %arg14[%c0_39, %c0_40] : memref<16x128xbf16, #tpu.memory_space<vmem>>, vector<16x128xbf16>
      tpu.vector_store %arg14[%c0_39, %c0_40], %65 {strides = array<i32>} : memref<16x128xbf16, #tpu.memory_space<vmem>>, vector<16x128xbf16>,
      %cst_41 = arith.constant 0.000000e+00 : f32
      %67 = vector.broadcast %cst_41 : f32 to vector<16x128xf32>
      %c0_42 = arith.constant 0 : index
      %c0_43 = arith.constant 0 : index
      %68 = vector.load %arg15[%c0_42, %c0_43] : memref<16x128xf32, #tpu.memory_space<vmem>>, vector<16x128xf32>
      tpu.vector_store %arg15[%c0_42, %c0_43], %67 {strides = array<i32>} : memref<16x128xf32, #tpu.memory_space<vmem>>, vector<16x128xf32>,
    } else {
    }
    %c0 = arith.constant 0 : index
    %c0_1 = arith.constant 0 : index
    %3 = vector.load %arg14[%c0, %c0_1] : memref<16x128xbf16, #tpu.memory_space<vmem>>, vector<16x128xbf16>
    %c0_2 = arith.constant 0 : index
    %c0_3 = arith.constant 0 : index
    %4 = vector.load %arg8[%c0_2, %c0_3] : memref<128x128xbf16, #tpu.memory_space<vmem>>, vector<128x128xbf16>
    %cst = arith.constant dense<0.000000e+00> : vector<16x128xf32>
    %5 = tpu.matmul %3, %4, %cst {dimension_numbers = #tpu.dot_dimension_numbers<[1], [0], [0], [1], [0, 0, 1, 1], [], []>} : vector<16x128xbf16>, vector<128x128xbf16>, vector<16x128xf32> -> vector<16x128xf32>
    %c0_4 = arith.constant 0 : index
    %c0_5 = arith.constant 0 : index
    %6 = vector.load %arg9[%c0_4, %c0_5] : memref<1x128xf32, #tpu.memory_space<vmem>>, vector<1x128xf32>
    %7 = vector.broadcast %6 : vector<1x128xf32> to vector<16x128xf32>
    %8 = arith.addf %5, %7 : vector<16x128xf32>
    %cst_6 = arith.constant 5.000000e-01 : f32
    %9 = vector.broadcast %cst_6 : f32 to vector<16x128xf32>
    %10 = arith.mulf %9, %8 : vector<16x128xf32>
    %cst_7 = arith.constant 4.471500e-02 : f32
    %11 = vector.broadcast %cst_7 : f32 to vector<16x128xf32>
    %12 = arith.mulf %11, %8 : vector<16x128xf32>
    %13 = arith.mulf %12, %8 : vector<16x128xf32>
    %14 = arith.mulf %13, %8 : vector<16x128xf32>
    %15 = arith.addf %8, %14 : vector<16x128xf32>
    %cst_8 = arith.constant 0.797884583 : f32
    %16 = vector.broadcast %cst_8 : f32 to vector<16x128xf32>
    %17 = arith.mulf %16, %15 : vector<16x128xf32>
    %18 = math.tanh %17 : vector<16x128xf32>
    %cst_9 = arith.constant 1.000000e+00 : f32
    %19 = vector.broadcast %cst_9 : f32 to vector<16x128xf32>
    %20 = arith.addf %19, %18 : vector<16x128xf32>
    %21 = arith.mulf %10, %20 : vector<16x128xf32>
    %22 = arith.truncf %21 : vector<16x128xf32> to vector<16x128xbf16>
    %c0_10 = arith.constant 0 : index
    %c0_11 = arith.constant 0 : index
    %23 = vector.load %arg15[%c0_10, %c0_11] : memref<16x128xf32, #tpu.memory_space<vmem>>, vector<16x128xf32>
    %c0_12 = arith.constant 0 : index
    %c0_13 = arith.constant 0 : index
    %24 = vector.load %arg10[%c0_12, %c0_13] : memref<128x128xbf16, #tpu.memory_space<vmem>>, vector<128x128xbf16>
    %cst_14 = arith.constant dense<0.000000e+00> : vector<16x128xf32>
    %25 = tpu.matmul %22, %24, %cst_14 {dimension_numbers = #tpu.dot_dimension_numbers<[1], [0], [0], [1], [0, 0, 1, 1], [], []>} : vector<16x128xbf16>, vector<128x128xbf16>, vector<16x128xf32> -> vector<16x128xf32>
    %26 = arith.addf %23, %25 : vector<16x128xf32>
    %c0_15 = arith.constant 0 : index
    %c0_16 = arith.constant 0 : index
    %27 = vector.load %arg15[%c0_15, %c0_16] : memref<16x128xf32, #tpu.memory_space<vmem>>, vector<16x128xf32>
    tpu.vector_store %arg15[%c0_15, %c0_16], %26 {strides = array<i32>} : memref<16x128xf32, #tpu.memory_space<vmem>>, vector<16x128xf32>,
    %c3_i32 = arith.constant 3 : i32
    %28 = arith.cmpi eq, %arg2, %c3_i32 : i32
    %29 = arith.extui %28 : i1 to i32
    %c0_i32_17 = arith.constant 0 : i32
    %30 = arith.cmpi ne, %29, %c0_i32_17 : i32
    scf.if %30 {
      %c0_18 = arith.constant 0 : index
      %c0_19 = arith.constant 0 : index
      %c0_20 = arith.constant 0 : index
      %c0_21 = arith.constant 0 : index
      %31 = vector.load %arg5[%c0_18, %c0_19, %c0_20, %c0_21] : memref<1x1x6x128xf32, #tpu.memory_space<vmem>>, vector<1x1x6x128xf32>
      %32 = vector.shape_cast %31 : vector<1x1x6x128xf32> to vector<6x128xf32>
      %33 = vector.extract_strided_slice %32 {offsets = [5, 0], sizes = [1, 128], strides = [1, 1]} : vector<6x128xf32> to vector<1x128xf32>
      %c0_22 = arith.constant 0 : index
      %c0_23 = arith.constant 0 : index
      %34 = vector.load %arg15[%c0_22, %c0_23] : memref<16x128xf32, #tpu.memory_space<vmem>>, vector<16x128xf32>
      %c0_24 = arith.constant 0 : index
      %c0_25 = arith.constant 0 : index
      %35 = vector.load %arg11[%c0_24, %c0_25] : memref<1x128xf32, #tpu.memory_space<vmem>>, vector<1x128xf32>
      %36 = vector.broadcast %35 : vector<1x128xf32> to vector<16x128xf32>
      %37 = arith.addf %34, %36 : vector<16x128xf32>
      %38 = vector.broadcast %33 : vector<1x128xf32> to vector<16x128xf32>
      %39 = arith.mulf %37, %38 : vector<16x128xf32>
      %c0_26 = arith.constant 0 : index
      %c0_27 = arith.constant 0 : index
      %40 = vector.load %arg13[%c0_26, %c0_27] : memref<16x128xf32, #tpu.memory_space<vmem>>, vector<16x128xf32>
      %41 = arith.addf %39, %40 : vector<16x128xf32>
      %c0_28 = arith.constant 0 : index
      %c0_29 = arith.constant 0 : index
      %c0_30 = arith.constant 0 : index
      %42 = vector.load %arg12[%c0_28, %c0_29, %c0_30] : memref<1x16x128xf32, #tpu.memory_space<vmem>>, vector<1x16x128xf32>
      %43 = vector.shape_cast %42 : vector<1x16x128xf32> to vector<16x128xf32>
      %44 = vector.shape_cast %41 : vector<16x128xf32> to vector<1x16x128xf32>
      tpu.vector_store %arg12[%c0_28, %c0_29, %c0_30], %44 {strides = array<i32>} : memref<1x16x128xf32, #tpu.memory_space<vmem>>, vector<1x16x128xf32>,
    } else {
    }
    return
  }
  func.func @transform_0(%arg0: i32, %arg1: i32, %arg2: i32) -> (i32, i32, i32) {
    %c1_i32 = arith.constant 1 : i32
    %0 = arith.addi %arg1, %c1_i32 : i32
    %c0_i32 = arith.constant 0 : i32
    %c0_i32_0 = arith.constant 0 : i32
    return %arg0, %0, %c0_i32 : i32, i32, i32
  }
  func.func @transform_1(%arg0: i32, %arg1: i32, %arg2: i32) -> (i32, i32, i32) {
    %c0_i32 = arith.constant 0 : i32
    %c0_i32_0 = arith.constant 0 : i32
    return %arg0, %arg1, %c0_i32 : i32, i32, i32
  }
  func.func @transform_2(%arg0: i32, %arg1: i32, %arg2: i32) -> (i32, i32, i32, i32) {
    %c1_i32 = arith.constant 1 : i32
    %c0_i32 = arith.constant 0 : i32
    %c0_i32_0 = arith.constant 0 : i32
    %c0_i32_1 = arith.constant 0 : i32
    return %c1_i32, %arg0, %c0_i32, %c0_i32_0 : i32, i32, i32, i32
  }
  func.func @transform_3(%arg0: i32, %arg1: i32, %arg2: i32) -> (i32, i32) {
    %c0_i32 = arith.constant 0 : i32
    %c0_i32_0 = arith.constant 0 : i32
    %c0_i32_1 = arith.constant 0 : i32
    return %c0_i32, %c0_i32_0 : i32, i32
  }
  func.func @transform_4(%arg0: i32, %arg1: i32, %arg2: i32) -> (i32, i32) {
    %c0_i32 = arith.constant 0 : i32
    %c0_i32_0 = arith.constant 0 : i32
    %c0_i32_1 = arith.constant 0 : i32
    return %c0_i32, %c0_i32_0 : i32, i32
  }
  func.func @transform_5(%arg0: i32, %arg1: i32, %arg2: i32) -> (i32, i32) {
    %c0_i32 = arith.constant 0 : i32
    %c0_i32_0 = arith.constant 0 : i32
    return %c0_i32, %arg2 : i32, i32
  }
  func.func @transform_6(%arg0: i32, %arg1: i32, %arg2: i32) -> (i32, i32) {
    %c0_i32 = arith.constant 0 : i32
    %c0_i32_0 = arith.constant 0 : i32
    return %c0_i32, %arg2 : i32, i32
  }
  func.func @transform_7(%arg0: i32, %arg1: i32, %arg2: i32) -> (i32, i32) {
    %c0_i32 = arith.constant 0 : i32
    %c0_i32_0 = arith.constant 0 : i32
    return %arg2, %c0_i32 : i32, i32
  }
  func.func @transform_8(%arg0: i32, %arg1: i32, %arg2: i32) -> (i32, i32) {
    %c0_i32 = arith.constant 0 : i32
    %c0_i32_0 = arith.constant 0 : i32
    %c0_i32_1 = arith.constant 0 : i32
    return %c0_i32, %c0_i32_0 : i32, i32
  }
  func.func @transform_9(%arg0: i32, %arg1: i32, %arg2: i32) -> (i32, i32, i32) {
    %c0_i32 = arith.constant 0 : i32
    %c0_i32_0 = arith.constant 0 : i32
    return %arg0, %arg1, %c0_i32 : i32, i32, i32
  }
}

</mosaic_0001>

<llo_original>
// kernel: joint_block_forward.5
$region0: #{joint_block_forward.5}
  #allocation0 [shape = 'u32[]', space=smem, size = 0x4, offset = 0x4, fixed_abs, tag = 'smem constant byte address 0x4 - core index']
  #allocation1 [shape = 'u32[144,128]{1,0:T(1,128)}', space=vmem, size = 0x12000, scoped, tag = 'internal scratch']
  %s0 = inlined_call_operand.vmem [shape: f32[2,128], index: 0, kind: input, shape index: {}]
  %s1 = inlined_call_operand.hbm [shape: bf16[2,128,768], index: 1, kind: input, shape index: {}]
  %s2 = inlined_call_operand.vmem [shape: f32[2,1,768], index: 2, kind: input, shape index: {}]
  %s3 = inlined_call_operand.vmem [shape: f32[2,2,768], index: 3, kind: output, shape index: {}]
  %s4 = sld [smem:[#allocation0]]
  $region49: #{joint_block_forward.5} parent=0
    _
  %s6 = ssub.s32 1, %s4
  %s7 = scalar_select 0, %s6, %s4
  $region1: #{joint_block_forward.5} parent=0
    #allocation2 [shape = 'u8[65536]{0}', space=vmem, size = 0x10000, scoped, tag = 'input window, operand 1']
    #allocation3 [shape = 's32[2]{0}', space=sflag, size = 0x8, scoped, tag = 'scoped memory for joint_block_forward.5']
    %8 = vsyncpa [#allocation3], 0
    %s9 = scalar_lea.sflag [#allocation3], 1
    %10 = vsyncpa %s9, 0
    loop: start=0, step=1, limit=14
    $region2: #{joint_block_forward.5} parent=1 // loop_pre_header
      _
    $region3: #{joint_block_forward.5} parent=1 // loop_header
      %s12 = sphi 0, %s16
      %p13 = scmp.ge.s32.totalorder %s12, 14
      %s19 = sphi 0, %s31
      %s20 = sphi 0, %s27
      %s21 = sphi 0, %s19
      %s22 = sphi 0, %s20
      %s23 = sphi 0, %s21
      %s24 = sphi 0, %s22
      %s32 = sphi 0, %s32
      %s34 = sphi 0, %s32
      %s35 = sphi 0, %s34
      %s49 = sphi 0, %s35
      %s57 = sphi 0, %s59
      %s60 = sphi 0, %s57
      %s61 = sphi 0, %s60
      %s77 = sphi 0, %s61
      %s85 = sphi 0, %s87
      %s88 = sphi 0, %s85
      %s89 = sphi 0, %s88
      %s105 = sphi 0, %s89
      %s113 = sphi 0, %s115
      %s116 = sphi 0, %s113
      %s117 = sphi 0, %s116
      %s133 = sphi 0, %s117
    $region4: #{joint_block_forward.5} parent=1 // loop_header_branch
      %15 = sbr.rel (%p13) target = $region8
    $region5: #{joint_block_forward.5} parent=1 // loop_body
      %s17 = ssub.s32 %s12, 1
      %s18 = ssub.s32 %s12, 2
      %s25 = sadd.s32 1, %s20
      %p26 = scmp.ge.s32.totalorder %s25, 6
      %s27 = scalar_select %p26, 0, %s25
      %s28 = sadd.s32 1, %s19
      %s29 = scalar_select %p26, %s28, %s19
      %p30 = scmp.ge.s32.totalorder %s29, 2
      %s31 = scalar_select %p30, 0, %s29
      %s33 = sadd.s32 %s32, 1
      %p36 = scmp.eq.s32.totalorder %s12, 11
      %p37 = scmp.ne.s32.totalorder %s32, %s34
      %p38 = scmp.eq.s32.totalorder %s12, 0
      %p39 = por %p37, %p38
      %p40 = scmp.ne.s32.totalorder %s32, %s34
      %p41 = scmp.eq.s32.totalorder %s17, 11
      %p42 = por %p40, %p41
      %p43 = scmp.ne.s32.totalorder %s34, %s35
      %p44 = scmp.eq.s32.totalorder %s17, 0
      %p45 = por %p43, %p44
      %p46 = scmp.ne.s32.totalorder %s34, %s35
      %p47 = scmp.eq.s32.totalorder %s18, 11
      %p48 = por %p46, %p47
      %p50 = scmp.ne.s32.totalorder %s35, %s49
      %p51 = scmp.eq.s32.totalorder %s18, 0
      %p52 = por %p50, %p51
      %s53 = ssub.s32 %s19, %s31
      %s54 = ssub.s32 %s20, %s27
      %s55 = sor.u32 %s53, %s54
      %p56 = scmp.eq.s32.totalorder %s55, 0
      %s58 = sadd.s32 %s57, 1
      %s59 = scalar_select %p56, %s57, %s58
      %p62 = pneg %p56
      %p63 = scmp.eq.s32.totalorder %s12, 11
      %p64 = por %p62, %p63
      %p65 = scmp.ne.s32.totalorder %s57, %s60
      %p66 = scmp.eq.s32.totalorder %s12, 0
      %p67 = por %p65, %p66
      %p68 = scmp.ne.s32.totalorder %s57, %s60
      %p69 = scmp.eq.s32.totalorder %s17, 11
      %p70 = por %p68, %p69
      %p71 = scmp.ne.s32.totalorder %s60, %s61
      %p72 = scmp.eq.s32.totalorder %s17, 0
      %p73 = por %p71, %p72
      %p74 = scmp.ne.s32.totalorder %s60, %s61
      %p75 = scmp.eq.s32.totalorder %s18, 11
      %p76 = por %p74, %p75
      %p78 = scmp.ne.s32.totalorder %s61, %s77
      %p79 = scmp.eq.s32.totalorder %s18, 0
      %p80 = por %p78, %p79
      %s81 = ssub.s32 %s19, %s31
      %s82 = ssub.s32 %s20, %s27
      %s83 = sor.u32 %s81, %s82
      %p84 = scmp.eq.s32.totalorder %s83, 0
      %s86 = sadd.s32 %s85, 1
      %s87 = scalar_select %p84, %s85, %s86
      %p90 = pneg %p84
      %p91 = scmp.eq.s32.totalorder %s12, 11
      %p92 = por %p90, %p91
      %p93 = scmp.ne.s32.totalorder %s85, %s88
      %p94 = scmp.eq.s32.totalorder %s12, 0
      %p95 = por %p93, %p94
      %p96 = scmp.ne.s32.totalorder %s85, %s88
      %p97 = scmp.eq.s32.totalorder %s17, 11
      %p98 = por %p96, %p97
      %p99 = scmp.ne.s32.totalorder %s88, %s89
      %p100 = scmp.eq.s32.totalorder %s17, 0
      %p101 = por %p99, %p100
      %p102 = scmp.ne.s32.totalorder %s88, %s89
      %p103 = scmp.eq.s32.totalorder %s18, 11
      %p104 = por %p102, %p103
      %p106 = scmp.ne.s32.totalorder %s89, %s105
      %p107 = scmp.eq.s32.totalorder %s18, 0
      %p108 = por %p106, %p107
      %s109 = ssub.s32 %s19, %s31
      %s110 = ssub.s32 %s20, %s27
      %s111 = sor.u32 %s109, %s110
      %p112 = scmp.eq.s32.totalorder %s111, 0
      %s114 = sadd.s32 %s113, 1
      %s115 = scalar_select %p112, %s113, %s114
      %p118 = pneg %p112
      %p119 = scmp.eq.s32.totalorder %s12, 11
      %p120 = por %p118, %p119
      %p121 = scmp.ne.s32.totalorder %s113, %s116
      %p122 = scmp.eq.s32.totalorder %s12, 0
      %p123 = por %p121, %p122
      %p124 = scmp.ne.s32.totalorder %s113, %s116
      %p125 = scmp.eq.s32.totalorder %s17, 11
      %p126 = por %p124, %p125
      %p127 = scmp.ne.s32.totalorder %s116, %s117
      %p128 = scmp.eq.s32.totalorder %s17, 0
      %p129 = por %p127, %p128
      %p130 = scmp.ne.s32.totalorder %s116, %s117
      %p131 = scmp.eq.s32.totalorder %s18, 11
      %p132 = por %p130, %p131
      %p134 = scmp.ne.s32.totalorder %s117, %s133
      %p135 = scmp.eq.s32.totalorder %s18, 0
      %p136 = por %p134, %p135
      %p137 = scmp.le.s32.totalorder 1, %s12
      %p138 = scmp.lt.s32.totalorder %s12, 13
      %p139 = pnand %p137, %p138
      %p140 = pneg %p139
      // Predicated region
      $region9: #{joint_block_forward.5} parent=5 // pred_check
        _
      $region10: #{joint_block_forward.5} parent=5 // pred_check_branch
        %142 = sbr.rel (%p139) target = $region12
      $region11: #{joint_block_forward.5} parent=5 // pred_region
        %s143 = ssub.s32 %s12, 1
        // Predicated region
        $region13: #{joint_block_forward.5} parent=11 // pred_check
          %p144 = pneg %p45
        $region14: #{joint_block_forward.5} parent=11 // pred_check_branch
          %146 = sbr.rel (%p144) target = $region16
        $region15: #{joint_block_forward.5} parent=11 // pred_region
          _
        $region16: #{joint_block_forward.5} parent=11 // pred_fallthru
          _
      $region12: #{joint_block_forward.5} parent=5 // pred_fallthru
        _
      %p147 = scmp.lt.s32.totalorder %s12, 12
      // Predicated region
      $region17: #{joint_block_forward.5} parent=5 // pred_check
        %p148 = pneg %p147
      $region18: #{joint_block_forward.5} parent=5 // pred_check_branch
        %150 = sbr.rel (%p148) target = $region20
      $region19: #{joint_block_forward.5} parent=5 // pred_region
        // Predicated region
        $region21: #{joint_block_forward.5} parent=19 // pred_check
          %p151 = pneg %p67
        $region22: #{joint_block_forward.5} parent=19 // pred_check_branch
          %153 = sbr.rel (%p151) target = $region24
        $region23: #{joint_block_forward.5} parent=19 // pred_region
          %s154 = sand.u32 %s57, 1
          %s155 = scalar_lea.sflag [#allocation3], %s154
          %s156 = sand.u32 %s57, 1
          %s157 = smul.addr %s156, 64
          %s158 = scalar_lea.vmem [#allocation2], %s157
          %s160 = ssub.s32 1024, 1024
          %161 = vsyncadd %s155, %s160
          %s162 = smul.addr %s19, 96
          %s163 = sadd.s32 %s20, %s162
          %s164 = smul.addr %s163, 64
          %s165 = scalar_lea.hbm %s1, %s164
          %s166 = sshll.u32 %s158, 4
          %s167 = int_to_ptr.vmem [resolvable:$true] %s166
          %172 = dma.hbm_to_vmem [thread:$0]  %s165, 1024, %s167, %s155, 384, 64, 4
        $region24: #{joint_block_forward.5} parent=19 // pred_fallthru
          _
        // Predicated region
        $region25: #{joint_block_forward.5} parent=19 // pred_check
          %p173 = pneg %p95
        $region26: #{joint_block_forward.5} parent=19 // pred_check_branch
          %175 = sbr.rel (%p173) target = $region28
        $region27: #{joint_block_forward.5} parent=19 // pred_region
          %p176 = scmp.lt.s32.totalorder %s19, 1
          %s177 = scalar_select %p176, %s19, 1
          %p178 = scmp.lt.s32.totalorder %s20, 5
          %s179 = scalar_select %p178, %s20, 5
          %s180 = smul.addr %s177, 6
          %s181 = sadd.s32 %s179, %s180
          %s182 = scalar_lea.vmem %s2, %s181
        $region28: #{joint_block_forward.5} parent=19 // pred_fallthru
          _
      $region20: #{joint_block_forward.5} parent=5 // pred_fallthru
        _
      %p183 = scmp.le.s32.totalorder 1, %s12
      %p184 = scmp.lt.s32.totalorder %s12, 13
      %p185 = pnand %p183, %p184
      %p186 = pneg %p185
      // Predicated region
      $region29: #{joint_block_forward.5} parent=5 // pred_check
        _
      $region30: #{joint_block_forward.5} parent=5 // pred_check_branch
        %188 = sbr.rel (%p185) target = $region32
      $region31: #{joint_block_forward.5} parent=5 // pred_region
        %s189 = ssub.s32 %s12, 1
        %s190 = sand.u32 %s60, 1
        %s191 = scalar_lea.sflag [#allocation3], %s190
        %s192 = sand.u32 %s60, 1
        %s193 = smul.addr %s192, 64
        %s194 = scalar_lea.vmem [#allocation2], %s193
        // Predicated region
        $region33: #{joint_block_forward.5} parent=31 // pred_check
          %p195 = pneg %p73
        $region34: #{joint_block_forward.5} parent=31 // pred_check_branch
          %197 = sbr.rel (%p195) target = $region36
        $region35: #{joint_block_forward.5} parent=31 // pred_region
          %198 = dma.done %s191, 1024
        $region36: #{joint_block_forward.5} parent=31 // pred_fallthru
          _
        %p199 = pneg %p45
        %p200 = pneg %p42
        %s201 = sand.u32 %s60, 1
        %s202 = scalar_lea.sflag [#allocation3], %s201
        %s203 = sand.u32 %s60, 1
        %s204 = smul.addr %s203, 64
        %s205 = scalar_lea.vmem [#allocation2], %s204
        %p206 = pneg %p73
        %p207 = pneg %p70
        %p208 = scmp.lt.s32.totalorder %s21, 1
        %s209 = scalar_select %p208, %s21, 1
        %p210 = scmp.lt.s32.totalorder %s22, 5
        %s211 = scalar_select %p210, %s22, 5
        %s212 = smul.addr %s209, 6
        %s213 = sadd.s32 %s211, %s212
        %s214 = scalar_lea.vmem %s2, %s213
        %p215 = pneg %p101
        %p216 = pneg %p98
        %p217 = pneg %p129
        %p218 = pneg %p126
        %p219 = scmp.lt.s32.totalorder %s21, 1
        %s220 = scalar_select %p219, %s21, 1
        %p221 = scmp.lt.s32.totalorder %s22, 5
        %s222 = scalar_select %p221, %s22, 5
        %s223 = smul.addr %s220, 6
        %s224 = sadd.s32 %s222, %s223
        %s225 = smul.addr %s224, 2
        %s226 = scalar_lea.vmem %s3, %s225
        %p227 = scmp.lt.s32.totalorder %s21, 1
        %s228 = scalar_select %p227, %s21, 1
        %p229 = scmp.lt.s32.totalorder %s22, 5
        %s230 = scalar_select %p229, %s22, 5
        %s231 = smul.addr %s228, 6
        %s232 = sadd.s32 %s230, %s231
        %s233 = scalar_lea.vmem %s2, %s232
        %p234 = scmp.lt.s32.totalorder %s21, 1
        %s235 = scalar_select %p234, %s21, 1
        %p236 = scmp.lt.s32.totalorder %s22, 5
        %s237 = scalar_select %p236, %s22, 5
        %s238 = smul.addr %s235, 6
        %s239 = sadd.s32 %s237, %s238
        %s240 = smul.addr %s239, 2
        %s241 = scalar_lea.vmem %s3, %s240
        %v243 = vld [vmem:[%s0] sm:$0x3]
        %v244 = vxor.u32 %v243, 2147483648
        %v245 = vmul.f32 %v244, 1.442695
        %v246 = vpow.pop %v245
        %v247 = vadd.f32 %v246, 1.0
        %v248 = vrcp.pop %v247
        %v249 = vmul.f32 1.0, %v248
        %v250 = vmul.f32 %v243, %v249
        %v251 = vpack.c.bf16 %v250, %v250
        %v252 = vld [vmem:[%s194] sm:$0xf]
        %v253 = vld [vmem:[%s194 + $0x4] sm:$0xf]
        %v254 = vld [vmem:[%s194 + $0x8] sm:$0xf]
        %v255 = vld [vmem:[%s194 + $0xc] sm:$0xf]
        %v256 = vld [vmem:[%s194 + $0x10] sm:$0xf]
        %v257 = vld [vmem:[%s194 + $0x14] sm:$0xf]
        %v258 = vld [vmem:[%s194 + $0x18] sm:$0xf]
        %v259 = vld [vmem:[%s194 + $0x1c] sm:$0xf]
        %v260 = vld [vmem:[%s194 + $0x20] sm:$0xf]
        %v261 = vld [vmem:[%s194 + $0x24] sm:$0xf]
        %v262 = vld [vmem:[%s194 + $0x28] sm:$0xf]
        %v263 = vld [vmem:[%s194 + $0x2c] sm:$0xf]
        %v264 = vld [vmem:[%s194 + $0x30] sm:$0xf]
        %v265 = vld [vmem:[%s194 + $0x34] sm:$0xf]
        %v266 = vld [vmem:[%s194 + $0x38] sm:$0xf]
        %v267 = vld [vmem:[%s194 + $0x3c] sm:$0xf]
        %v268 = vld [vmem:[%s233] sm:$0x1]
        %v270 = vlaneseq
        %v271 = vshrl.u32 %v270, 7
        %v272 = vsub.s32 0, %v271
        %v273 = vrot.slane %v268, %v272
        %v291 = vunpack.c.l.b16 %v252
        %v292 = vunpack.c.l.b16 %v253
        %v293 = vunpack.c.l.b16 %v254
        %v294 = vunpack.c.l.b16 %v255
        %v295 = vunpack.c.l.b16 %v256
        %v296 = vunpack.c.l.b16 %v257
        %v297 = vunpack.c.l.b16 %v258
        %v298 = vunpack.c.l.b16 %v259
        %v299 = vunpack.c.l.b16 %v260
        %v300 = vunpack.c.l.b16 %v261
        %v301 = vunpack.c.l.b16 %v262
        %v302 = vunpack.c.l.b16 %v263
        %v303 = vunpack.c.l.b16 %v264
        %v304 = vunpack.c.l.b16 %v265
        %v305 = vunpack.c.l.b16 %v266
        %v306 = vunpack.c.l.b16 %v267
        %v307 = vpack.c.b16 %v292, %v291
        %v308 = vpack.c.b16 %v294, %v293
        %v309 = vpack.c.b16 %v296, %v295
        %v310 = vpack.c.b16 %v298, %v297
        %v311 = vpack.c.b16 %v300, %v299
        %v312 = vpack.c.b16 %v302, %v301
        %v313 = vpack.c.b16 %v304, %v303
        %v314 = vpack.c.b16 %v306, %v305
        %323 = vmatprep.subr.bf16.mxu0 0
        %324 = vmatpush1.bf16.msra.mxu0 %v307
        %325 = vmatprep.subr.bf16.mxu0 0
        %326 = vmatpush1.bf16.msra.mxu0 %v308
        %327 = vmatprep.subr.bf16.mxu0 0
        %328 = vmatpush1.bf16.msra.mxu0 %v309
        %329 = vmatprep.subr.bf16.mxu0 0
        %330 = vmatpush1.bf16.msra.mxu0 %v310
        %331 = vmatprep.subr.bf16.mxu0 0
        %332 = vmatpush1.bf16.msra.mxu0 %v311
        %333 = vmatprep.subr.bf16.mxu0 0
        %334 = vmatpush1.bf16.msra.mxu0 %v312
        %335 = vmatprep.subr.bf16.mxu0 0
        %336 = vmatpush1.bf16.msra.mxu0 %v313
        %337 = vmatprep.subr.bf16.mxu0 0
        %338 = vmatpush1.bf16.msra.mxu0 %v314
        %339 = vmatprep.subr.bf16.mxu0 0
        %340 = vmatpush1.bf16.msra.mxu0 0
        %341 = vmatprep.subr.bf16.mxu0 0
        %342 = vmatpush1.bf16.msra.mxu0 0
        %343 = vmatprep.subr.bf16.mxu0 0
        %344 = vmatpush1.bf16.msra.mxu0 0
        %345 = vmatprep.subr.bf16.mxu0 0
        %346 = vmatpush1.bf16.msra.mxu0 0
        %347 = vmatprep.subr.bf16.mxu0 0
        %348 = vmatpush1.bf16.msra.mxu0 0
        %349 = vmatprep.subr.bf16.mxu0 0
        %350 = vmatpush1.bf16.msra.mxu0 0
        %351 = vmatprep.subr.bf16.mxu0 0
        %352 = vmatpush1.bf16.msra.mxu0 0
        %353 = vmatprep.subr.bf16.mxu0 0
        %354 = vmatpush1.bf16.msra.mxu0 0
        %355 = vmatprep.mubr.bf16.mxu0 0
        %356 = vmatmul.mubr.bf16.gmra.mrb[0].mxu0 %v251
        %v357 = vpop.f32.mrb[0].mxu0
        %v358 = vadd.f32 %v273, %v357
        %v359 = vpop.f32.mrb[0].mxu0
        %v360 = vpop.f32.mrb[0].mxu0
        %v361 = vpop.f32.mrb[0].mxu0
        %362 = vdwg.mxu0
        %363 = vst [vmem:[%s241] sm:$0x3] %v358
        %p364 = scmp.lt.s32.totalorder %s21, 1
        %s365 = scalar_select %p364, %s21, 1
        %p366 = scmp.lt.s32.totalorder %s22, 5
        %s367 = scalar_select %p366, %s22, 5
        %s368 = smul.addr %s365, 6
        %s369 = sadd.s32 %s367, %s368
        %s370 = smul.addr %s369, 2
        %s371 = scalar_lea.vmem %s3, %s370
        // Predicated region
        $region37: #{joint_block_forward.5} parent=31 // pred_check
          %p372 = pneg %p126
        $region38: #{joint_block_forward.5} parent=31 // pred_check_branch
          %374 = sbr.rel (%p372) target = $region40
        $region39: #{joint_block_forward.5} parent=31 // pred_region
          _
        $region40: #{joint_block_forward.5} parent=31 // pred_fallthru
          _
      $region32: #{joint_block_forward.5} parent=5 // pred_fallthru
        _
      %p375 = scmp.le.s32.totalorder 2, %s12
      // Predicated region
      $region41: #{joint_block_forward.5} parent=5 // pred_check
        %p376 = pneg %p375
      $region42: #{joint_block_forward.5} parent=5 // pred_check_branch
        %378 = sbr.rel (%p376) target = $region44
      $region43: #{joint_block_forward.5} parent=5 // pred_region
        %s379 = ssub.s32 %s12, 2
        // Predicated region
        $region45: #{joint_block_forward.5} parent=43 // pred_check
          %p380 = pneg %p132
        $region46: #{joint_block_forward.5} parent=43 // pred_check_branch
          %382 = sbr.rel (%p380) target = $region48
        $region47: #{joint_block_forward.5} parent=43 // pred_region
          %p383 = scmp.lt.s32.totalorder %s23, 1
          %s384 = scalar_select %p383, %s23, 1
          %p385 = scmp.lt.s32.totalorder %s24, 5
          %s386 = scalar_select %p385, %s24, 5
          %s387 = smul.addr %s384, 6
          %s388 = sadd.s32 %s386, %s387
          %s389 = smul.addr %s388, 2
          %s390 = scalar_lea.vmem %s3, %s389
        $region48: #{joint_block_forward.5} parent=43 // pred_fallthru
          _
      $region44: #{joint_block_forward.5} parent=5 // pred_fallthru
        _
    $region6: #{joint_block_forward.5} parent=1 // loop_footer
      %s16 = sadd.s32 1, %s12
    $region7: #{joint_block_forward.5} parent=1 // loop_footer_branch
      %11 = sbr.rel target = $region3
    $region8: #{joint_block_forward.5} parent=1 // loop_exit
      _
    %391 = vsyncpa [#allocation3], 1
    %s392 = scalar_lea.sflag [#allocation3], 1
    %393 = vsyncpa %s392, 1

// kernel: joint_block_forward.6
$region0: #{joint_block_forward.6}
  #allocation0 [shape = 'u32[]', space=smem, size = 0x4, offset = 0x4, fixed_abs, tag = 'smem constant byte address 0x4 - core index']
  #allocation1 [shape = 'u32[144,128]{1,0:T(1,128)}', space=vmem, size = 0x12000, scoped, tag = 'internal scratch']
  #allocation2 [shape = 's32[1]{0}', space=sflag, size = 0x4, scoped, tag = 'scoped memory for joint_block_forward.6']
  #allocation3 [shape = 'u8[512]{0}', space=smem, size = 0x200, scoped, tag = 'prefetched SMEM operand 0']
  %s0 = inlined_call_operand.vmem [shape: s32[4], index: 0, kind: input, shape index: {}]
  %s1 = inlined_call_operand.vmem [shape: bf16[2,64,128], index: 1, kind: input, shape index: {}]
  %s2 = inlined_call_operand.vmem [shape: f32[2,2,6,128], index: 2, kind: input, shape index: {}]
  %s3 = inlined_call_operand.vmem [shape: bf16[2,128,384], index: 3, kind: input, shape index: {}]
  %s4 = inlined_call_operand.vmem [shape: bf16[2,64,384], index: 4, kind: output, shape index: {}]
  %s5 = sld [smem:[#allocation0]]
  $region45: #{joint_block_forward.6} parent=0
    _
  %s7 = ssub.s32 1, %s5
  %s8 = scalar_select 0, %s7, %s5
  %s9 = sshll.u32 %s0, 4
  %s10 = int_to_ptr.vmem [resolvable:$true] %s9
  %12 = dma.vmem_to_smem %s10, 16, [#allocation3], [#allocation2]
  %13 = dma.done [#allocation2], 16
  %14 = sfence
  loop: start=0, step=1, limit=10
  $region2: #{joint_block_forward.6} parent=0 // loop_pre_header
    _
  $region3: #{joint_block_forward.6} parent=0 // loop_header
    %s16 = sphi 0, %s20
    %p17 = scmp.ge.s32.totalorder %s16, 10
    %s23 = sphi 0, %s35
    %s24 = sphi 0, %s31
    %s25 = sphi 0, %s23
    %s26 = sphi 0, %s24
    %s27 = sphi 0, %s25
    %s28 = sphi 0, %s26
    %s40 = sphi 0, %s42
    %s43 = sphi 0, %s40
    %s44 = sphi 0, %s43
    %s60 = sphi 0, %s44
    %s70 = sphi 0, %s72
    %s73 = sphi 0, %s70
    %s74 = sphi 0, %s73
    %s90 = sphi 0, %s74
    %s98 = sphi 0, %s100
    %s101 = sphi 0, %s98
    %s102 = sphi 0, %s101
    %s118 = sphi 0, %s102
    %s126 = sphi 0, %s128
    %s129 = sphi 0, %s126
    %s130 = sphi 0, %s129
    %s146 = sphi 0, %s130
  $region4: #{joint_block_forward.6} parent=0 // loop_header_branch
    %19 = sbr.rel (%p17) target = $region8
  $region5: #{joint_block_forward.6} parent=0 // loop_body
    %s21 = ssub.s32 %s16, 1
    %s22 = ssub.s32 %s16, 2
    %s29 = sadd.s32 1, %s24
    %p30 = scmp.ge.s32.totalorder %s29, 2
    %s31 = scalar_select %p30, 0, %s29
    %s32 = sadd.s32 1, %s23
    %s33 = scalar_select %p30, %s32, %s23
    %p34 = scmp.ge.s32.totalorder %s33, 4
    %s35 = scalar_select %p34, 0, %s33
    %s36 = ssub.s32 %s24, %s31
    %s37 = ssub.s32 %s23, %s35
    %s38 = sor.u32 %s36, %s37
    %p39 = scmp.eq.s32.totalorder %s38, 0
    %s41 = sadd.s32 %s40, 1
    %s42 = scalar_select %p39, %s40, %s41
    %p45 = pneg %p39
    %p46 = scmp.eq.s32.totalorder %s16, 7
    %p47 = por %p45, %p46
    %p48 = scmp.ne.s32.totalorder %s40, %s43
    %p49 = scmp.eq.s32.totalorder %s16, 0
    %p50 = por %p48, %p49
    %p51 = scmp.ne.s32.totalorder %s40, %s43
    %p52 = scmp.eq.s32.totalorder %s21, 7
    %p53 = por %p51, %p52
    %p54 = scmp.ne.s32.totalorder %s43, %s44
    %p55 = scmp.eq.s32.totalorder %s21, 0
    %p56 = por %p54, %p55
    %p57 = scmp.ne.s32.totalorder %s43, %s44
    %p58 = scmp.eq.s32.totalorder %s22, 7
    %p59 = por %p57, %p58
    %p61 = scmp.ne.s32.totalorder %s44, %s60
    %p62 = scmp.eq.s32.totalorder %s22, 0
    %p63 = por %p61, %p62
    %s64 = sld [smem:[#allocation3 + %s23]]
    %s65 = sld [smem:[#allocation3 + %s35]]
    %s66 = ssub.s32 %s64, %s65
    %s67 = ssub.s32 %s24, %s31
    %s68 = sor.u32 %s66, %s67
    %p69 = scmp.eq.s32.totalorder %s68, 0
    %s71 = sadd.s32 %s70, 1
    %s72 = scalar_select %p69, %s70, %s71
    %p75 = pneg %p69
    %p76 = scmp.eq.s32.totalorder %s16, 7
    %p77 = por %p75, %p76
    %p78 = scmp.ne.s32.totalorder %s70, %s73
    %p79 = scmp.eq.s32.totalorder %s16, 0
    %p80 = por %p78, %p79
    %p81 = scmp.ne.s32.totalorder %s70, %s73
    %p82 = scmp.eq.s32.totalorder %s21, 7
    %p83 = por %p81, %p82
    %p84 = scmp.ne.s32.totalorder %s73, %s74
    %p85 = scmp.eq.s32.totalorder %s21, 0
    %p86 = por %p84, %p85
    %p87 = scmp.ne.s32.totalorder %s73, %s74
    %p88 = scmp.eq.s32.totalorder %s22, 7
    %p89 = por %p87, %p88
    %p91 = scmp.ne.s32.totalorder %s74, %s90
    %p92 = scmp.eq.s32.totalorder %s22, 0
    %p93 = por %p91, %p92
    %s94 = sld [smem:[#allocation3 + %s23]]
    %s95 = sld [smem:[#allocation3 + %s35]]
    %s96 = ssub.s32 %s94, %s95
    %p97 = scmp.eq.s32.totalorder %s96, 0
    %s99 = sadd.s32 %s98, 1
    %s100 = scalar_select %p97, %s98, %s99
    %p103 = pneg %p97
    %p104 = scmp.eq.s32.totalorder %s16, 7
    %p105 = por %p103, %p104
    %p106 = scmp.ne.s32.totalorder %s98, %s101
    %p107 = scmp.eq.s32.totalorder %s16, 0
    %p108 = por %p106, %p107
    %p109 = scmp.ne.s32.totalorder %s98, %s101
    %p110 = scmp.eq.s32.totalorder %s21, 7
    %p111 = por %p109, %p110
    %p112 = scmp.ne.s32.totalorder %s101, %s102
    %p113 = scmp.eq.s32.totalorder %s21, 0
    %p114 = por %p112, %p113
    %p115 = scmp.ne.s32.totalorder %s101, %s102
    %p116 = scmp.eq.s32.totalorder %s22, 7
    %p117 = por %p115, %p116
    %p119 = scmp.ne.s32.totalorder %s102, %s118
    %p120 = scmp.eq.s32.totalorder %s22, 0
    %p121 = por %p119, %p120
    %s122 = ssub.s32 %s24, %s31
    %s123 = ssub.s32 %s23, %s35
    %s124 = sor.u32 %s122, %s123
    %p125 = scmp.eq.s32.totalorder %s124, 0
    %s127 = sadd.s32 %s126, 1
    %s128 = scalar_select %p125, %s126, %s127
    %p131 = pneg %p125
    %p132 = scmp.eq.s32.totalorder %s16, 7
    %p133 = por %p131, %p132
    %p134 = scmp.ne.s32.totalorder %s126, %s129
    %p135 = scmp.eq.s32.totalorder %s16, 0
    %p136 = por %p134, %p135
    %p137 = scmp.ne.s32.totalorder %s126, %s129
    %p138 = scmp.eq.s32.totalorder %s21, 7
    %p139 = por %p137, %p138
    %p140 = scmp.ne.s32.totalorder %s129, %s130
    %p141 = scmp.eq.s32.totalorder %s21, 0
    %p142 = por %p140, %p141
    %p143 = scmp.ne.s32.totalorder %s129, %s130
    %p144 = scmp.eq.s32.totalorder %s22, 7
    %p145 = por %p143, %p144
    %p147 = scmp.ne.s32.totalorder %s130, %s146
    %p148 = scmp.eq.s32.totalorder %s22, 0
    %p149 = por %p147, %p148
    %p150 = scmp.le.s32.totalorder 1, %s16
    %p151 = scmp.lt.s32.totalorder %s16, 9
    %p152 = pnand %p150, %p151
    %p153 = pneg %p152
    // Predicated region
    $region9: #{joint_block_forward.6} parent=5 // pred_check
      _
    $region10: #{joint_block_forward.6} parent=5 // pred_check_branch
      %155 = sbr.rel (%p152) target = $region12
    $region11: #{joint_block_forward.6} parent=5 // pred_region
      %s156 = ssub.s32 %s16, 1
    $region12: #{joint_block_forward.6} parent=5 // pred_fallthru
      _
    %p157 = scmp.lt.s32.totalorder %s16, 8
    // Predicated region
    $region13: #{joint_block_forward.6} parent=5 // pred_check
      %p158 = pneg %p157
    $region14: #{joint_block_forward.6} parent=5 // pred_check_branch
      %160 = sbr.rel (%p158) target = $region16
    $region15: #{joint_block_forward.6} parent=5 // pred_region
      // Predicated region
      $region17: #{joint_block_forward.6} parent=15 // pred_check
        %p161 = pneg %p50
      $region18: #{joint_block_forward.6} parent=15 // pred_check_branch
        %163 = sbr.rel (%p161) target = $region20
      $region19: #{joint_block_forward.6} parent=15 // pred_region
        %s164 = smul.u32 2, %s23
        %p165 = scmp.lt.s32.totalorder %s24, 1
        %s166 = scalar_select %p165, %s24, 1
        %p167 = scmp.lt.s32.totalorder %s164, 7
        %s168 = scalar_select %p167, %s164, 7
        %s169 = smul.addr %s166, 8
        %s170 = sadd.s32 %s168, %s169
        %s171 = smul.addr %s170, 4
        %s172 = scalar_lea.vmem %s1, %s171
        %s173 = smul.u32 2, %s23
      $region20: #{joint_block_forward.6} parent=15 // pred_fallthru
        _
      // Predicated region
      $region21: #{joint_block_forward.6} parent=15 // pred_check
        %p174 = pneg %p80
      $region22: #{joint_block_forward.6} parent=15 // pred_check_branch
        %176 = sbr.rel (%p174) target = $region24
      $region23: #{joint_block_forward.6} parent=15 // pred_region
        %s177 = sld [smem:[#allocation3 + %s23]]
        %p178 = scmp.lt.s32.totalorder %s177, 1
        %s179 = scalar_select %p178, %s177, 1
        %p180 = scmp.lt.s32.totalorder %s24, 1
        %s181 = scalar_select %p180, %s24, 1
        %s182 = smul.addr %s179, 2
        %s183 = sadd.s32 %s181, %s182
        %s184 = smul.addr %s183, 8
        %s185 = scalar_lea.vmem %s2, %s184
        %s186 = sld [smem:[#allocation3 + %s23]]
      $region24: #{joint_block_forward.6} parent=15 // pred_fallthru
        _
      // Predicated region
      $region25: #{joint_block_forward.6} parent=15 // pred_check
        %p187 = pneg %p108
      $region26: #{joint_block_forward.6} parent=15 // pred_check_branch
        %189 = sbr.rel (%p187) target = $region28
      $region27: #{joint_block_forward.6} parent=15 // pred_region
        %s190 = sld [smem:[#allocation3 + %s23]]
        %p191 = scmp.lt.s32.totalorder %s190, 1
        %s192 = scalar_select %p191, %s190, 1
        %s193 = smul.addr %s192, 48
        %s194 = smul.addr %s193, 4
        %s195 = scalar_lea.vmem %s3, %s194
        %s196 = sld [smem:[#allocation3 + %s23]]
      $region28: #{joint_block_forward.6} parent=15 // pred_fallthru
        _
    $region16: #{joint_block_forward.6} parent=5 // pred_fallthru
      _
    %p197 = scmp.le.s32.totalorder 1, %s16
    %p198 = scmp.lt.s32.totalorder %s16, 9
    %p199 = pnand %p197, %p198
    %p200 = pneg %p199
    // Predicated region
    $region29: #{joint_block_forward.6} parent=5 // pred_check
      _
    $region30: #{joint_block_forward.6} parent=5 // pred_check_branch
      %202 = sbr.rel (%p199) target = $region32
    $region31: #{joint_block_forward.6} parent=5 // pred_region
      %s203 = ssub.s32 %s16, 1
      %s204 = smul.u32 2, %s25
      %p205 = scmp.lt.s32.totalorder %s26, 1
      %s206 = scalar_select %p205, %s26, 1
      %p207 = scmp.lt.s32.totalorder %s204, 7
      %s208 = scalar_select %p207, %s204, 7
      %s209 = smul.addr %s206, 8
      %s210 = sadd.s32 %s208, %s209
      %s211 = smul.addr %s210, 4
      %s212 = scalar_lea.vmem %s1, %s211
      %p213 = pneg %p56
      %p214 = pneg %p53
      %s215 = sld [smem:[#allocation3 + %s25]]
      %p216 = scmp.lt.s32.totalorder %s215, 1
      %s217 = scalar_select %p216, %s215, 1
      %p218 = scmp.lt.s32.totalorder %s26, 1
      %s219 = scalar_select %p218, %s26, 1
      %s220 = smul.addr %s217, 2
      %s221 = sadd.s32 %s219, %s220
      %s222 = smul.addr %s221, 8
      %s223 = scalar_lea.vmem %s2, %s222
      %p224 = pneg %p86
      %p225 = pneg %p83
      %s226 = sld [smem:[#allocation3 + %s25]]
      %p227 = scmp.lt.s32.totalorder %s226, 1
      %s228 = scalar_select %p227, %s226, 1
      %s229 = smul.addr %s228, 48
      %s230 = smul.addr %s229, 4
      %s231 = scalar_lea.vmem %s3, %s230
      %p232 = pneg %p114
      %p233 = pneg %p111
      %p234 = pneg %p142
      %p235 = pneg %p139
      %s236 = smul.u32 2, %s25
      %p237 = scmp.lt.s32.totalorder %s26, 1
      %s238 = scalar_select %p237, %s26, 1
      %p239 = scmp.lt.s32.totalorder %s236, 7
      %s240 = scalar_select %p239, %s236, 7
      %s241 = smul.addr %s240, 3
      %s242 = smul.addr %s238, 24
      %s243 = sadd.s32 %s241, %s242
      %s244 = smul.addr %s243, 4
      %s245 = scalar_lea.vmem %s4, %s244
      %s246 = smul.u32 2, %s25
      %p247 = scmp.lt.s32.totalorder %s26, 1
      %s248 = scalar_select %p247, %s26, 1
      %p249 = scmp.lt.s32.totalorder %s246, 7
      %s250 = scalar_select %p249, %s246, 7
      %s251 = smul.addr %s248, 8
      %s252 = sadd.s32 %s250, %s251
      %s253 = smul.addr %s252, 4
      %s254 = scalar_lea.vmem %s1, %s253
      %s255 = smul.u32 2, %s25
      %s256 = sld [smem:[#allocation3 + %s25]]
      %p257 = scmp.lt.s32.totalorder %s256, 1
      %s258 = scalar_select %p257, %s256, 1
      %p259 = scmp.lt.s32.totalorder %s26, 1
      %s260 = scalar_select %p259, %s26, 1
      %s261 = smul.addr %s258, 2
      %s262 = sadd.s32 %s260, %s261
      %s263 = smul.addr %s262, 8
      %s264 = scalar_lea.vmem %s2, %s263
      %s265 = sld [smem:[#allocation3 + %s25]]
      %s266 = sld [smem:[#allocation3 + %s25]]
      %p267 = scmp.lt.s32.totalorder %s266, 1
      %s268 = scalar_select %p267, %s266, 1
      %s269 = smul.addr %s268, 48
      %s270 = smul.addr %s269, 4
      %s271 = scalar_lea.vmem %s3, %s270
      %s272 = sld [smem:[#allocation3 + %s25]]
      %s273 = smul.u32 2, %s25
      %p274 = scmp.lt.s32.totalorder %s26, 1
      %s275 = scalar_select %p274, %s26, 1
      %p276 = scmp.lt.s32.totalorder %s273, 7
      %s277 = scalar_select %p276, %s273, 7
      %s278 = smul.addr %s277, 3
      %s279 = smul.addr %s275, 24
      %s280 = sadd.s32 %s278, %s279
      %s281 = smul.addr %s280, 4
      %s282 = scalar_lea.vmem %s4, %s281
      %s283 = smul.u32 2, %s25
      %v285 = vld [vmem:[%s254] sm:$0xf]
      %v286 = vld [vmem:[%s254 + $0x4] sm:$0xf]
      %v287 = vunpack.c.l.bf16 %v285
      %v288 = vunpack.c.l.bf16 %v286
      %v289 = vld [vmem:[%s264] sm:$0x3f]
      %v290 = vmul.f32 %v287, %v287
      %v291 = vmul.f32 %v288, %v288
      %292 = vadd.xlane.f32.xlu0 %v290
      %v293 = vpop.xlane.xlu0 %292
      %294 = vadd.xlane.f32.xlu0 %v291
      %v295 = vpop.xlane.xlu0 %294
      %v296 = vrcp.pop 128.0
      %v297 = vmul.f32 %v293, %v296
      %v298 = vmul.f32 %v295, %v296
      %v299 = vadd.f32 %v297, 1e-06
      %v300 = vadd.f32 %v298, 1e-06
      %v301 = vrsqrt.pop %v299
      %v302 = vrsqrt.pop %v300
      %v303 = vmul.f32 %v287, %v301
      %v304 = vmul.f32 %v288, %v302
      %v305 = vadd.f32 %v289, 1.0
      %v306 = vlaneseq
      %v307 = vshrl.u32 %v306, 7
      %v308 = vsub.s32 1, %v307
      %v309 = vrot.slane %v305, %v308
      %v310 = vmul.f32 %v303, %v309
      %v311 = vmul.f32 %v304, %v309
      %v312 = vlaneseq
      %v313 = vshrl.u32 %v312, 7
      %v314 = vsub.s32 0, %v313
      %v315 = vrot.slane %v289, %v314
      %v316 = vadd.f32 %v310, %v315
      %v317 = vadd.f32 %v311, %v315
      %v318 = vpack.c.bf16 %v317, %v316
      %v319 = vld [vmem:[%s271] sm:$0xff]
      %v320 = vld [vmem:[%s271 + $0x8] sm:$0xf]
      %v321 = vld [vmem:[%s271 + $0xc] sm:$0xff]
      %v322 = vld [vmem:[%s271 + $0x14] sm:$0xf]
      %v323 = vld [vmem:[%s271 + $0x18] sm:$0xff]
      %v324 = vld [vmem:[%s271 + $0x20] sm:$0xf]
      %v325 = vld [vmem:[%s271 + $0x24] sm:$0xff]
      %v326 = vld [vmem:[%s271 + $0x2c] sm:$0xf]
      %v327 = vld [vmem:[%s271 + $0x30] sm:$0xff]
      %v328 = vld [vmem:[%s271 + $0x38] sm:$0xf]
      %v329 = vld [vmem:[%s271 + $0x3c] sm:$0xff]
      %v330 = vld [vmem:[%s271 + $0x44] sm:$0xf]
      %v331 = vld [vmem:[%s271 + $0x48] sm:$0xff]
      %v332 = vld [vmem:[%s271 + $0x50] sm:$0xf]
      %v333 = vld [vmem:[%s271 + $0x54] sm:$0xff]
      %v334 = vld [vmem:[%s271 + $0x5c] sm:$0xf]
      %v335 = vld [vmem:[%s271 + $0x60] sm:$0xff]
      %v336 = vld [vmem:[%s271 + $0x68] sm:$0xf]
      %v337 = vld [vmem:[%s271 + $0x6c] sm:$0xff]
      %v338 = vld [vmem:[%s271 + $0x74] sm:$0xf]
      %v339 = vld [vmem:[%s271 + $0x78] sm:$0xff]
      %v340 = vld [vmem:[%s271 + $0x80] sm:$0xf]
      %v341 = vld [vmem:[%s271 + $0x84] sm:$0xff]
      %v342 = vld [vmem:[%s271 + $0x8c] sm:$0xf]
      %v343 = vld [vmem:[%s271 + $0x90] sm:$0xff]
      %v344 = vld [vmem:[%s271 + $0x98] sm:$0xf]
      %v345 = vld [vmem:[%s271 + $0x9c] sm:$0xff]
      %v346 = vld [vmem:[%s271 + $0xa4] sm:$0xf]
      %v347 = vld [vmem:[%s271 + $0xa8] sm:$0xff]
      %v348 = vld [vmem:[%s271 + $0xb0] sm:$0xf]
      %v349 = vld [vmem:[%s271 + $0xb4] sm:$0xff]
      %v350 = vld [vmem:[%s271 + $0xbc] sm:$0xf]
      %v383 = vunpack.c.l.b16 %v319
      %v384 = vunpack.c.h.b16 %v319
      %v385 = vunpack.c.l.b16 %v320
      %v386 = vunpack.c.l.b16 %v321
      %v387 = vunpack.c.h.b16 %v321
      %v388 = vunpack.c.l.b16 %v322
      %v389 = vunpack.c.l.b16 %v323
      %v390 = vunpack.c.h.b16 %v323
      %v391 = vunpack.c.l.b16 %v324
      %v392 = vunpack.c.l.b16 %v325
      %v393 = vunpack.c.h.b16 %v325
      %v394 = vunpack.c.l.b16 %v326
      %v395 = vunpack.c.l.b16 %v327
      %v396 = vunpack.c.h.b16 %v327
      %v397 = vunpack.c.l.b16 %v328
      %v398 = vunpack.c.l.b16 %v329
      %v399 = vunpack.c.h.b16 %v329
      %v400 = vunpack.c.l.b16 %v330
      %v401 = vunpack.c.l.b16 %v331
      %v402 = vunpack.c.h.b16 %v331
      %v403 = vunpack.c.l.b16 %v332
      %v404 = vunpack.c.l.b16 %v333
      %v405 = vunpack.c.h.b16 %v333
      %v406 = vunpack.c.l.b16 %v334
      %v407 = vunpack.c.l.b16 %v335
      %v408 = vunpack.c.h.b16 %v335
      %v409 = vunpack.c.l.b16 %v336
      %v410 = vunpack.c.l.b16 %v337
      %v411 = vunpack.c.h.b16 %v337
      %v412 = vunpack.c.l.b16 %v338
      %v413 = vunpack.c.l.b16 %v339
      %v414 = vunpack.c.h.b16 %v339
      %v415 = vunpack.c.l.b16 %v340
      %v416 = vunpack.c.l.b16 %v341
      %v417 = vunpack.c.h.b16 %v341
      %v418 = vunpack.c.l.b16 %v342
      %v419 = vunpack.c.l.b16 %v343
      %v420 = vunpack.c.h.b16 %v343
      %v421 = vunpack.c.l.b16 %v344
      %v422 = vunpack.c.l.b16 %v345
      %v423 = vunpack.c.h.b16 %v345
      %v424 = vunpack.c.l.b16 %v346
      %v425 = vunpack.c.l.b16 %v347
      %v426 = vunpack.c.h.b16 %v347
      %v427 = vunpack.c.l.b16 %v348
      %v428 = vunpack.c.l.b16 %v349
      %v429 = vunpack.c.h.b16 %v349
      %v430 = vunpack.c.l.b16 %v350
      %v431 = vpack.c.b16 %v386, %v383
      %v432 = vpack.c.b16 %v387, %v384
      %v433 = vpack.c.b16 %v388, %v385
      %v434 = vpack.c.b16 %v392, %v389
      %v435 = vpack.c.b16 %v393, %v390
      %v436 = vpack.c.b16 %v394, %v391
      %v437 = vpack.c.b16 %v398, %v395
      %v438 = vpack.c.b16 %v399, %v396
      %v439 = vpack.c.b16 %v400, %v397
      %v440 = vpack.c.b16 %v404, %v401
      %v441 = vpack.c.b16 %v405, %v402
      %v442 = vpack.c.b16 %v406, %v403
      %v443 = vpack.c.b16 %v410, %v407
      %v444 = vpack.c.b16 %v411, %v408
      %v445 = vpack.c.b16 %v412, %v409
      %v446 = vpack.c.b16 %v416, %v413
      %v447 = vpack.c.b16 %v417, %v414
      %v448 = vpack.c.b16 %v418, %v415
      %v449 = vpack.c.b16 %v422, %v419
      %v450 = vpack.c.b16 %v423, %v420
      %v451 = vpack.c.b16 %v424, %v421
      %v452 = vpack.c.b16 %v428, %v425
      %v453 = vpack.c.b16 %v429, %v426
      %v454 = vpack.c.b16 %v430, %v427
      %479 = vmatprep.subr.bf16.mxu0 %v432
      %480 = vmatpush1.bf16.msra.mxu0 %v431
      %481 = vmatprep.subr.bf16.mxu0 %v435
      %482 = vmatpush1.bf16.msra.mxu0 %v434
      %483 = vmatprep.subr.bf16.mxu0 %v438
      %484 = vmatpush1.bf16.msra.mxu0 %v437
      %485 = vmatprep.subr.bf16.mxu0 %v441
      %486 = vmatpush1.bf16.msra.mxu0 %v440
      %487 = vmatprep.subr.bf16.mxu0 %v444
      %488 = vmatpush1.bf16.msra.mxu0 %v443
      %489 = vmatprep.subr.bf16.mxu0 %v447
      %490 = vmatpush1.bf16.msra.mxu0 %v446
      %491 = vmatprep.subr.bf16.mxu0 %v450
      %492 = vmatpush1.bf16.msra.mxu0 %v449
      %493 = vmatprep.subr.bf16.mxu0 %v453
      %494 = vmatpush1.bf16.msra.mxu0 %v452
      %495 = vmatprep.subr.bf16.mxu0 0
      %496 = vmatpush1.bf16.msra.mxu0 0
      %497 = vmatprep.subr.bf16.mxu0 0
      %498 = vmatpush1.bf16.msra.mxu0 0
      %499 = vmatprep.subr.bf16.mxu0 0
      %500 = vmatpush1.bf16.msra.mxu0 0
      %501 = vmatprep.subr.bf16.mxu0 0
      %502 = vmatpush1.bf16.msra.mxu0 0
      %503 = vmatprep.subr.bf16.mxu0 0
      %504 = vmatpush1.bf16.msra.mxu0 0
      %505 = vmatprep.subr.bf16.mxu0 0
      %506 = vmatpush1.bf16.msra.mxu0 0
      %507 = vmatprep.subr.bf16.mxu0 0
      %508 = vmatpush1.bf16.msra.mxu0 0
      %509 = vmatprep.subr.bf16.mxu0 0
      %510 = vmatpush1.bf16.msra.mxu0 0
      %511 = vmatprep.mubr.bf16.mxu0 0
      %512 = vmatmul.mubr.bf16.gmra.mrb[0].mxu0 %v318
      %v513 = vpop.f32.mrb[0].mxu0
      %v514 = vadd.f32 0.0, %v513
      %v515 = vpop.f32.mrb[0].mxu0
      %v516 = vadd.f32 0.0, %v515
      %v517 = vpop.f32.mrb[0].mxu0
      %v518 = vadd.f32 0.0, %v517
      %v519 = vpop.f32.mrb[0].mxu0
      %v520 = vadd.f32 0.0, %v519
      %521 = vdwg.mxu0
      %522 = vmatprep.subr.bf16.mxu0 0
      %523 = vmatpush1.bf16.msra.mxu0 %v433
      %524 = vmatprep.subr.bf16.mxu0 0
      %525 = vmatpush1.bf16.msra.mxu0 %v436
      %526 = vmatprep.subr.bf16.mxu0 0
      %527 = vmatpush1.bf16.msra.mxu0 %v439
      %528 = vmatprep.subr.bf16.mxu0 0
      %529 = vmatpush1.bf16.msra.mxu0 %v442
      %530 = vmatprep.subr.bf16.mxu0 0
      %531 = vmatpush1.bf16.msra.mxu0 %v445
      %532 = vmatprep.subr.bf16.mxu0 0
      %533 = vmatpush1.bf16.msra.mxu0 %v448
      %534 = vmatprep.subr.bf16.mxu0 0
      %535 = vmatpush1.bf16.msra.mxu0 %v451
      %536 = vmatprep.subr.bf16.mxu0 0
      %537 = vmatpush1.bf16.msra.mxu0 %v454
      %538 = vmatprep.subr.bf16.mxu0 0
      %539 = vmatpush1.bf16.msra.mxu0 0
      %540 = vmatprep.subr.bf16.mxu0 0
      %541 = vmatpush1.bf16.msra.mxu0 0
      %542 = vmatprep.subr.bf16.mxu0 0
      %543 = vmatpush1.bf16.msra.mxu0 0
      %544 = vmatprep.subr.bf16.mxu0 0
      %545 = vmatpush1.bf16.msra.mxu0 0
      %546 = vmatprep.subr.bf16.mxu0 0
      %547 = vmatpush1.bf16.msra.mxu0 0
      %548 = vmatprep.subr.bf16.mxu0 0
      %549 = vmatpush1.bf16.msra.mxu0 0
      %550 = vmatprep.subr.bf16.mxu0 0
      %551 = vmatpush1.bf16.msra.mxu0 0
      %552 = vmatprep.subr.bf16.mxu0 0
      %553 = vmatpush1.bf16.msra.mxu0 0
      %554 = vmatprep.mubr.bf16.mxu0 0
      %555 = vmatmul.mubr.bf16.gmra.mrb[0].mxu0 %v318
      %v556 = vpop.f32.mrb[0].mxu0
      %v557 = vadd.f32 0.0, %v556
      %v558 = vpop.f32.mrb[0].mxu0
      %v559 = vpop.f32.mrb[0].mxu0
      %v560 = vadd.f32 0.0, %v559
      %v561 = vpop.f32.mrb[0].mxu0
      %562 = vdwg.mxu0
      %v563 = vpack.c.bf16 %v518, %v514
      %v564 = vpack.c.bf16 %v520, %v516
      %v565 = vpack.c.bf16 %v560, %v557
      %v569 = vunpack.c.l.b16 %v563
      %v570 = vunpack.c.l.b16 %v564
      %v571 = vunpack.c.l.b16 %v565
      %v572 = vunpack.c.h.b16 %v563
      %v573 = vunpack.c.h.b16 %v564
      %v574 = vunpack.c.h.b16 %v565
      %v575 = vpack.c.b16 %v570, %v569
      %v576 = vpack.c.b16 %v571, %v571
      %v577 = vpack.c.b16 %v573, %v572
      %v578 = vpack.c.b16 %v574, %v574
      %583 = vst [vmem:[%s282] sm:$0xff] %v575
      %584 = vst [vmem:[%s282 + $0x8] sm:$0xf] %v576
      %585 = vst [vmem:[%s282 + $0xc] sm:$0xff] %v577
      %586 = vst [vmem:[%s282 + $0x14] sm:$0xf] %v578
      %s587 = smul.u32 2, %s25
      %p588 = scmp.lt.s32.totalorder %s26, 1
      %s589 = scalar_select %p588, %s26, 1
      %p590 = scmp.lt.s32.totalorder %s587, 7
      %s591 = scalar_select %p590, %s587, 7
      %s592 = smul.addr %s591, 3
      %s593 = smul.addr %s589, 24
      %s594 = sadd.s32 %s592, %s593
      %s595 = smul.addr %s594, 4
      %s596 = scalar_lea.vmem %s4, %s595
      // Predicated region
      $region33: #{joint_block_forward.6} parent=31 // pred_check
        %p597 = pneg %p139
      $region34: #{joint_block_forward.6} parent=31 // pred_check_branch
        %599 = sbr.rel (%p597) target = $region36
      $region35: #{joint_block_forward.6} parent=31 // pred_region
        %s600 = smul.u32 2, %s25
      $region36: #{joint_block_forward.6} parent=31 // pred_fallthru
        _
    $region32: #{joint_block_forward.6} parent=5 // pred_fallthru
      _
    %p601 = scmp.le.s32.totalorder 2, %s16
    // Predicated region
    $region37: #{joint_block_forward.6} parent=5 // pred_check
      %p602 = pneg %p601
    $region38: #{joint_block_forward.6} parent=5 // pred_check_branch
      %604 = sbr.rel (%p602) target = $region40
    $region39: #{joint_block_forward.6} parent=5 // pred_region
      %s605 = ssub.s32 %s16, 2
      // Predicated region
      $region41: #{joint_block_forward.6} parent=39 // pred_check
        %p606 = pneg %p145
      $region42: #{joint_block_forward.6} parent=39 // pred_check_branch
        %608 = sbr.rel (%p606) target = $region44
      $region43: #{joint_block_forward.6} parent=39 // pred_region
        %s609 = smul.u32 2, %s27
        %p610 = scmp.lt.s32.totalorder %s28, 1
        %s611 = scalar_select %p610, %s28, 1
        %p612 = scmp.lt.s32.totalorder %s609, 7
        %s613 = scalar_select %p612, %s609, 7
        %s614 = smul.addr %s613, 3
        %s615 = smul.addr %s611, 24
        %s616 = sadd.s32 %s614, %s615
        %s617 = smul.addr %s616, 4
        %s618 = scalar_lea.vmem %s4, %s617
      $region44: #{joint_block_forward.6} parent=39 // pred_fallthru
        _
    $region40: #{joint_block_forward.6} parent=5 // pred_fallthru
      _
  $region6: #{joint_block_forward.6} parent=0 // loop_footer
    %s20 = sadd.s32 1, %s16
  $region7: #{joint_block_forward.6} parent=0 // loop_footer_branch
    %15 = sbr.rel target = $region3
  $region8: #{joint_block_forward.6} parent=0 // loop_exit
    _

// kernel: joint_block_forward.7
$region0: #{joint_block_forward.7}
  #allocation0 [shape = 'u32[]', space=smem, size = 0x4, offset = 0x4, fixed_abs, tag = 'smem constant byte address 0x4 - core index']
  #allocation1 [shape = 'u32[144,128]{1,0:T(1,128)}', space=vmem, size = 0x12000, scoped, tag = 'internal scratch']
  #allocation2 [shape = 'f32[2,16,1]{2,1,0:T(8,128)}', space=vmem, size = 0x4000, scoped, tag = 'scratch operand']
  #allocation3 [shape = 'f32[2,16,1]{2,1,0:T(8,128)}', space=vmem, size = 0x4000, scoped, tag = 'scratch operand']
  #allocation4 [shape = 'f32[2,16,64]{2,1,0:T(8,128)}', space=vmem, size = 0x4000, scoped, tag = 'scratch operand']
  %s0 = inlined_call_operand.vmem [shape: bf16[2,64,384], index: 0, kind: input, shape index: {}, may-alias: {0,1,2}]
  %s1 = inlined_call_operand.vmem [shape: bf16[2,64,384], index: 1, kind: input, shape index: {}, may-alias: {0,1,2}]
  %s2 = inlined_call_operand.vmem [shape: bf16[2,64,384], index: 2, kind: input, shape index: {}, may-alias: {0,1,2}]
  %s3 = inlined_call_operand.vmem [shape: bf16[2,64,128], index: 3, kind: output, shape index: {}]
  %s4 = sld [smem:[#allocation0]]
  $region176: #{joint_block_forward.7} parent=0
    _
  %s6 = ssub.s32 1, %s4
  %s7 = scalar_select 0, %s6, %s4
  $region1: #{joint_block_forward.7} parent=0
    #allocation5 [shape = 'u8[8192]{0}', space=vmem, size = 0x2000, scoped, tag = 'input window, operand 0']
    #allocation6 [shape = 'u8[16384]{0}', space=vmem, size = 0x4000, scoped, tag = 'input window, operand 1']
    #allocation7 [shape = 'u8[16384]{0}', space=vmem, size = 0x4000, scoped, tag = 'input window, operand 2']
    loop: start=0, step=1, limit=18
    $region2: #{joint_block_forward.7} parent=1 // loop_pre_header
      _
    $region3: #{joint_block_forward.7} parent=1 // loop_header
      %s9 = sphi 0, %s13
      %p10 = scmp.ge.s32.totalorder %s9, 18
      %s16 = sphi 0, %s42
      %s17 = sphi 0, %s38
      %s18 = sphi 0, %s34
      %s19 = sphi 0, %s30
      %s20 = sphi 0, %s16
      %s21 = sphi 0, %s17
      %s22 = sphi 0, %s18
      %s23 = sphi 0, %s19
      %s24 = sphi 0, %s20
      %s25 = sphi 0, %s21
      %s26 = sphi 0, %s22
      %s27 = sphi 0, %s23
      %s49 = sphi 0, %s51
      %s52 = sphi 0, %s49
      %s53 = sphi 0, %s52
      %s69 = sphi 0, %s53
      %s81 = sphi 0, %s83
      %s84 = sphi 0, %s81
      %s85 = sphi 0, %s84
      %s101 = sphi 0, %s85
      %s113 = sphi 0, %s115
      %s116 = sphi 0, %s113
      %s117 = sphi 0, %s116
      %s133 = sphi 0, %s117
      %s143 = sphi 0, %s145
      %s146 = sphi 0, %s143
      %s147 = sphi 0, %s146
      %s163 = sphi 0, %s147
    $region4: #{joint_block_forward.7} parent=1 // loop_header_branch
      %12 = sbr.rel (%p10) target = $region8
    $region5: #{joint_block_forward.7} parent=1 // loop_body
      %s14 = ssub.s32 %s9, 1
      %s15 = ssub.s32 %s9, 2
      %s28 = sadd.s32 1, %s19
      %p29 = scmp.ge.s32.totalorder %s28, 2
      %s30 = scalar_select %p29, 0, %s28
      %s31 = sadd.s32 1, %s18
      %s32 = scalar_select %p29, %s31, %s18
      %p33 = scmp.ge.s32.totalorder %s32, 4
      %s34 = scalar_select %p33, 0, %s32
      %s35 = sadd.s32 1, %s17
      %s36 = scalar_select %p33, %s35, %s17
      %p37 = scmp.ge.s32.totalorder %s36, 1
      %s38 = scalar_select %p37, 0, %s36
      %s39 = sadd.s32 1, %s16
      %s40 = scalar_select %p37, %s39, %s16
      %p41 = scmp.ge.s32.totalorder %s40, 2
      %s42 = scalar_select %p41, 0, %s40
      %s43 = ssub.s32 %s16, %s42
      %s44 = ssub.s32 %s18, %s34
      %s45 = sor.u32 %s43, %s44
      %s46 = ssub.s32 %s17, %s38
      %s47 = sor.u32 %s45, %s46
      %p48 = scmp.eq.s32.totalorder %s47, 0
      %s50 = sadd.s32 %s49, 1
      %s51 = scalar_select %p48, %s49, %s50
      %p54 = pneg %p48
      %p55 = scmp.eq.s32.totalorder %s9, 15
      %p56 = por %p54, %p55
      %p57 = scmp.ne.s32.totalorder %s49, %s52
      %p58 = scmp.eq.s32.totalorder %s9, 0
      %p59 = por %p57, %p58
      %p60 = scmp.ne.s32.totalorder %s49, %s52
      %p61 = scmp.eq.s32.totalorder %s14, 15
      %p62 = por %p60, %p61
      %p63 = scmp.ne.s32.totalorder %s52, %s53
      %p64 = scmp.eq.s32.totalorder %s14, 0
      %p65 = por %p63, %p64
      %p66 = scmp.ne.s32.totalorder %s52, %s53
      %p67 = scmp.eq.s32.totalorder %s15, 15
      %p68 = por %p66, %p67
      %p70 = scmp.ne.s32.totalorder %s53, %s69
      %p71 = scmp.eq.s32.totalorder %s15, 0
      %p72 = por %p70, %p71
      %s73 = sadd.s32 %s17, 1
      %s74 = sadd.s32 %s38, 1
      %s75 = ssub.s32 %s16, %s42
      %s76 = ssub.s32 %s19, %s30
      %s77 = sor.u32 %s75, %s76
      %s78 = ssub.s32 %s73, %s74
      %s79 = sor.u32 %s77, %s78
      %p80 = scmp.eq.s32.totalorder %s79, 0
      %s82 = sadd.s32 %s81, 1
      %s83 = scalar_select %p80, %s81, %s82
      %p86 = pneg %p80
      %p87 = scmp.eq.s32.totalorder %s9, 15
      %p88 = por %p86, %p87
      %p89 = scmp.ne.s32.totalorder %s81, %s84
      %p90 = scmp.eq.s32.totalorder %s9, 0
      %p91 = por %p89, %p90
      %p92 = scmp.ne.s32.totalorder %s81, %s84
      %p93 = scmp.eq.s32.totalorder %s14, 15
      %p94 = por %p92, %p93
      %p95 = scmp.ne.s32.totalorder %s84, %s85
      %p96 = scmp.eq.s32.totalorder %s14, 0
      %p97 = por %p95, %p96
      %p98 = scmp.ne.s32.totalorder %s84, %s85
      %p99 = scmp.eq.s32.totalorder %s15, 15
      %p100 = por %p98, %p99
      %p102 = scmp.ne.s32.totalorder %s85, %s101
      %p103 = scmp.eq.s32.totalorder %s15, 0
      %p104 = por %p102, %p103
      %s105 = sadd.s32 %s17, 2
      %s106 = sadd.s32 %s38, 2
      %s107 = ssub.s32 %s16, %s42
      %s108 = ssub.s32 %s19, %s30
      %s109 = sor.u32 %s107, %s108
      %s110 = ssub.s32 %s105, %s106
      %s111 = sor.u32 %s109, %s110
      %p112 = scmp.eq.s32.totalorder %s111, 0
      %s114 = sadd.s32 %s113, 1
      %s115 = scalar_select %p112, %s113, %s114
      %p118 = pneg %p112
      %p119 = scmp.eq.s32.totalorder %s9, 15
      %p120 = por %p118, %p119
      %p121 = scmp.ne.s32.totalorder %s113, %s116
      %p122 = scmp.eq.s32.totalorder %s9, 0
      %p123 = por %p121, %p122
      %p124 = scmp.ne.s32.totalorder %s113, %s116
      %p125 = scmp.eq.s32.totalorder %s14, 15
      %p126 = por %p124, %p125
      %p127 = scmp.ne.s32.totalorder %s116, %s117
      %p128 = scmp.eq.s32.totalorder %s14, 0
      %p129 = por %p127, %p128
      %p130 = scmp.ne.s32.totalorder %s116, %s117
      %p131 = scmp.eq.s32.totalorder %s15, 15
      %p132 = por %p130, %p131
      %p134 = scmp.ne.s32.totalorder %s117, %s133
      %p135 = scmp.eq.s32.totalorder %s15, 0
      %p136 = por %p134, %p135
      %s137 = ssub.s32 %s16, %s42
      %s138 = ssub.s32 %s18, %s34
      %s139 = sor.u32 %s137, %s138
      %s140 = ssub.s32 %s17, %s38
      %s141 = sor.u32 %s139, %s140
      %p142 = scmp.eq.s32.totalorder %s141, 0
      %s144 = sadd.s32 %s143, 1
      %s145 = scalar_select %p142, %s143, %s144
      %p148 = pneg %p142
      %p149 = scmp.eq.s32.totalorder %s9, 15
      %p150 = por %p148, %p149
      %p151 = scmp.ne.s32.totalorder %s143, %s146
      %p152 = scmp.eq.s32.totalorder %s9, 0
      %p153 = por %p151, %p152
      %p154 = scmp.ne.s32.totalorder %s143, %s146
      %p155 = scmp.eq.s32.totalorder %s14, 15
      %p156 = por %p154, %p155
      %p157 = scmp.ne.s32.totalorder %s146, %s147
      %p158 = scmp.eq.s32.totalorder %s14, 0
      %p159 = por %p157, %p158
      %p160 = scmp.ne.s32.totalorder %s146, %s147
      %p161 = scmp.eq.s32.totalorder %s15, 15
      %p162 = por %p160, %p161
      %p164 = scmp.ne.s32.totalorder %s147, %s163
      %p165 = scmp.eq.s32.totalorder %s15, 0
      %p166 = por %p164, %p165
      %p167 = scmp.le.s32.totalorder 1, %s9
      %p168 = scmp.lt.s32.totalorder %s9, 17
      %p169 = pnand %p167, %p168
      %p170 = pneg %p169
      // Predicated region
      $region9: #{joint_block_forward.7} parent=5 // pred_check
        _
      $region10: #{joint_block_forward.7} parent=5 // pred_check_branch
        %172 = sbr.rel (%p169) target = $region12
      $region11: #{joint_block_forward.7} parent=5 // pred_region
        %s173 = ssub.s32 %s9, 1
      $region12: #{joint_block_forward.7} parent=5 // pred_fallthru
        _
      %p174 = scmp.lt.s32.totalorder %s9, 16
      // Predicated region
      $region13: #{joint_block_forward.7} parent=5 // pred_check
        %p175 = pneg %p174
      $region14: #{joint_block_forward.7} parent=5 // pred_check_branch
        %177 = sbr.rel (%p175) target = $region16
      $region15: #{joint_block_forward.7} parent=5 // pred_region
        // Predicated region
        $region17: #{joint_block_forward.7} parent=15 // pred_check
          %p178 = pneg %p59
        $region18: #{joint_block_forward.7} parent=15 // pred_check_branch
          %180 = sbr.rel (%p178) target = $region20
        $region19: #{joint_block_forward.7} parent=15 // pred_region
          %s181 = sand.u32 %s49, 1
          %s182 = sand.u32 %s49, 1
          %s183 = smul.addr %s182, 8
          %s184 = scalar_lea.vmem [#allocation5], %s183
          %s185 = smul.u32 2, %s18
          %s186 = smul.addr %s185, 3
          %s187 = sadd.s32 %s17, %s186
          %s188 = smul.addr %s16, 24
          %s189 = sadd.s32 %s187, %s188
          %s190 = smul.addr %s189, 4
          %s191 = scalar_lea.vmem %s0, %s190
          // Predicated region
          $region21: #{joint_block_forward.7} parent=19 // pred_check
            _
          $region22: #{joint_block_forward.7} parent=19 // pred_check_branch
            %193 = sbr.rel (0) target = $region24
          $region23: #{joint_block_forward.7} parent=19 // pred_region
            // Predicated region
            $region25: #{joint_block_forward.7} parent=23 // pred_check
              _
            $region26: #{joint_block_forward.7} parent=23 // pred_check_branch
              %195 = sbr.rel target = $region28
            $region27: #{joint_block_forward.7} parent=23 // pred_region
              // Predicated region
              $region40: #{joint_block_forward.7} parent=27 // pred_check
                _
              $region41: #{joint_block_forward.7} parent=27 // pred_check_branch
                %212 = sbr.rel (0) target = $region43
              $region42: #{joint_block_forward.7} parent=27 // pred_region
                loop: start=0, step=1, limit=1
                $region44: #{joint_block_forward.7} parent=42 // loop_pre_header
                  _
                $region45: #{joint_block_forward.7} parent=42 // loop_header
                  %s214 = sphi 0, %s218
                  %p215 = scmp.ge.s32.totalorder %s214, 1
                  %s219 = sphi %s191, %s191
                  %s220 = sphi %s184, %s184
                $region46: #{joint_block_forward.7} parent=42 // loop_header_branch
                  %217 = sbr.rel (%p215) target = $region50
                $region47: #{joint_block_forward.7} parent=42 // loop_body
                  _
                $region48: #{joint_block_forward.7} parent=42 // loop_footer
                  %s218 = sadd.s32 1, %s214
                $region49: #{joint_block_forward.7} parent=42 // loop_footer_branch
                  %213 = sbr.rel target = $region45
                $region50: #{joint_block_forward.7} parent=42 // loop_exit
                  _
                loop: start=0, step=1, limit=1
                $region51: #{joint_block_forward.7} parent=42 // loop_pre_header
                  _
                $region52: #{joint_block_forward.7} parent=42 // loop_header
                  %s223 = sphi 0, %s227
                  %p224 = scmp.ge.s32.totalorder %s223, 1
                  %s228 = sphi %s191, %s191
                  %s229 = sphi %s184, %s184
                $region53: #{joint_block_forward.7} parent=42 // loop_header_branch
                  %226 = sbr.rel (%p224) target = $region57
                $region54: #{joint_block_forward.7} parent=42 // loop_body
                  %v230 = vld [vmem:[%s228] sm:$0xf]
                  %231 = vst [vmem:[%s229] sm:$0xf] %v230
                  %v232 = vld [vmem:[%s228 + $0xc] sm:$0xf]
                  %233 = vst [vmem:[%s229 + $0x4] sm:$0xf] %v232
                $region55: #{joint_block_forward.7} parent=42 // loop_footer
                  %s227 = sadd.s32 1, %s223
                $region56: #{joint_block_forward.7} parent=42 // loop_footer_branch
                  %222 = sbr.rel target = $region52
                $region57: #{joint_block_forward.7} parent=42 // loop_exit
                  _
              $region43: #{joint_block_forward.7} parent=27 // pred_fallthru
                _
            $region28: #{joint_block_forward.7} parent=23 // pred_fallthru
              _
            // Predicated region
            $region29: #{joint_block_forward.7} parent=23 // pred_check
              _
            $region30: #{joint_block_forward.7} parent=23 // pred_check_branch
              %197 = sbr.rel (0) target = $region32
            $region31: #{joint_block_forward.7} parent=23 // pred_region
              loop: start=0, step=1, limit=1
              $region33: #{joint_block_forward.7} parent=31 // loop_pre_header
                _
              $region34: #{joint_block_forward.7} parent=31 // loop_header
                %s200 = sphi 0, %s204
                %p201 = scmp.ge.s32.totalorder %s200, 1
                %s205 = sphi %s191, %s191
                %s206 = sphi %s184, %s184
              $region35: #{joint_block_forward.7} parent=31 // loop_header_branch
                %203 = sbr.rel (%p201) target = $region39
              $region36: #{joint_block_forward.7} parent=31 // loop_body
                %v207 = vld [vmem:[%s205] sm:$0xf]
                %208 = vst [vmem:[%s206] sm:$0xf] %v207
                %v209 = vld [vmem:[%s205 + $0xc] sm:$0xf]
                %210 = vst [vmem:[%s206 + $0x4] sm:$0xf] %v209
              $region37: #{joint_block_forward.7} parent=31 // loop_footer
                %s204 = sadd.s32 1, %s200
              $region38: #{joint_block_forward.7} parent=31 // loop_footer_branch
                %199 = sbr.rel target = $region34
              $region39: #{joint_block_forward.7} parent=31 // loop_exit
                _
            $region32: #{joint_block_forward.7} parent=23 // pred_fallthru
              _
          $region24: #{joint_block_forward.7} parent=19 // pred_fallthru
            _
          %234 = vnop
        $region20: #{joint_block_forward.7} parent=15 // pred_fallthru
          _
        // Predicated region
        $region58: #{joint_block_forward.7} parent=15 // pred_check
          %p235 = pneg %p91
        $region59: #{joint_block_forward.7} parent=15 // pred_check_branch
          %237 = sbr.rel (%p235) target = $region61
        $region60: #{joint_block_forward.7} parent=15 // pred_region
          %s238 = sand.u32 %s81, 1
          %s239 = sand.u32 %s81, 1
          %s240 = smul.addr %s239, 16
          %s241 = scalar_lea.vmem [#allocation6], %s240
          %s242 = sadd.s32 %s17, 1
          %s243 = smul.u32 4, %s19
          %s244 = smul.addr %s243, 3
          %s245 = sadd.s32 %s242, %s244
          %s246 = smul.addr %s16, 24
          %s247 = sadd.s32 %s245, %s246
          %s248 = smul.addr %s247, 4
          %s249 = scalar_lea.vmem %s1, %s248
          // Predicated region
          $region62: #{joint_block_forward.7} parent=60 // pred_check
            _
          $region63: #{joint_block_forward.7} parent=60 // pred_check_branch
            %251 = sbr.rel (0) target = $region65
          $region64: #{joint_block_forward.7} parent=60 // pred_region
            // Predicated region
            $region66: #{joint_block_forward.7} parent=64 // pred_check
              _
            $region67: #{joint_block_forward.7} parent=64 // pred_check_branch
              %253 = sbr.rel target = $region69
            $region68: #{joint_block_forward.7} parent=64 // pred_region
              // Predicated region
              $region81: #{joint_block_forward.7} parent=68 // pred_check
                _
              $region82: #{joint_block_forward.7} parent=68 // pred_check_branch
                %274 = sbr.rel (0) target = $region84
              $region83: #{joint_block_forward.7} parent=68 // pred_region
                loop: start=0, step=1, limit=1
                $region85: #{joint_block_forward.7} parent=83 // loop_pre_header
                  _
                $region86: #{joint_block_forward.7} parent=83 // loop_header
                  %s276 = sphi 0, %s280
                  %p277 = scmp.ge.s32.totalorder %s276, 1
                  %s281 = sphi %s249, %s249
                  %s282 = sphi %s241, %s241
                $region87: #{joint_block_forward.7} parent=83 // loop_header_branch
                  %279 = sbr.rel (%p277) target = $region91
                $region88: #{joint_block_forward.7} parent=83 // loop_body
                  _
                $region89: #{joint_block_forward.7} parent=83 // loop_footer
                  %s280 = sadd.s32 1, %s276
                $region90: #{joint_block_forward.7} parent=83 // loop_footer_branch
                  %275 = sbr.rel target = $region86
                $region91: #{joint_block_forward.7} parent=83 // loop_exit
                  _
                loop: start=0, step=1, limit=1
                $region92: #{joint_block_forward.7} parent=83 // loop_pre_header
                  _
                $region93: #{joint_block_forward.7} parent=83 // loop_header
                  %s285 = sphi 0, %s289
                  %p286 = scmp.ge.s32.totalorder %s285, 1
                  %s290 = sphi %s249, %s249
                  %s291 = sphi %s241, %s241
                $region94: #{joint_block_forward.7} parent=83 // loop_header_branch
                  %288 = sbr.rel (%p286) target = $region98
                $region95: #{joint_block_forward.7} parent=83 // loop_body
                  %v292 = vld [vmem:[%s290] sm:$0xf]
                  %293 = vst [vmem:[%s291] sm:$0xf] %v292
                  %v294 = vld [vmem:[%s290 + $0xc] sm:$0xf]
                  %295 = vst [vmem:[%s291 + $0x4] sm:$0xf] %v294
                  %v296 = vld [vmem:[%s290 + $0x18] sm:$0xf]
                  %297 = vst [vmem:[%s291 + $0x8] sm:$0xf] %v296
                  %v298 = vld [vmem:[%s290 + $0x24] sm:$0xf]
                  %299 = vst [vmem:[%s291 + $0xc] sm:$0xf] %v298
                $region96: #{joint_block_forward.7} parent=83 // loop_footer
                  %s289 = sadd.s32 1, %s285
                $region97: #{joint_block_forward.7} parent=83 // loop_footer_branch
                  %284 = sbr.rel target = $region93
                $region98: #{joint_block_forward.7} parent=83 // loop_exit
                  _
              $region84: #{joint_block_forward.7} parent=68 // pred_fallthru
                _
            $region69: #{joint_block_forward.7} parent=64 // pred_fallthru
              _
            // Predicated region
            $region70: #{joint_block_forward.7} parent=64 // pred_check
              _
            $region71: #{joint_block_forward.7} parent=64 // pred_check_branch
              %255 = sbr.rel (0) target = $region73
            $region72: #{joint_block_forward.7} parent=64 // pred_region
              loop: start=0, step=1, limit=1
              $region74: #{joint_block_forward.7} parent=72 // loop_pre_header
                _
              $region75: #{joint_block_forward.7} parent=72 // loop_header
                %s258 = sphi 0, %s262
                %p259 = scmp.ge.s32.totalorder %s258, 1
                %s263 = sphi %s249, %s249
                %s264 = sphi %s241, %s241
              $region76: #{joint_block_forward.7} parent=72 // loop_header_branch
                %261 = sbr.rel (%p259) target = $region80
              $region77: #{joint_block_forward.7} parent=72 // loop_body
                %v265 = vld [vmem:[%s263] sm:$0xf]
                %266 = vst [vmem:[%s264] sm:$0xf] %v265
                %v267 = vld [vmem:[%s263 + $0xc] sm:$0xf]
                %268 = vst [vmem:[%s264 + $0x4] sm:$0xf] %v267
                %v269 = vld [vmem:[%s263 + $0x18] sm:$0xf]
                %270 = vst [vmem:[%s264 + $0x8] sm:$0xf] %v269
                %v271 = vld [vmem:[%s263 + $0x24] sm:$0xf]
                %272 = vst [vmem:[%s264 + $0xc] sm:$0xf] %v271
              $region78: #{joint_block_forward.7} parent=72 // loop_footer
                %s262 = sadd.s32 1, %s258
              $region79: #{joint_block_forward.7} parent=72 // loop_footer_branch
                %257 = sbr.rel target = $region75
              $region80: #{joint_block_forward.7} parent=72 // loop_exit
                _
            $region73: #{joint_block_forward.7} parent=64 // pred_fallthru
              _
          $region65: #{joint_block_forward.7} parent=60 // pred_fallthru
            _
          %300 = vnop
        $region61: #{joint_block_forward.7} parent=15 // pred_fallthru
          _
        // Predicated region
        $region99: #{joint_block_forward.7} parent=15 // pred_check
          %p301 = pneg %p123
        $region100: #{joint_block_forward.7} parent=15 // pred_check_branch
          %303 = sbr.rel (%p301) target = $region102
        $region101: #{joint_block_forward.7} parent=15 // pred_region
          %s304 = sand.u32 %s113, 1
          %s305 = sand.u32 %s113, 1
          %s306 = smul.addr %s305, 16
          %s307 = scalar_lea.vmem [#allocation7], %s306
          %s308 = sadd.s32 %s17, 2
          %s309 = smul.u32 4, %s19
          %s310 = smul.addr %s309, 3
          %s311 = sadd.s32 %s308, %s310
          %s312 = smul.addr %s16, 24
          %s313 = sadd.s32 %s311, %s312
          %s314 = smul.addr %s313, 4
          %s315 = scalar_lea.vmem %s2, %s314
          // Predicated region
          $region103: #{joint_block_forward.7} parent=101 // pred_check
            _
          $region104: #{joint_block_forward.7} parent=101 // pred_check_branch
            %317 = sbr.rel (0) target = $region106
          $region105: #{joint_block_forward.7} parent=101 // pred_region
            // Predicated region
            $region107: #{joint_block_forward.7} parent=105 // pred_check
              _
            $region108: #{joint_block_forward.7} parent=105 // pred_check_branch
              %319 = sbr.rel target = $region110
            $region109: #{joint_block_forward.7} parent=105 // pred_region
              // Predicated region
              $region122: #{joint_block_forward.7} parent=109 // pred_check
                _
              $region123: #{joint_block_forward.7} parent=109 // pred_check_branch
                %340 = sbr.rel (0) target = $region125
              $region124: #{joint_block_forward.7} parent=109 // pred_region
                loop: start=0, step=1, limit=1
                $region126: #{joint_block_forward.7} parent=124 // loop_pre_header
                  _
                $region127: #{joint_block_forward.7} parent=124 // loop_header
                  %s342 = sphi 0, %s346
                  %p343 = scmp.ge.s32.totalorder %s342, 1
                  %s347 = sphi %s315, %s315
                  %s348 = sphi %s307, %s307
                $region128: #{joint_block_forward.7} parent=124 // loop_header_branch
                  %345 = sbr.rel (%p343) target = $region132
                $region129: #{joint_block_forward.7} parent=124 // loop_body
                  _
                $region130: #{joint_block_forward.7} parent=124 // loop_footer
                  %s346 = sadd.s32 1, %s342
                $region131: #{joint_block_forward.7} parent=124 // loop_footer_branch
                  %341 = sbr.rel target = $region127
                $region132: #{joint_block_forward.7} parent=124 // loop_exit
                  _
                loop: start=0, step=1, limit=1
                $region133: #{joint_block_forward.7} parent=124 // loop_pre_header
                  _
                $region134: #{joint_block_forward.7} parent=124 // loop_header
                  %s351 = sphi 0, %s355
                  %p352 = scmp.ge.s32.totalorder %s351, 1
                  %s356 = sphi %s315, %s315
                  %s357 = sphi %s307, %s307
                $region135: #{joint_block_forward.7} parent=124 // loop_header_branch
                  %354 = sbr.rel (%p352) target = $region139
                $region136: #{joint_block_forward.7} parent=124 // loop_body
                  %v358 = vld [vmem:[%s356] sm:$0xf]
                  %359 = vst [vmem:[%s357] sm:$0xf] %v358
                  %v360 = vld [vmem:[%s356 + $0xc] sm:$0xf]
                  %361 = vst [vmem:[%s357 + $0x4] sm:$0xf] %v360
                  %v362 = vld [vmem:[%s356 + $0x18] sm:$0xf]
                  %363 = vst [vmem:[%s357 + $0x8] sm:$0xf] %v362
                  %v364 = vld [vmem:[%s356 + $0x24] sm:$0xf]
                  %365 = vst [vmem:[%s357 + $0xc] sm:$0xf] %v364
                $region137: #{joint_block_forward.7} parent=124 // loop_footer
                  %s355 = sadd.s32 1, %s351
                $region138: #{joint_block_forward.7} parent=124 // loop_footer_branch
                  %350 = sbr.rel target = $region134
                $region139: #{joint_block_forward.7} parent=124 // loop_exit
                  _
              $region125: #{joint_block_forward.7} parent=109 // pred_fallthru
                _
            $region110: #{joint_block_forward.7} parent=105 // pred_fallthru
              _
            // Predicated region
            $region111: #{joint_block_forward.7} parent=105 // pred_check
              _
            $region112: #{joint_block_forward.7} parent=105 // pred_check_branch
              %321 = sbr.rel (0) target = $region114
            $region113: #{joint_block_forward.7} parent=105 // pred_region
              loop: start=0, step=1, limit=1
              $region115: #{joint_block_forward.7} parent=113 // loop_pre_header
                _
              $region116: #{joint_block_forward.7} parent=113 // loop_header
                %s324 = sphi 0, %s328
                %p325 = scmp.ge.s32.totalorder %s324, 1
                %s329 = sphi %s315, %s315
                %s330 = sphi %s307, %s307
              $region117: #{joint_block_forward.7} parent=113 // loop_header_branch
                %327 = sbr.rel (%p325) target = $region121
              $region118: #{joint_block_forward.7} parent=113 // loop_body
                %v331 = vld [vmem:[%s329] sm:$0xf]
                %332 = vst [vmem:[%s330] sm:$0xf] %v331
                %v333 = vld [vmem:[%s329 + $0xc] sm:$0xf]
                %334 = vst [vmem:[%s330 + $0x4] sm:$0xf] %v333
                %v335 = vld [vmem:[%s329 + $0x18] sm:$0xf]
                %336 = vst [vmem:[%s330 + $0x8] sm:$0xf] %v335
                %v337 = vld [vmem:[%s329 + $0x24] sm:$0xf]
                %338 = vst [vmem:[%s330 + $0xc] sm:$0xf] %v337
              $region119: #{joint_block_forward.7} parent=113 // loop_footer
                %s328 = sadd.s32 1, %s324
              $region120: #{joint_block_forward.7} parent=113 // loop_footer_branch
                %323 = sbr.rel target = $region116
              $region121: #{joint_block_forward.7} parent=113 // loop_exit
                _
            $region114: #{joint_block_forward.7} parent=105 // pred_fallthru
              _
          $region106: #{joint_block_forward.7} parent=101 // pred_fallthru
            _
          %366 = vnop
        $region102: #{joint_block_forward.7} parent=15 // pred_fallthru
          _
      $region16: #{joint_block_forward.7} parent=5 // pred_fallthru
        _
      %p367 = scmp.le.s32.totalorder 1, %s9
      %p368 = scmp.lt.s32.totalorder %s9, 17
      %p369 = pnand %p367, %p368
      %p370 = pneg %p369
      // Predicated region
      $region140: #{joint_block_forward.7} parent=5 // pred_check
        _
      $region141: #{joint_block_forward.7} parent=5 // pred_check_branch
        %372 = sbr.rel (%p369) target = $region143
      $region142: #{joint_block_forward.7} parent=5 // pred_region
        %s373 = ssub.s32 %s9, 1
        %s374 = sand.u32 %s52, 1
        %s375 = sand.u32 %s52, 1
        %s376 = smul.addr %s375, 8
        %s377 = scalar_lea.vmem [#allocation5], %s376
        // Predicated region
        $region144: #{joint_block_forward.7} parent=142 // pred_check
          %p378 = pneg %p65
        $region145: #{joint_block_forward.7} parent=142 // pred_check_branch
          %380 = sbr.rel (%p378) target = $region147
        $region146: #{joint_block_forward.7} parent=142 // pred_region
          _
        $region147: #{joint_block_forward.7} parent=142 // pred_fallthru
          _
        %s381 = sand.u32 %s84, 1
        %s382 = sand.u32 %s84, 1
        %s383 = smul.addr %s382, 16
        %s384 = scalar_lea.vmem [#allocation6], %s383
        // Predicated region
        $region148: #{joint_block_forward.7} parent=142 // pred_check
          %p385 = pneg %p97
        $region149: #{joint_block_forward.7} parent=142 // pred_check_branch
          %387 = sbr.rel (%p385) target = $region151
        $region150: #{joint_block_forward.7} parent=142 // pred_region
          _
        $region151: #{joint_block_forward.7} parent=142 // pred_fallthru
          _
        %s388 = sand.u32 %s116, 1
        %s389 = sand.u32 %s116, 1
        %s390 = smul.addr %s389, 16
        %s391 = scalar_lea.vmem [#allocation7], %s390
        // Predicated region
        $region152: #{joint_block_forward.7} parent=142 // pred_check
          %p392 = pneg %p129
        $region153: #{joint_block_forward.7} parent=142 // pred_check_branch
          %394 = sbr.rel (%p392) target = $region155
        $region154: #{joint_block_forward.7} parent=142 // pred_region
          _
        $region155: #{joint_block_forward.7} parent=142 // pred_fallthru
          _
        %s395 = sand.u32 %s52, 1
        %s396 = sand.u32 %s52, 1
        %s397 = smul.addr %s396, 8
        %s398 = scalar_lea.vmem [#allocation5], %s397
        %p399 = pneg %p65
        %p400 = pneg %p62
        %s401 = sand.u32 %s84, 1
        %s402 = sand.u32 %s84, 1
        %s403 = smul.addr %s402, 16
        %s404 = scalar_lea.vmem [#allocation6], %s403
        %p405 = pneg %p97
        %p406 = pneg %p94
        %s407 = sand.u32 %s116, 1
        %s408 = sand.u32 %s116, 1
        %s409 = smul.addr %s408, 16
        %s410 = scalar_lea.vmem [#allocation7], %s409
        %p411 = pneg %p129
        %p412 = pneg %p126
        %p413 = pneg %p159
        %p414 = pneg %p156
        %s415 = smul.u32 2, %s22
        %p416 = scmp.lt.s32.totalorder %s20, 1
        %s417 = scalar_select %p416, %s20, 1
        %p418 = scmp.lt.s32.totalorder %s415, 7
        %s419 = scalar_select %p418, %s415, 7
        %p420 = scmp.lt.s32.totalorder %s21, 0
        %s421 = scalar_select %p420, %s21, 0
        %s422 = sadd.s32 %s421, %s419
        %s423 = smul.addr %s417, 8
        %s424 = sadd.s32 %s422, %s423
        %s425 = smul.addr %s424, 4
        %s426 = scalar_lea.vmem %s3, %s425
        %s427 = smul.u32 2, %s22
        %s428 = sadd.s32 %s21, 1
        %s429 = smul.u32 4, %s23
        %s430 = sadd.s32 %s21, 2
        %s431 = smul.u32 4, %s23
        %s432 = smul.u32 2, %s22
        %p433 = scmp.lt.s32.totalorder %s20, 1
        %s434 = scalar_select %p433, %s20, 1
        %p435 = scmp.lt.s32.totalorder %s432, 7
        %s436 = scalar_select %p435, %s432, 7
        %p437 = scmp.lt.s32.totalorder %s21, 0
        %s438 = scalar_select %p437, %s21, 0
        %s439 = sadd.s32 %s438, %s436
        %s440 = smul.addr %s434, 8
        %s441 = sadd.s32 %s439, %s440
        %s442 = smul.addr %s441, 4
        %s443 = scalar_lea.vmem %s3, %s442
        %s444 = smul.u32 2, %s22
        %p446 = scmp.eq.s32.totalorder %s23, 0
        // Predicated region
        $region156: #{joint_block_forward.7} parent=142 // pred_check
          %p447 = pneg %p446
        $region157: #{joint_block_forward.7} parent=142 // pred_check_branch
          %449 = sbr.rel (%p447) target = $region159
        $region158: #{joint_block_forward.7} parent=142 // pred_region
          %vm450 = vcmask 7168
          %451 = vst.msk [vmem:[#allocation2] sm:$0xff] %vm450, -inf
          %452 = vst.msk [vmem:[#allocation2 + $0x8] sm:$0xff] %vm450, -inf
          %453 = vst.msk [vmem:[#allocation2 + $0x10] sm:$0xff] %vm450, -inf
          %454 = vst.msk [vmem:[#allocation2 + $0x18] sm:$0xff] %vm450, -inf
          %455 = vst.msk [vmem:[#allocation3] sm:$0xff] %vm450, 0.0
          %456 = vst.msk [vmem:[#allocation3 + $0x8] sm:$0xff] %vm450, 0.0
          %457 = vst.msk [vmem:[#allocation3 + $0x10] sm:$0xff] %vm450, 0.0
          %458 = vst.msk [vmem:[#allocation3 + $0x18] sm:$0xff] %vm450, 0.0
          %vm459 = vcmask 523264
          %460 = vst.msk [vmem:[#allocation4] sm:$0xff] %vm459, 0.0
          %461 = vst.msk [vmem:[#allocation4 + $0x8] sm:$0xff] %vm459, 0.0
          %462 = vst.msk [vmem:[#allocation4 + $0x10] sm:$0xff] %vm459, 0.0
          %463 = vst.msk [vmem:[#allocation4 + $0x18] sm:$0xff] %vm459, 0.0
        $region159: #{joint_block_forward.7} parent=142 // pred_fallthru
          _
        %v464 = vld [vmem:[%s377] sm:$0xf]
        %v465 = vld [vmem:[%s377 + $0x4] sm:$0xf]
        %v466 = vld [vmem:[%s384] sm:$0xf]
        %v467 = vld [vmem:[%s384 + $0x4] sm:$0xf]
        %v468 = vld [vmem:[%s384 + $0x8] sm:$0xf]
        %v469 = vld [vmem:[%s384 + $0xc] sm:$0xf]
        %v470 = vld [vmem:[%s391] sm:$0xf]
        %v471 = vld [vmem:[%s391 + $0x4] sm:$0xf]
        %v472 = vld [vmem:[%s391 + $0x8] sm:$0xf]
        %v473 = vld [vmem:[%s391 + $0xc] sm:$0xf]
        %v476 = vunpack.c.l.b16 %v464
        %v477 = vunpack.c.l.b16 %v465
        %v478 = vpack.c.b16 %v477, %v476
        %v483 = vunpack.c.l.b16 %v466
        %v484 = vunpack.c.l.b16 %v467
        %v485 = vunpack.c.l.b16 %v468
        %v486 = vunpack.c.l.b16 %v469
        %v487 = vpack.c.b16 %v484, %v483
        %v488 = vpack.c.b16 %v486, %v485
        %vm489 = vcmask 523264
        %v491 = vsel %vm489, %v478, 0
        %v494 = vsel %vm489, %v487, 0
        %v497 = vsel %vm489, %v488, 0
        %499 = vmatprep.subr.bf16.mxu0 0
        %500 = vmatpush1.bf16.xpose.msra.mxu0 %v494
        %501 = vmatprep.subr.bf16.mxu0 0
        %502 = vmatpush1.bf16.xpose.msra.mxu0 %v497
        %503 = vmatprep.subr.bf16.mxu0 0
        %504 = vmatpush1.bf16.xpose.msra.mxu0 0
        %505 = vmatprep.subr.bf16.mxu0 0
        %506 = vmatpush1.bf16.xpose.msra.mxu0 0
        %507 = vmatprep.subr.bf16.mxu0 0
        %508 = vmatpush1.bf16.xpose.msra.mxu0 0
        %509 = vmatprep.subr.bf16.mxu0 0
        %510 = vmatpush1.bf16.xpose.msra.mxu0 0
        %511 = vmatprep.subr.bf16.mxu0 0
        %512 = vmatpush1.bf16.xpose.msra.mxu0 0
        %513 = vmatprep.subr.bf16.mxu0 0
        %514 = vmatpush1.bf16.xpose.msra.mxu0 0
        %515 = vmatprep.subr.bf16.mxu0 0
        %516 = vmatpush1.bf16.xpose.msra.mxu0 0
        %517 = vmatprep.subr.bf16.mxu0 0
        %518 = vmatpush1.bf16.xpose.msra.mxu0 0
        %519 = vmatprep.subr.bf16.mxu0 0
        %520 = vmatpush1.bf16.xpose.msra.mxu0 0
        %521 = vmatprep.subr.bf16.mxu0 0
        %522 = vmatpush1.bf16.xpose.msra.mxu0 0
        %523 = vmatprep.subr.bf16.mxu0 0
        %524 = vmatpush1.bf16.xpose.msra.mxu0 0
        %525 = vmatprep.subr.bf16.mxu0 0
        %526 = vmatpush1.bf16.xpose.msra.mxu0 0
        %527 = vmatprep.subr.bf16.mxu0 0
        %528 = vmatpush1.bf16.xpose.msra.mxu0 0
        %529 = vmatprep.subr.bf16.mxu0 0
        %530 = vmatpush1.bf16.xpose.msra.mxu0 0
        %531 = vmatprep.mubr.bf16.mxu0 0
        %532 = vmatmul.mubr.bf16.gmra.mrb[0].mxu0 %v491
        %v533 = vpop.f32.mrb[0].mxu0
        %v534 = vadd.f32 0.0, %v533
        %v535 = vpop.f32.mrb[0].mxu0
        %v536 = vpop.f32.mrb[0].mxu0
        %v537 = vadd.f32 0.0, %v536
        %v538 = vpop.f32.mrb[0].mxu0
        %539 = vdwg.mxu0
        %v540 = vld [vmem:[#allocation2] sm:$0xff]
        %v541 = vld [vmem:[#allocation2 + $0x8] sm:$0xff]
        %vm542 = vcmask 261120
        %v543 = vsel %vm542, %v534, -inf
        %544 = vmax.xlane.f32.xlu0 %v543
        %v545 = vpop.xlane.xlu0 %544
        %v546 = vsel %vm542, %v537, -inf
        %547 = vmax.xlane.f32.xlu0 %v546
        %v548 = vpop.xlane.xlu0 %547
        %v549 = vmax.f32 %v540, %v545
        %v550 = vmax.f32 %v541, %v548
        %v551 = vsub.f32 %v540, %v549
        %v552 = vsub.f32 %v541, %v550
        %v553 = vmul.f32 %v551, 1.442695
        %v554 = vpow.pop %v553
        %v555 = vmul.f32 %v552, 1.442695
        %v556 = vpow.pop %v555
        %558 = vset.pattern.permute.xlu0 0
        %559 = vperm.xlu0 %558, %v549
        %v560 = vpop.permute.xlu0 %559
        %563 = vset.pattern.permute.xlu0 0
        %564 = vperm.xlu0 %563, %v550
        %v565 = vpop.permute.xlu0 %564
        %v567 = vsub.f32 %v534, %v560
        %v568 = vsub.f32 %v537, %v565
        %v569 = vmul.f32 %v567, 1.442695
        %v570 = vpow.pop %v569
        %v571 = vmul.f32 %v568, 1.442695
        %v572 = vpow.pop %v571
        %v573 = vld [vmem:[#allocation3] sm:$0xff]
        %v574 = vld [vmem:[#allocation3 + $0x8] sm:$0xff]
        %v575 = vmul.f32 %v554, %v573
        %v576 = vmul.f32 %v556, %v574
        %v577 = vsel %vm542, %v570, 0.0
        %578 = vadd.xlane.f32.xlu0 %v577
        %v579 = vpop.xlane.xlu0 %578
        %v580 = vsel %vm542, %v572, 0.0
        %581 = vadd.xlane.f32.xlu0 %v580
        %v582 = vpop.xlane.xlu0 %581
        %v583 = vadd.f32 %v575, %v579
        %v584 = vadd.f32 %v576, %v582
        %vm585 = vcmask 7168
        %586 = vst.msk [vmem:[#allocation3] sm:$0xff] %vm585, %v583
        %587 = vst.msk [vmem:[#allocation3 + $0x8] sm:$0xff] %vm585, %v584
        %v588 = vld [vmem:[#allocation4] sm:$0xff]
        %v589 = vld [vmem:[#allocation4 + $0x8] sm:$0xff]
        %591 = vset.pattern.permute.xlu0 0
        %592 = vperm.xlu0 %591, %v554
        %v593 = vpop.permute.xlu0 %592
        %596 = vset.pattern.permute.xlu0 0
        %597 = vperm.xlu0 %596, %v556
        %v598 = vpop.permute.xlu0 %597
        %v600 = vmul.f32 %v593, %v588
        %v601 = vmul.f32 %v598, %v589
        %v602 = vpack.c.bf16 %v572, %v570
        %v607 = vunpack.c.l.b16 %v470
        %v608 = vunpack.c.l.b16 %v471
        %v609 = vunpack.c.l.b16 %v472
        %v610 = vunpack.c.l.b16 %v473
        %v611 = vpack.c.b16 %v608, %v607
        %v612 = vpack.c.b16 %v610, %v609
        %v616 = vsel %vm542, %v602, 0
        %618 = vmatprep.subr.bf16.mxu0 0
        %619 = vmatpush1.bf16.msra.mxu0 %v611
        %620 = vmatprep.subr.bf16.mxu0 0
        %621 = vmatpush1.bf16.msra.mxu0 %v612
        %622 = vmatprep.subr.bf16.mxu0 0
        %623 = vmatpush1.bf16.msra.mxu0 0
        %624 = vmatprep.subr.bf16.mxu0 0
        %625 = vmatpush1.bf16.msra.mxu0 0
        %626 = vmatprep.subr.bf16.mxu0 0
        %627 = vmatpush1.bf16.msra.mxu0 0
        %628 = vmatprep.subr.bf16.mxu0 0
        %629 = vmatpush1.bf16.msra.mxu0 0
        %630 = vmatprep.subr.bf16.mxu0 0
        %631 = vmatpush1.bf16.msra.mxu0 0
        %632 = vmatprep.subr.bf16.mxu0 0
        %633 = vmatpush1.bf16.msra.mxu0 0
        %634 = vmatprep.subr.bf16.mxu0 0
        %635 = vmatpush1.bf16.msra.mxu0 0
        %636 = vmatprep.subr.bf16.mxu0 0
        %637 = vmatpush1.bf16.msra.mxu0 0
        %638 = vmatprep.subr.bf16.mxu0 0
        %639 = vmatpush1.bf16.msra.mxu0 0
        %640 = vmatprep.subr.bf16.mxu0 0
        %641 = vmatpush1.bf16.msra.mxu0 0
        %642 = vmatprep.subr.bf16.mxu0 0
        %643 = vmatpush1.bf16.msra.mxu0 0
        %644 = vmatprep.subr.bf16.mxu0 0
        %645 = vmatpush1.bf16.msra.mxu0 0
        %646 = vmatprep.subr.bf16.mxu0 0
        %647 = vmatpush1.bf16.msra.mxu0 0
        %648 = vmatprep.subr.bf16.mxu0 0
        %649 = vmatpush1.bf16.msra.mxu0 0
        %650 = vmatprep.mubr.bf16.mxu0 0
        %651 = vmatmul.mubr.bf16.gmra.mrb[0].mxu0 %v616
        %v652 = vpop.f32.mrb[0].mxu0
        %v653 = vadd.f32 0.0, %v652
        %v654 = vpop.f32.mrb[0].mxu0
        %v655 = vpop.f32.mrb[0].mxu0
        %v656 = vadd.f32 0.0, %v655
        %v657 = vpop.f32.mrb[0].mxu0
        %658 = vdwg.mxu0
        %v659 = vadd.f32 %v600, %v653
        %v660 = vadd.f32 %v601, %v656
        %661 = vst.msk [vmem:[#allocation4] sm:$0xff] %vm489, %v659
        %662 = vst.msk [vmem:[#allocation4 + $0x8] sm:$0xff] %vm489, %v660
        %663 = vst.msk [vmem:[#allocation2] sm:$0xff] %vm585, %v549
        %664 = vst.msk [vmem:[#allocation2 + $0x8] sm:$0xff] %vm585, %v550
        %665 = vrot.lane.b32.xlu0 %v478, 64
        %v666 = vpop.permute.xlu0 %665
        %667 = vrot.lane.b32.xlu0 %v487, 64
        %v668 = vpop.permute.xlu0 %667
        %669 = vrot.lane.b32.xlu0 %v488, 64
        %v670 = vpop.permute.xlu0 %669
        %v672 = vsel %vm489, %v666, 0
        %v675 = vsel %vm489, %v668, 0
        %v678 = vsel %vm489, %v670, 0
        %680 = vmatprep.subr.bf16.mxu0 0
        %681 = vmatpush1.bf16.xpose.msra.mxu0 %v675
        %682 = vmatprep.subr.bf16.mxu0 0
        %683 = vmatpush1.bf16.xpose.msra.mxu0 %v678
        %684 = vmatprep.subr.bf16.mxu0 0
        %685 = vmatpush1.bf16.xpose.msra.mxu0 0
        %686 = vmatprep.subr.bf16.mxu0 0
        %687 = vmatpush1.bf16.xpose.msra.mxu0 0
        %688 = vmatprep.subr.bf16.mxu0 0
        %689 = vmatpush1.bf16.xpose.msra.mxu0 0
        %690 = vmatprep.subr.bf16.mxu0 0
        %691 = vmatpush1.bf16.xpose.msra.mxu0 0
        %692 = vmatprep.subr.bf16.mxu0 0
        %693 = vmatpush1.bf16.xpose.msra.mxu0 0
        %694 = vmatprep.subr.bf16.mxu0 0
        %695 = vmatpush1.bf16.xpose.msra.mxu0 0
        %696 = vmatprep.subr.bf16.mxu0 0
        %697 = vmatpush1.bf16.xpose.msra.mxu0 0
        %698 = vmatprep.subr.bf16.mxu0 0
        %699 = vmatpush1.bf16.xpose.msra.mxu0 0
        %700 = vmatprep.subr.bf16.mxu0 0
        %701 = vmatpush1.bf16.xpose.msra.mxu0 0
        %702 = vmatprep.subr.bf16.mxu0 0
        %703 = vmatpush1.bf16.xpose.msra.mxu0 0
        %704 = vmatprep.subr.bf16.mxu0 0
        %705 = vmatpush1.bf16.xpose.msra.mxu0 0
        %706 = vmatprep.subr.bf16.mxu0 0
        %707 = vmatpush1.bf16.xpose.msra.mxu0 0
        %708 = vmatprep.subr.bf16.mxu0 0
        %709 = vmatpush1.bf16.xpose.msra.mxu0 0
        %710 = vmatprep.subr.bf16.mxu0 0
        %711 = vmatpush1.bf16.xpose.msra.mxu0 0
        %712 = vmatprep.mubr.bf16.mxu0 0
        %713 = vmatmul.mubr.bf16.gmra.mrb[0].mxu0 %v672
        %v714 = vpop.f32.mrb[0].mxu0
        %v715 = vadd.f32 0.0, %v714
        %v716 = vpop.f32.mrb[0].mxu0
        %v717 = vpop.f32.mrb[0].mxu0
        %v718 = vadd.f32 0.0, %v717
        %v719 = vpop.f32.mrb[0].mxu0
        %720 = vdwg.mxu0
        %s721 = scalar_lea.vmem [#allocation2], 16
        %v722 = vld [vmem:[%s721] sm:$0xff]
        %v723 = vld [vmem:[%s721 + $0x8] sm:$0xff]
        %v724 = vsel %vm542, %v715, -inf
        %725 = vmax.xlane.f32.xlu0 %v724
        %v726 = vpop.xlane.xlu0 %725
        %v727 = vsel %vm542, %v718, -inf
        %728 = vmax.xlane.f32.xlu0 %v727
        %v729 = vpop.xlane.xlu0 %728
        %v730 = vmax.f32 %v722, %v726
        %v731 = vmax.f32 %v723, %v729
        %v732 = vsub.f32 %v722, %v730
        %v733 = vsub.f32 %v723, %v731
        %v734 = vmul.f32 %v732, 1.442695
        %v735 = vpow.pop %v734
        %v736 = vmul.f32 %v733, 1.442695
        %v737 = vpow.pop %v736
        %739 = vset.pattern.permute.xlu0 0
        %740 = vperm.xlu0 %739, %v730
        %v741 = vpop.permute.xlu0 %740
        %744 = vset.pattern.permute.xlu0 0
        %745 = vperm.xlu0 %744, %v731
        %v746 = vpop.permute.xlu0 %745
        %v748 = vsub.f32 %v715, %v741
        %v749 = vsub.f32 %v718, %v746
        %v750 = vmul.f32 %v748, 1.442695
        %v751 = vpow.pop %v750
        %v752 = vmul.f32 %v749, 1.442695
        %v753 = vpow.pop %v752
        %s754 = scalar_lea.vmem [#allocation3], 16
        %v755 = vld [vmem:[%s754] sm:$0xff]
        %v756 = vld [vmem:[%s754 + $0x8] sm:$0xff]
        %v757 = vmul.f32 %v735, %v755
        %v758 = vmul.f32 %v737, %v756
        %v759 = vsel %vm542, %v751, 0.0
        %760 = vadd.xlane.f32.xlu0 %v759
        %v761 = vpop.xlane.xlu0 %760
        %v762 = vsel %vm542, %v753, 0.0
        %763 = vadd.xlane.f32.xlu0 %v762
        %v764 = vpop.xlane.xlu0 %763
        %v765 = vadd.f32 %v757, %v761
        %v766 = vadd.f32 %v758, %v764
        %767 = vst.msk [vmem:[%s754] sm:$0xff] %vm585, %v765
        %768 = vst.msk [vmem:[%s754 + $0x8] sm:$0xff] %vm585, %v766
        %s769 = scalar_lea.vmem [#allocation4], 16
        %v770 = vld [vmem:[%s769] sm:$0xff]
        %v771 = vld [vmem:[%s769 + $0x8] sm:$0xff]
        %773 = vset.pattern.permute.xlu0 0
        %774 = vperm.xlu0 %773, %v735
        %v775 = vpop.permute.xlu0 %774
        %778 = vset.pattern.permute.xlu0 0
        %779 = vperm.xlu0 %778, %v737
        %v780 = vpop.permute.xlu0 %779
        %v782 = vmul.f32 %v775, %v770
        %v783 = vmul.f32 %v780, %v771
        %v784 = vpack.c.bf16 %v753, %v751
        %785 = vrot.lane.b32.xlu0 %v611, 64
        %v786 = vpop.permute.xlu0 %785
        %787 = vrot.lane.b32.xlu0 %v612, 64
        %v788 = vpop.permute.xlu0 %787
        %v792 = vsel %vm542, %v784, 0
        %794 = vmatprep.subr.bf16.mxu0 0
        %795 = vmatpush1.bf16.msra.mxu0 %v786
        %796 = vmatprep.subr.bf16.mxu0 0
        %797 = vmatpush1.bf16.msra.mxu0 %v788
        %798 = vmatprep.subr.bf16.mxu0 0
        %799 = vmatpush1.bf16.msra.mxu0 0
        %800 = vmatprep.subr.bf16.mxu0 0
        %801 = vmatpush1.bf16.msra.mxu0 0
        %802 = vmatprep.subr.bf16.mxu0 0
        %803 = vmatpush1.bf16.msra.mxu0 0
        %804 = vmatprep.subr.bf16.mxu0 0
        %805 = vmatpush1.bf16.msra.mxu0 0
        %806 = vmatprep.subr.bf16.mxu0 0
        %807 = vmatpush1.bf16.msra.mxu0 0
        %808 = vmatprep.subr.bf16.mxu0 0
        %809 = vmatpush1.bf16.msra.mxu0 0
        %810 = vmatprep.subr.bf16.mxu0 0
        %811 = vmatpush1.bf16.msra.mxu0 0
        %812 = vmatprep.subr.bf16.mxu0 0
        %813 = vmatpush1.bf16.msra.mxu0 0
        %814 = vmatprep.subr.bf16.mxu0 0
        %815 = vmatpush1.bf16.msra.mxu0 0
        %816 = vmatprep.subr.bf16.mxu0 0
        %817 = vmatpush1.bf16.msra.mxu0 0
        %818 = vmatprep.subr.bf16.mxu0 0
        %819 = vmatpush1.bf16.msra.mxu0 0
        %820 = vmatprep.subr.bf16.mxu0 0
        %821 = vmatpush1.bf16.msra.mxu0 0
        %822 = vmatprep.subr.bf16.mxu0 0
        %823 = vmatpush1.bf16.msra.mxu0 0
        %824 = vmatprep.subr.bf16.mxu0 0
        %825 = vmatpush1.bf16.msra.mxu0 0
        %826 = vmatprep.mubr.bf16.mxu0 0
        %827 = vmatmul.mubr.bf16.gmra.mrb[0].mxu0 %v792
        %v828 = vpop.f32.mrb[0].mxu0
        %v829 = vadd.f32 0.0, %v828
        %v830 = vpop.f32.mrb[0].mxu0
        %v831 = vpop.f32.mrb[0].mxu0
        %v832 = vadd.f32 0.0, %v831
        %v833 = vpop.f32.mrb[0].mxu0
        %834 = vdwg.mxu0
        %v835 = vadd.f32 %v782, %v829
        %v836 = vadd.f32 %v783, %v832
        %837 = vst.msk [vmem:[%s769] sm:$0xff] %vm489, %v835
        %838 = vst.msk [vmem:[%s769 + $0x8] sm:$0xff] %vm489, %v836
        %839 = vst.msk [vmem:[%s721] sm:$0xff] %vm585, %v730
        %840 = vst.msk [vmem:[%s721 + $0x8] sm:$0xff] %vm585, %v731
        %p841 = scmp.eq.s32.totalorder %s23, 1
        // Predicated region
        $region160: #{joint_block_forward.7} parent=142 // pred_check
          %p842 = pneg %p841
        $region161: #{joint_block_forward.7} parent=142 // pred_check_branch
          %844 = sbr.rel (%p842) target = $region163
        $region162: #{joint_block_forward.7} parent=142 // pred_region
          %v845 = vld [vmem:[#allocation3] sm:$0xff]
          %v846 = vld [vmem:[#allocation3 + $0x8] sm:$0xff]
          %v847 = vrcp.pop %v845
          %v848 = vrcp.pop %v846
          %v849 = vld [vmem:[#allocation4] sm:$0xff]
          %v850 = vld [vmem:[#allocation4 + $0x8] sm:$0xff]
          %852 = vset.pattern.permute.xlu0 0
          %853 = vperm.xlu0 %852, %v847
          %v854 = vpop.permute.xlu0 %853
          %857 = vset.pattern.permute.xlu0 0
          %858 = vperm.xlu0 %857, %v848
          %v859 = vpop.permute.xlu0 %858
          %v861 = vmul.f32 %v849, %v854
          %v862 = vmul.f32 %v850, %v859
          %v863 = vld [vmem:[%s754] sm:$0xff]
          %v864 = vld [vmem:[%s754 + $0x8] sm:$0xff]
          %v865 = vrcp.pop %v863
          %v866 = vrcp.pop %v864
          %v867 = vld [vmem:[%s769] sm:$0xff]
          %v868 = vld [vmem:[%s769 + $0x8] sm:$0xff]
          %870 = vset.pattern.permute.xlu0 0
          %871 = vperm.xlu0 %870, %v865
          %v872 = vpop.permute.xlu0 %871
          %875 = vset.pattern.permute.xlu0 0
          %876 = vperm.xlu0 %875, %v866
          %v877 = vpop.permute.xlu0 %876
          %v879 = vmul.f32 %v867, %v872
          %v880 = vmul.f32 %v868, %v877
          %883 = vrot.lane.b32.xlu0 %v879, 64
          %v884 = vpop.permute.xlu0 %883
          %885 = vrot.lane.b32.xlu0 %v880, 64
          %v886 = vpop.permute.xlu0 %885
          %v889 = vsel %vm489, %v861, %v884
          %v890 = vsel %vm489, %v862, %v886
          %v891 = vpack.c.bf16 %v890, %v889
          %v893 = vunpack.c.l.b16 %v891
          %v894 = vunpack.c.h.b16 %v891
          %v895 = vpack.c.b16 %v893, %v893
          %v896 = vpack.c.b16 %v894, %v894
          %899 = vst [vmem:[%s443] sm:$0xf] %v895
          %900 = vst [vmem:[%s443 + $0x4] sm:$0xf] %v896
        $region163: #{joint_block_forward.7} parent=142 // pred_fallthru
          _
        %s901 = smul.u32 2, %s22
        %p902 = scmp.lt.s32.totalorder %s20, 1
        %s903 = scalar_select %p902, %s20, 1
        %p904 = scmp.lt.s32.totalorder %s901, 7
        %s905 = scalar_select %p904, %s901, 7
        %p906 = scmp.lt.s32.totalorder %s21, 0
        %s907 = scalar_select %p906, %s21, 0
        %s908 = sadd.s32 %s907, %s905
        %s909 = smul.addr %s903, 8
        %s910 = sadd.s32 %s908, %s909
        %s911 = smul.addr %s910, 4
        %s912 = scalar_lea.vmem %s3, %s911
        // Predicated region
        $region164: #{joint_block_forward.7} parent=142 // pred_check
          %p913 = pneg %p156
        $region165: #{joint_block_forward.7} parent=142 // pred_check_branch
          %915 = sbr.rel (%p913) target = $region167
        $region166: #{joint_block_forward.7} parent=142 // pred_region
          %s916 = smul.u32 2, %s22
        $region167: #{joint_block_forward.7} parent=142 // pred_fallthru
          _
      $region143: #{joint_block_forward.7} parent=5 // pred_fallthru
        _
      %p917 = scmp.le.s32.totalorder 2, %s9
      // Predicated region
      $region168: #{joint_block_forward.7} parent=5 // pred_check
        %p918 = pneg %p917
      $region169: #{joint_block_forward.7} parent=5 // pred_check_branch
        %920 = sbr.rel (%p918) target = $region171
      $region170: #{joint_block_forward.7} parent=5 // pred_region
        %s921 = ssub.s32 %s9, 2
        // Predicated region
        $region172: #{joint_block_forward.7} parent=170 // pred_check
          %p922 = pneg %p162
        $region173: #{joint_block_forward.7} parent=170 // pred_check_branch
          %924 = sbr.rel (%p922) target = $region175
        $region174: #{joint_block_forward.7} parent=170 // pred_region
          %s925 = smul.u32 2, %s26
          %p926 = scmp.lt.s32.totalorder %s24, 1
          %s927 = scalar_select %p926, %s24, 1
          %p928 = scmp.lt.s32.totalorder %s925, 7
          %s929 = scalar_select %p928, %s925, 7
          %p930 = scmp.lt.s32.totalorder %s25, 0
          %s931 = scalar_select %p930, %s25, 0
          %s932 = sadd.s32 %s931, %s929
          %s933 = smul.addr %s927, 8
          %s934 = sadd.s32 %s932, %s933
          %s935 = smul.addr %s934, 4
          %s936 = scalar_lea.vmem %s3, %s935
        $region175: #{joint_block_forward.7} parent=170 // pred_fallthru
          _
      $region171: #{joint_block_forward.7} parent=5 // pred_fallthru
        _
    $region6: #{joint_block_forward.7} parent=1 // loop_footer
      %s13 = sadd.s32 1, %s9
    $region7: #{joint_block_forward.7} parent=1 // loop_footer_branch
      %8 = sbr.rel target = $region3
    $region8: #{joint_block_forward.7} parent=1 // loop_exit
      _

// kernel: joint_block_forward.8
$region0: #{joint_block_forward.8}
  #allocation0 [shape = 'u32[]', space=smem, size = 0x4, offset = 0x4, fixed_abs, tag = 'smem constant byte address 0x4 - core index']
  #allocation1 [shape = 'u32[144,128]{1,0:T(1,128)}', space=vmem, size = 0x12000, scoped, tag = 'internal scratch']
  #allocation2 [shape = 'f32[16,128]{1,0:T(8,128)}', space=vmem, size = 0x2000, scoped, tag = 'scratch operand']
  #allocation3 [shape = 'bf16[16,128]{1,0:T(16,128)(2,1)}', space=vmem, size = 0x1000, scoped, tag = 'scratch operand']
  #allocation4 [shape = 'f32[16,128]{1,0:T(8,128)}', space=vmem, size = 0x2000, scoped, tag = 'scratch operand']
  %s0 = inlined_call_operand.vmem [shape: bf16[2,64,128], index: 0, kind: input, shape index: {}]
  %s1 = inlined_call_operand.vmem [shape: f32[2,16,128], index: 1, kind: input, shape index: {}]
  %s2 = inlined_call_operand.vmem [shape: f32[2,2,6,128], index: 2, kind: input, shape index: {}]
  %s3 = inlined_call_operand.vmem [shape: bf16[128,128], index: 3, kind: input, shape index: {}]
  %s4 = inlined_call_operand.vmem [shape: f32[1,128], index: 4, kind: input, shape index: {}]
  %s5 = inlined_call_operand.vmem [shape: bf16[128,512], index: 5, kind: input, shape index: {}]
  %s6 = inlined_call_operand.vmem [shape: f32[1,512], index: 6, kind: input, shape index: {}]
  %s7 = inlined_call_operand.vmem [shape: bf16[512,128], index: 7, kind: input, shape index: {}]
  %s8 = inlined_call_operand.vmem [shape: f32[1,128], index: 8, kind: input, shape index: {}]
  %s9 = inlined_call_operand.hbm [shape: f32[2,16,128], index: 9, kind: output, shape index: {}]
  %s10 = sld [smem:[#allocation0]]
  $region118: #{joint_block_forward.8} parent=0
    _
  %s12 = ssub.s32 1, %s10
  %s13 = scalar_select 0, %s12, %s10
  $region1: #{joint_block_forward.8} parent=0
    #allocation5 [shape = 'u8[65536]{0}', space=vmem, size = 0x10000, scoped, tag = 'input window, operand 5']
    #allocation6 [shape = 'u8[16384]{0}', space=vmem, size = 0x4000, scoped, tag = 'output window, operand 0']
    #allocation7 [shape = 's32[2]{0}', space=sflag, size = 0x8, scoped, tag = 'scoped memory for joint_block_forward.8']
    %14 = vsyncpa [#allocation7], 0
    %s15 = scalar_lea.sflag [#allocation7], 1
    %16 = vsyncpa %s15, 0
    loop: start=0, step=1, limit=10
    $region2: #{joint_block_forward.8} parent=1 // loop_pre_header
      _
    $region3: #{joint_block_forward.8} parent=1 // loop_header
      %s18 = sphi 0, %s22
      %p19 = scmp.ge.s32.totalorder %s18, 10
      %s25 = sphi 0, %s44
      %s26 = sphi 0, %s40
      %s27 = sphi 0, %s36
      %s28 = sphi 0, %s25
      %s29 = sphi 0, %s26
      %s30 = sphi 0, %s27
      %s31 = sphi 0, %s28
      %s32 = sphi 0, %s29
      %s33 = sphi 0, %s30
      %s49 = sphi 0, %s51
      %s52 = sphi 0, %s49
      %s53 = sphi 0, %s52
      %s69 = sphi 0, %s53
      %s77 = sphi 0, %s79
      %s80 = sphi 0, %s77
      %s81 = sphi 0, %s80
      %s97 = sphi 0, %s81
      %s103 = sphi 0, %s105
      %s106 = sphi 0, %s103
      %s107 = sphi 0, %s106
      %s123 = sphi 0, %s107
      %s127 = sphi 0, %s127
      %s129 = sphi 0, %s127
      %s130 = sphi 0, %s129
      %s144 = sphi 0, %s130
      %s148 = sphi 0, %s148
      %s150 = sphi 0, %s148
      %s151 = sphi 0, %s150
      %s165 = sphi 0, %s151
      %s171 = sphi 0, %s173
      %s174 = sphi 0, %s171
      %s175 = sphi 0, %s174
      %s191 = sphi 0, %s175
      %s197 = sphi 0, %s199
      %s200 = sphi 0, %s197
      %s201 = sphi 0, %s200
      %s217 = sphi 0, %s201
      %s223 = sphi 0, %s225
      %s226 = sphi 0, %s223
      %s227 = sphi 0, %s226
      %s243 = sphi 0, %s227
      %s247 = sphi 0, %s247
      %s249 = sphi 0, %s247
      %s250 = sphi 0, %s249
      %s264 = sphi 0, %s250
      %s272 = sphi 0, %s274
      %s275 = sphi 0, %s272
      %s276 = sphi 0, %s275
      %s292 = sphi 0, %s276
    $region4: #{joint_block_forward.8} parent=1 // loop_header_branch
      %21 = sbr.rel (%p19) target = $region8
    $region5: #{joint_block_forward.8} parent=1 // loop_body
      %s23 = ssub.s32 %s18, 1
      %s24 = ssub.s32 %s18, 2
      %s34 = sadd.s32 1, %s27
      %p35 = scmp.ge.s32.totalorder %s34, 4
      %s36 = scalar_select %p35, 0, %s34
      %s37 = sadd.s32 1, %s26
      %s38 = scalar_select %p35, %s37, %s26
      %p39 = scmp.ge.s32.totalorder %s38, 1
      %s40 = scalar_select %p39, 0, %s38
      %s41 = sadd.s32 1, %s25
      %s42 = scalar_select %p39, %s41, %s25
      %p43 = scmp.ge.s32.totalorder %s42, 2
      %s44 = scalar_select %p43, 0, %s42
      %s45 = ssub.s32 %s25, %s44
      %s46 = ssub.s32 %s26, %s40
      %s47 = sor.u32 %s45, %s46
      %p48 = scmp.eq.s32.totalorder %s47, 0
      %s50 = sadd.s32 %s49, 1
      %s51 = scalar_select %p48, %s49, %s50
      %p54 = pneg %p48
      %p55 = scmp.eq.s32.totalorder %s18, 7
      %p56 = por %p54, %p55
      %p57 = scmp.ne.s32.totalorder %s49, %s52
      %p58 = scmp.eq.s32.totalorder %s18, 0
      %p59 = por %p57, %p58
      %p60 = scmp.ne.s32.totalorder %s49, %s52
      %p61 = scmp.eq.s32.totalorder %s23, 7
      %p62 = por %p60, %p61
      %p63 = scmp.ne.s32.totalorder %s52, %s53
      %p64 = scmp.eq.s32.totalorder %s23, 0
      %p65 = por %p63, %p64
      %p66 = scmp.ne.s32.totalorder %s52, %s53
      %p67 = scmp.eq.s32.totalorder %s24, 7
      %p68 = por %p66, %p67
      %p70 = scmp.ne.s32.totalorder %s53, %s69
      %p71 = scmp.eq.s32.totalorder %s24, 0
      %p72 = por %p70, %p71
      %s73 = ssub.s32 %s25, %s44
      %s74 = ssub.s32 %s26, %s40
      %s75 = sor.u32 %s73, %s74
      %p76 = scmp.eq.s32.totalorder %s75, 0
      %s78 = sadd.s32 %s77, 1
      %s79 = scalar_select %p76, %s77, %s78
      %p82 = pneg %p76
      %p83 = scmp.eq.s32.totalorder %s18, 7
      %p84 = por %p82, %p83
      %p85 = scmp.ne.s32.totalorder %s77, %s80
      %p86 = scmp.eq.s32.totalorder %s18, 0
      %p87 = por %p85, %p86
      %p88 = scmp.ne.s32.totalorder %s77, %s80
      %p89 = scmp.eq.s32.totalorder %s23, 7
      %p90 = por %p88, %p89
      %p91 = scmp.ne.s32.totalorder %s80, %s81
      %p92 = scmp.eq.s32.totalorder %s23, 0
      %p93 = por %p91, %p92
      %p94 = scmp.ne.s32.totalorder %s80, %s81
      %p95 = scmp.eq.s32.totalorder %s24, 7
      %p96 = por %p94, %p95
      %p98 = scmp.ne.s32.totalorder %s81, %s97
      %p99 = scmp.eq.s32.totalorder %s24, 0
      %p100 = por %p98, %p99
      %s101 = ssub.s32 %s25, %s44
      %p102 = scmp.eq.s32.totalorder %s101, 0
      %s104 = sadd.s32 %s103, 1
      %s105 = scalar_select %p102, %s103, %s104
      %p108 = pneg %p102
      %p109 = scmp.eq.s32.totalorder %s18, 7
      %p110 = por %p108, %p109
      %p111 = scmp.ne.s32.totalorder %s103, %s106
      %p112 = scmp.eq.s32.totalorder %s18, 0
      %p113 = por %p111, %p112
      %p114 = scmp.ne.s32.totalorder %s103, %s106
      %p115 = scmp.eq.s32.totalorder %s23, 7
      %p116 = por %p114, %p115
      %p117 = scmp.ne.s32.totalorder %s106, %s107
      %p118 = scmp.eq.s32.totalorder %s23, 0
      %p119 = por %p117, %p118
      %p120 = scmp.ne.s32.totalorder %s106, %s107
      %p121 = scmp.eq.s32.totalorder %s24, 7
      %p122 = por %p120, %p121
      %p124 = scmp.ne.s32.totalorder %s107, %s123
      %p125 = scmp.eq.s32.totalorder %s24, 0
      %p126 = por %p124, %p125
      %s128 = sadd.s32 %s127, 1
      %p131 = scmp.eq.s32.totalorder %s18, 7
      %p132 = scmp.ne.s32.totalorder %s127, %s129
      %p133 = scmp.eq.s32.totalorder %s18, 0
      %p134 = por %p132, %p133
      %p135 = scmp.ne.s32.totalorder %s127, %s129
      %p136 = scmp.eq.s32.totalorder %s23, 7
      %p137 = por %p135, %p136
      %p138 = scmp.ne.s32.totalorder %s129, %s130
      %p139 = scmp.eq.s32.totalorder %s23, 0
      %p140 = por %p138, %p139
      %p141 = scmp.ne.s32.totalorder %s129, %s130
      %p142 = scmp.eq.s32.totalorder %s24, 7
      %p143 = por %p141, %p142
      %p145 = scmp.ne.s32.totalorder %s130, %s144
      %p146 = scmp.eq.s32.totalorder %s24, 0
      %p147 = por %p145, %p146
      %s149 = sadd.s32 %s148, 1
      %p152 = scmp.eq.s32.totalorder %s18, 7
      %p153 = scmp.ne.s32.totalorder %s148, %s150
      %p154 = scmp.eq.s32.totalorder %s18, 0
      %p155 = por %p153, %p154
      %p156 = scmp.ne.s32.totalorder %s148, %s150
      %p157 = scmp.eq.s32.totalorder %s23, 7
      %p158 = por %p156, %p157
      %p159 = scmp.ne.s32.totalorder %s150, %s151
      %p160 = scmp.eq.s32.totalorder %s23, 0
      %p161 = por %p159, %p160
      %p162 = scmp.ne.s32.totalorder %s150, %s151
      %p163 = scmp.eq.s32.totalorder %s24, 7
      %p164 = por %p162, %p163
      %p166 = scmp.ne.s32.totalorder %s151, %s165
      %p167 = scmp.eq.s32.totalorder %s24, 0
      %p168 = por %p166, %p167
      %s169 = ssub.s32 %s27, %s36
      %p170 = scmp.eq.s32.totalorder %s169, 0
      %s172 = sadd.s32 %s171, 1
      %s173 = scalar_select %p170, %s171, %s172
      %p176 = pneg %p170
      %p177 = scmp.eq.s32.totalorder %s18, 7
      %p178 = por %p176, %p177
      %p179 = scmp.ne.s32.totalorder %s171, %s174
      %p180 = scmp.eq.s32.totalorder %s18, 0
      %p181 = por %p179, %p180
      %p182 = scmp.ne.s32.totalorder %s171, %s174
      %p183 = scmp.eq.s32.totalorder %s23, 7
      %p184 = por %p182, %p183
      %p185 = scmp.ne.s32.totalorder %s174, %s175
      %p186 = scmp.eq.s32.totalorder %s23, 0
      %p187 = por %p185, %p186
      %p188 = scmp.ne.s32.totalorder %s174, %s175
      %p189 = scmp.eq.s32.totalorder %s24, 7
      %p190 = por %p188, %p189
      %p192 = scmp.ne.s32.totalorder %s175, %s191
      %p193 = scmp.eq.s32.totalorder %s24, 0
      %p194 = por %p192, %p193
      %s195 = ssub.s32 %s27, %s36
      %p196 = scmp.eq.s32.totalorder %s195, 0
      %s198 = sadd.s32 %s197, 1
      %s199 = scalar_select %p196, %s197, %s198
      %p202 = pneg %p196
      %p203 = scmp.eq.s32.totalorder %s18, 7
      %p204 = por %p202, %p203
      %p205 = scmp.ne.s32.totalorder %s197, %s200
      %p206 = scmp.eq.s32.totalorder %s18, 0
      %p207 = por %p205, %p206
      %p208 = scmp.ne.s32.totalorder %s197, %s200
      %p209 = scmp.eq.s32.totalorder %s23, 7
      %p210 = por %p208, %p209
      %p211 = scmp.ne.s32.totalorder %s200, %s201
      %p212 = scmp.eq.s32.totalorder %s23, 0
      %p213 = por %p211, %p212
      %p214 = scmp.ne.s32.totalorder %s200, %s201
      %p215 = scmp.eq.s32.totalorder %s24, 7
      %p216 = por %p214, %p215
      %p218 = scmp.ne.s32.totalorder %s201, %s217
      %p219 = scmp.eq.s32.totalorder %s24, 0
      %p220 = por %p218, %p219
      %s221 = ssub.s32 %s27, %s36
      %p222 = scmp.eq.s32.totalorder %s221, 0
      %s224 = sadd.s32 %s223, 1
      %s225 = scalar_select %p222, %s223, %s224
      %p228 = pneg %p222
      %p229 = scmp.eq.s32.totalorder %s18, 7
      %p230 = por %p228, %p229
      %p231 = scmp.ne.s32.totalorder %s223, %s226
      %p232 = scmp.eq.s32.totalorder %s18, 0
      %p233 = por %p231, %p232
      %p234 = scmp.ne.s32.totalorder %s223, %s226
      %p235 = scmp.eq.s32.totalorder %s23, 7
      %p236 = por %p234, %p235
      %p237 = scmp.ne.s32.totalorder %s226, %s227
      %p238 = scmp.eq.s32.totalorder %s23, 0
      %p239 = por %p237, %p238
      %p240 = scmp.ne.s32.totalorder %s226, %s227
      %p241 = scmp.eq.s32.totalorder %s24, 7
      %p242 = por %p240, %p241
      %p244 = scmp.ne.s32.totalorder %s227, %s243
      %p245 = scmp.eq.s32.totalorder %s24, 0
      %p246 = por %p244, %p245
      %s248 = sadd.s32 %s247, 1
      %p251 = scmp.eq.s32.totalorder %s18, 7
      %p252 = scmp.ne.s32.totalorder %s247, %s249
      %p253 = scmp.eq.s32.totalorder %s18, 0
      %p254 = por %p252, %p253
      %p255 = scmp.ne.s32.totalorder %s247, %s249
      %p256 = scmp.eq.s32.totalorder %s23, 7
      %p257 = por %p255, %p256
      %p258 = scmp.ne.s32.totalorder %s249, %s250
      %p259 = scmp.eq.s32.totalorder %s23, 0
      %p260 = por %p258, %p259
      %p261 = scmp.ne.s32.totalorder %s249, %s250
      %p262 = scmp.eq.s32.totalorder %s24, 7
      %p263 = por %p261, %p262
      %p265 = scmp.ne.s32.totalorder %s250, %s264
      %p266 = scmp.eq.s32.totalorder %s24, 0
      %p267 = por %p265, %p266
      %s268 = ssub.s32 %s25, %s44
      %s269 = ssub.s32 %s26, %s40
      %s270 = sor.u32 %s268, %s269
      %p271 = scmp.eq.s32.totalorder %s270, 0
      %s273 = sadd.s32 %s272, 1
      %s274 = scalar_select %p271, %s272, %s273
      %p277 = pneg %p271
      %p278 = scmp.eq.s32.totalorder %s18, 7
      %p279 = por %p277, %p278
      %p280 = scmp.ne.s32.totalorder %s272, %s275
      %p281 = scmp.eq.s32.totalorder %s18, 0
      %p282 = por %p280, %p281
      %p283 = scmp.ne.s32.totalorder %s272, %s275
      %p284 = scmp.eq.s32.totalorder %s23, 7
      %p285 = por %p283, %p284
      %p286 = scmp.ne.s32.totalorder %s275, %s276
      %p287 = scmp.eq.s32.totalorder %s23, 0
      %p288 = por %p286, %p287
      %p289 = scmp.ne.s32.totalorder %s275, %s276
      %p290 = scmp.eq.s32.totalorder %s24, 7
      %p291 = por %p289, %p290
      %p293 = scmp.ne.s32.totalorder %s276, %s292
      %p294 = scmp.eq.s32.totalorder %s24, 0
      %p295 = por %p293, %p294
      %p296 = scmp.le.s32.totalorder 1, %s18
      %p297 = scmp.lt.s32.totalorder %s18, 9
      %p298 = pnand %p296, %p297
      %p299 = pneg %p298
      // Predicated region
      $region9: #{joint_block_forward.8} parent=5 // pred_check
        _
      $region10: #{joint_block_forward.8} parent=5 // pred_check_branch
        %301 = sbr.rel (%p298) target = $region12
      $region11: #{joint_block_forward.8} parent=5 // pred_region
        %s302 = ssub.s32 %s18, 1
        // Predicated region
        $region13: #{joint_block_forward.8} parent=11 // pred_check
          %p303 = pneg %p140
        $region14: #{joint_block_forward.8} parent=11 // pred_check_branch
          %305 = sbr.rel (%p303) target = $region16
        $region15: #{joint_block_forward.8} parent=11 // pred_region
          _
        $region16: #{joint_block_forward.8} parent=11 // pred_fallthru
          _
        // Predicated region
        $region17: #{joint_block_forward.8} parent=11 // pred_check
          %p306 = pneg %p161
        $region18: #{joint_block_forward.8} parent=11 // pred_check_branch
          %308 = sbr.rel (%p306) target = $region20
        $region19: #{joint_block_forward.8} parent=11 // pred_region
          _
        $region20: #{joint_block_forward.8} parent=11 // pred_fallthru
          _
        // Predicated region
        $region21: #{joint_block_forward.8} parent=11 // pred_check
          %p309 = pneg %p260
        $region22: #{joint_block_forward.8} parent=11 // pred_check_branch
          %311 = sbr.rel (%p309) target = $region24
        $region23: #{joint_block_forward.8} parent=11 // pred_region
          _
        $region24: #{joint_block_forward.8} parent=11 // pred_fallthru
          _
      $region12: #{joint_block_forward.8} parent=5 // pred_fallthru
        _
      %p312 = scmp.lt.s32.totalorder %s18, 8
      // Predicated region
      $region25: #{joint_block_forward.8} parent=5 // pred_check
        %p313 = pneg %p312
      $region26: #{joint_block_forward.8} parent=5 // pred_check_branch
        %315 = sbr.rel (%p313) target = $region28
      $region27: #{joint_block_forward.8} parent=5 // pred_region
        // Predicated region
        $region29: #{joint_block_forward.8} parent=27 // pred_check
          %p316 = pneg %p59
        $region30: #{joint_block_forward.8} parent=27 // pred_check_branch
          %318 = sbr.rel (%p316) target = $region32
        $region31: #{joint_block_forward.8} parent=27 // pred_region
          %s319 = smul.u32 2, %s26
          %p320 = scmp.lt.s32.totalorder %s25, 1
          %s321 = scalar_select %p320, %s25, 1
          %p322 = scmp.lt.s32.totalorder %s319, 7
          %s323 = scalar_select %p322, %s319, 7
          %s324 = smul.addr %s321, 8
          %s325 = sadd.s32 %s323, %s324
          %s326 = smul.addr %s325, 4
          %s327 = scalar_lea.vmem %s0, %s326
          %s328 = smul.u32 2, %s26
        $region32: #{joint_block_forward.8} parent=27 // pred_fallthru
          _
        // Predicated region
        $region33: #{joint_block_forward.8} parent=27 // pred_check
          %p329 = pneg %p87
        $region34: #{joint_block_forward.8} parent=27 // pred_check_branch
          %331 = sbr.rel (%p329) target = $region36
        $region35: #{joint_block_forward.8} parent=27 // pred_region
          %s332 = smul.u32 2, %s26
          %p333 = scmp.lt.s32.totalorder %s25, 1
          %s334 = scalar_select %p333, %s25, 1
          %p335 = scmp.lt.s32.totalorder %s332, 1
          %s336 = scalar_select %p335, %s332, 1
          %s337 = smul.addr %s334, 2
          %s338 = sadd.s32 %s336, %s337
          %s339 = smul.addr %s338, 8
          %s340 = scalar_lea.vmem %s1, %s339
          %s341 = smul.u32 2, %s26
        $region36: #{joint_block_forward.8} parent=27 // pred_fallthru
          _
        // Predicated region
        $region37: #{joint_block_forward.8} parent=27 // pred_check
          %p342 = pneg %p113
        $region38: #{joint_block_forward.8} parent=27 // pred_check_branch
          %344 = sbr.rel (%p342) target = $region40
        $region39: #{joint_block_forward.8} parent=27 // pred_region
          %p345 = scmp.lt.s32.totalorder %s25, 1
          %s346 = scalar_select %p345, %s25, 1
          %s347 = smul.addr %s346, 8
          %s348 = scalar_lea.vmem %s2, %s347
        $region40: #{joint_block_forward.8} parent=27 // pred_fallthru
          _
        // Predicated region
        $region41: #{joint_block_forward.8} parent=27 // pred_check
          %p349 = pneg %p181
        $region42: #{joint_block_forward.8} parent=27 // pred_check_branch
          %351 = sbr.rel (%p349) target = $region44
        $region43: #{joint_block_forward.8} parent=27 // pred_region
          %s352 = sand.u32 %s171, 1
          %s353 = sand.u32 %s171, 1
          %s354 = smul.addr %s353, 64
          %s355 = scalar_lea.vmem [#allocation5], %s354
          %s356 = smul.addr %s27, 4
          %s357 = scalar_lea.vmem %s5, %s356
          // Predicated region
          $region45: #{joint_block_forward.8} parent=43 // pred_check
            _
          $region46: #{joint_block_forward.8} parent=43 // pred_check_branch
            %359 = sbr.rel (0) target = $region48
          $region47: #{joint_block_forward.8} parent=43 // pred_region
            // Predicated region
            $region49: #{joint_block_forward.8} parent=47 // pred_check
              _
            $region50: #{joint_block_forward.8} parent=47 // pred_check_branch
              %361 = sbr.rel target = $region52
            $region51: #{joint_block_forward.8} parent=47 // pred_region
              // Predicated region
              $region64: #{joint_block_forward.8} parent=51 // pred_check
                _
              $region65: #{joint_block_forward.8} parent=51 // pred_check_branch
                %406 = sbr.rel (0) target = $region67
              $region66: #{joint_block_forward.8} parent=51 // pred_region
                loop: start=0, step=1, limit=1
                $region68: #{joint_block_forward.8} parent=66 // loop_pre_header
                  _
                $region69: #{joint_block_forward.8} parent=66 // loop_header
                  %s408 = sphi 0, %s412
                  %p409 = scmp.ge.s32.totalorder %s408, 1
                  %s413 = sphi %s357, %s357
                  %s414 = sphi %s355, %s355
                $region70: #{joint_block_forward.8} parent=66 // loop_header_branch
                  %411 = sbr.rel (%p409) target = $region74
                $region71: #{joint_block_forward.8} parent=66 // loop_body
                  _
                $region72: #{joint_block_forward.8} parent=66 // loop_footer
                  %s412 = sadd.s32 1, %s408
                $region73: #{joint_block_forward.8} parent=66 // loop_footer_branch
                  %407 = sbr.rel target = $region69
                $region74: #{joint_block_forward.8} parent=66 // loop_exit
                  _
                loop: start=0, step=1, limit=1
                $region75: #{joint_block_forward.8} parent=66 // loop_pre_header
                  _
                $region76: #{joint_block_forward.8} parent=66 // loop_header
                  %s417 = sphi 0, %s421
                  %p418 = scmp.ge.s32.totalorder %s417, 1
                  %s422 = sphi %s357, %s357
                  %s423 = sphi %s355, %s355
                $region77: #{joint_block_forward.8} parent=66 // loop_header_branch
                  %420 = sbr.rel (%p418) target = $region81
                $region78: #{joint_block_forward.8} parent=66 // loop_body
                  %v424 = vld [vmem:[%s422] sm:$0xf]
                  %425 = vst [vmem:[%s423] sm:$0xf] %v424
                  %v426 = vld [vmem:[%s422 + $0x10] sm:$0xf]
                  %427 = vst [vmem:[%s423 + $0x4] sm:$0xf] %v426
                  %v428 = vld [vmem:[%s422 + $0x20] sm:$0xf]
                  %429 = vst [vmem:[%s423 + $0x8] sm:$0xf] %v428
                  %v430 = vld [vmem:[%s422 + $0x30] sm:$0xf]
                  %431 = vst [vmem:[%s423 + $0xc] sm:$0xf] %v430
                  %v432 = vld [vmem:[%s422 + $0x40] sm:$0xf]
                  %433 = vst [vmem:[%s423 + $0x10] sm:$0xf] %v432
                  %v434 = vld [vmem:[%s422 + $0x50] sm:$0xf]
                  %435 = vst [vmem:[%s423 + $0x14] sm:$0xf] %v434
                  %v436 = vld [vmem:[%s422 + $0x60] sm:$0xf]
                  %437 = vst [vmem:[%s423 + $0x18] sm:$0xf] %v436
                  %v438 = vld [vmem:[%s422 + $0x70] sm:$0xf]
                  %439 = vst [vmem:[%s423 + $0x1c] sm:$0xf] %v438
                  %v440 = vld [vmem:[%s422 + $0x80] sm:$0xf]
                  %441 = vst [vmem:[%s423 + $0x20] sm:$0xf] %v440
                  %v442 = vld [vmem:[%s422 + $0x90] sm:$0xf]
                  %443 = vst [vmem:[%s423 + $0x24] sm:$0xf] %v442
                  %v444 = vld [vmem:[%s422 + $0xa0] sm:$0xf]
                  %445 = vst [vmem:[%s423 + $0x28] sm:$0xf] %v444
                  %v446 = vld [vmem:[%s422 + $0xb0] sm:$0xf]
                  %447 = vst [vmem:[%s423 + $0x2c] sm:$0xf] %v446
                  %v448 = vld [vmem:[%s422 + $0xc0] sm:$0xf]
                  %449 = vst [vmem:[%s423 + $0x30] sm:$0xf] %v448
                  %v450 = vld [vmem:[%s422 + $0xd0] sm:$0xf]
                  %451 = vst [vmem:[%s423 + $0x34] sm:$0xf] %v450
                  %v452 = vld [vmem:[%s422 + $0xe0] sm:$0xf]
                  %453 = vst [vmem:[%s423 + $0x38] sm:$0xf] %v452
                  %v454 = vld [vmem:[%s422 + $0xf0] sm:$0xf]
                  %455 = vst [vmem:[%s423 + $0x3c] sm:$0xf] %v454
                $region79: #{joint_block_forward.8} parent=66 // loop_footer
                  %s421 = sadd.s32 1, %s417
                $region80: #{joint_block_forward.8} parent=66 // loop_footer_branch
                  %416 = sbr.rel target = $region76
                $region81: #{joint_block_forward.8} parent=66 // loop_exit
                  _
              $region67: #{joint_block_forward.8} parent=51 // pred_fallthru
                _
            $region52: #{joint_block_forward.8} parent=47 // pred_fallthru
              _
            // Predicated region
            $region53: #{joint_block_forward.8} parent=47 // pred_check
              _
            $region54: #{joint_block_forward.8} parent=47 // pred_check_branch
              %363 = sbr.rel (0) target = $region56
            $region55: #{joint_block_forward.8} parent=47 // pred_region
              loop: start=0, step=1, limit=1
              $region57: #{joint_block_forward.8} parent=55 // loop_pre_header
                _
              $region58: #{joint_block_forward.8} parent=55 // loop_header
                %s366 = sphi 0, %s370
                %p367 = scmp.ge.s32.totalorder %s366, 1
                %s371 = sphi %s357, %s357
                %s372 = sphi %s355, %s355
              $region59: #{joint_block_forward.8} parent=55 // loop_header_branch
                %369 = sbr.rel (%p367) target = $region63
              $region60: #{joint_block_forward.8} parent=55 // loop_body
                %v373 = vld [vmem:[%s371] sm:$0xf]
                %374 = vst [vmem:[%s372] sm:$0xf] %v373
                %v375 = vld [vmem:[%s371 + $0x10] sm:$0xf]
                %376 = vst [vmem:[%s372 + $0x4] sm:$0xf] %v375
                %v377 = vld [vmem:[%s371 + $0x20] sm:$0xf]
                %378 = vst [vmem:[%s372 + $0x8] sm:$0xf] %v377
                %v379 = vld [vmem:[%s371 + $0x30] sm:$0xf]
                %380 = vst [vmem:[%s372 + $0xc] sm:$0xf] %v379
                %v381 = vld [vmem:[%s371 + $0x40] sm:$0xf]
                %382 = vst [vmem:[%s372 + $0x10] sm:$0xf] %v381
                %v383 = vld [vmem:[%s371 + $0x50] sm:$0xf]
                %384 = vst [vmem:[%s372 + $0x14] sm:$0xf] %v383
                %v385 = vld [vmem:[%s371 + $0x60] sm:$0xf]
                %386 = vst [vmem:[%s372 + $0x18] sm:$0xf] %v385
                %v387 = vld [vmem:[%s371 + $0x70] sm:$0xf]
                %388 = vst [vmem:[%s372 + $0x1c] sm:$0xf] %v387
                %v389 = vld [vmem:[%s371 + $0x80] sm:$0xf]
                %390 = vst [vmem:[%s372 + $0x20] sm:$0xf] %v389
                %v391 = vld [vmem:[%s371 + $0x90] sm:$0xf]
                %392 = vst [vmem:[%s372 + $0x24] sm:$0xf] %v391
                %v393 = vld [vmem:[%s371 + $0xa0] sm:$0xf]
                %394 = vst [vmem:[%s372 + $0x28] sm:$0xf] %v393
                %v395 = vld [vmem:[%s371 + $0xb0] sm:$0xf]
                %396 = vst [vmem:[%s372 + $0x2c] sm:$0xf] %v395
                %v397 = vld [vmem:[%s371 + $0xc0] sm:$0xf]
                %398 = vst [vmem:[%s372 + $0x30] sm:$0xf] %v397
                %v399 = vld [vmem:[%s371 + $0xd0] sm:$0xf]
                %400 = vst [vmem:[%s372 + $0x34] sm:$0xf] %v399
                %v401 = vld [vmem:[%s371 + $0xe0] sm:$0xf]
                %402 = vst [vmem:[%s372 + $0x38] sm:$0xf] %v401
                %v403 = vld [vmem:[%s371 + $0xf0] sm:$0xf]
                %404 = vst [vmem:[%s372 + $0x3c] sm:$0xf] %v403
              $region61: #{joint_block_forward.8} parent=55 // loop_footer
                %s370 = sadd.s32 1, %s366
              $region62: #{joint_block_forward.8} parent=55 // loop_footer_branch
                %365 = sbr.rel target = $region58
              $region63: #{joint_block_forward.8} parent=55 // loop_exit
                _
            $region56: #{joint_block_forward.8} parent=47 // pred_fallthru
              _
          $region48: #{joint_block_forward.8} parent=43 // pred_fallthru
            _
          %456 = vnop
        $region44: #{joint_block_forward.8} parent=27 // pred_fallthru
          _
        // Predicated region
        $region82: #{joint_block_forward.8} parent=27 // pred_check
          %p457 = pneg %p207
        $region83: #{joint_block_forward.8} parent=27 // pred_check_branch
          %459 = sbr.rel (%p457) target = $region85
        $region84: #{joint_block_forward.8} parent=27 // pred_region
          %p460 = scmp.lt.s32.totalorder %s27, 3
          %s461 = scalar_select %p460, %s27, 3
          %s462 = scalar_lea.vmem %s6, %s461
        $region85: #{joint_block_forward.8} parent=27 // pred_fallthru
          _
        // Predicated region
        $region86: #{joint_block_forward.8} parent=27 // pred_check
          %p463 = pneg %p233
        $region87: #{joint_block_forward.8} parent=27 // pred_check_branch
          %465 = sbr.rel (%p463) target = $region89
        $region88: #{joint_block_forward.8} parent=27 // pred_region
          %s466 = smul.u32 16, %s27
          %p467 = scmp.lt.s32.totalorder %s466, 63
          %s468 = scalar_select %p467, %s466, 63
          %s469 = smul.addr %s468, 4
          %s470 = scalar_lea.vmem %s7, %s469
          %s471 = smul.u32 16, %s27
        $region89: #{joint_block_forward.8} parent=27 // pred_fallthru
          _
      $region28: #{joint_block_forward.8} parent=5 // pred_fallthru
        _
      %p472 = scmp.le.s32.totalorder 1, %s18
      %p473 = scmp.lt.s32.totalorder %s18, 9
      %p474 = pnand %p472, %p473
      %p475 = pneg %p474
      // Predicated region
      $region90: #{joint_block_forward.8} parent=5 // pred_check
        _
      $region91: #{joint_block_forward.8} parent=5 // pred_check_branch
        %477 = sbr.rel (%p474) target = $region93
      $region92: #{joint_block_forward.8} parent=5 // pred_region
        %s478 = ssub.s32 %s18, 1
        %s479 = sand.u32 %s174, 1
        %s480 = sand.u32 %s174, 1
        %s481 = smul.addr %s480, 64
        %s482 = scalar_lea.vmem [#allocation5], %s481
        // Predicated region
        $region94: #{joint_block_forward.8} parent=92 // pred_check
          %p483 = pneg %p187
        $region95: #{joint_block_forward.8} parent=92 // pred_check_branch
          %485 = sbr.rel (%p483) target = $region97
        $region96: #{joint_block_forward.8} parent=92 // pred_region
          _
        $region97: #{joint_block_forward.8} parent=92 // pred_fallthru
          _
        %s486 = smul.u32 2, %s29
        %p487 = scmp.lt.s32.totalorder %s28, 1
        %s488 = scalar_select %p487, %s28, 1
        %p489 = scmp.lt.s32.totalorder %s486, 7
        %s490 = scalar_select %p489, %s486, 7
        %s491 = smul.addr %s488, 8
        %s492 = sadd.s32 %s490, %s491
        %s493 = smul.addr %s492, 4
        %s494 = scalar_lea.vmem %s0, %s493
        %p495 = pneg %p65
        %p496 = pneg %p62
        %s497 = smul.u32 2, %s29
        %p498 = scmp.lt.s32.totalorder %s28, 1
        %s499 = scalar_select %p498, %s28, 1
        %p500 = scmp.lt.s32.totalorder %s497, 1
        %s501 = scalar_select %p500, %s497, 1
        %s502 = smul.addr %s499, 2
        %s503 = sadd.s32 %s501, %s502
        %s504 = smul.addr %s503, 8
        %s505 = scalar_lea.vmem %s1, %s504
        %p506 = pneg %p93
        %p507 = pneg %p90
        %p508 = scmp.lt.s32.totalorder %s28, 1
        %s509 = scalar_select %p508, %s28, 1
        %s510 = smul.addr %s509, 8
        %s511 = scalar_lea.vmem %s2, %s510
        %p512 = pneg %p119
        %p513 = pneg %p116
        %p514 = pneg %p140
        %p515 = pneg %p137
        %p516 = pneg %p161
        %p517 = pneg %p158
        %s518 = sand.u32 %s174, 1
        %s519 = sand.u32 %s174, 1
        %s520 = smul.addr %s519, 64
        %s521 = scalar_lea.vmem [#allocation5], %s520
        %p522 = pneg %p187
        %p523 = pneg %p184
        %p524 = scmp.lt.s32.totalorder %s30, 3
        %s525 = scalar_select %p524, %s30, 3
        %s526 = scalar_lea.vmem %s6, %s525
        %p527 = pneg %p213
        %p528 = pneg %p210
        %s529 = smul.u32 16, %s30
        %p530 = scmp.lt.s32.totalorder %s529, 63
        %s531 = scalar_select %p530, %s529, 63
        %s532 = smul.addr %s531, 4
        %s533 = scalar_lea.vmem %s7, %s532
        %p534 = pneg %p239
        %p535 = pneg %p236
        %p536 = pneg %p260
        %p537 = pneg %p257
        %p538 = pneg %p288
        %p539 = pneg %p285
        %s540 = sand.u32 %s275, 1
        %s541 = scalar_lea.sflag [#allocation7], %s540
        %s542 = sand.u32 %s275, 1
        %s543 = smul.addr %s542, 16
        %s544 = scalar_lea.vmem [#allocation6], %s543
        %s545 = smul.u32 2, %s29
        %p546 = scmp.lt.s32.totalorder %s28, 1
        %s547 = scalar_select %p546, %s28, 1
        %p548 = scmp.lt.s32.totalorder %s545, 7
        %s549 = scalar_select %p548, %s545, 7
        %s550 = smul.addr %s547, 8
        %s551 = sadd.s32 %s549, %s550
        %s552 = smul.addr %s551, 4
        %s553 = scalar_lea.vmem %s0, %s552
        %s554 = smul.u32 2, %s29
        %s555 = smul.u32 2, %s29
        %p556 = scmp.lt.s32.totalorder %s28, 1
        %s557 = scalar_select %p556, %s28, 1
        %p558 = scmp.lt.s32.totalorder %s555, 1
        %s559 = scalar_select %p558, %s555, 1
        %s560 = smul.addr %s557, 2
        %s561 = sadd.s32 %s559, %s560
        %s562 = smul.addr %s561, 8
        %s563 = scalar_lea.vmem %s1, %s562
        %s564 = smul.u32 2, %s29
        %p565 = scmp.lt.s32.totalorder %s28, 1
        %s566 = scalar_select %p565, %s28, 1
        %s567 = smul.addr %s566, 8
        %s568 = scalar_lea.vmem %s2, %s567
        %p569 = scmp.lt.s32.totalorder %s30, 3
        %s570 = scalar_select %p569, %s30, 3
        %s571 = scalar_lea.vmem %s6, %s570
        %s572 = smul.u32 16, %s30
        %p573 = scmp.lt.s32.totalorder %s572, 63
        %s574 = scalar_select %p573, %s572, 63
        %s575 = smul.addr %s574, 4
        %s576 = scalar_lea.vmem %s7, %s575
        %s577 = smul.u32 16, %s30
        %s578 = smul.u32 2, %s29
        %p580 = scmp.eq.s32.totalorder %s30, 0
        // Predicated region
        $region98: #{joint_block_forward.8} parent=92 // pred_check
          %p581 = pneg %p580
        $region99: #{joint_block_forward.8} parent=92 // pred_check_branch
          %583 = sbr.rel (%p581) target = $region101
        $region100: #{joint_block_forward.8} parent=92 // pred_region
          %v584 = vld [vmem:[%s568] sm:$0x3f]
          %v585 = vld [vmem:[%s553] sm:$0xf]
          %v586 = vld [vmem:[%s553 + $0x4] sm:$0xf]
          %v587 = vld [vmem:[%s3] sm:$0xf]
          %v588 = vld [vmem:[%s3 + $0x4] sm:$0xf]
          %v589 = vld [vmem:[%s3 + $0x8] sm:$0xf]
          %v590 = vld [vmem:[%s3 + $0xc] sm:$0xf]
          %v591 = vld [vmem:[%s3 + $0x10] sm:$0xf]
          %v592 = vld [vmem:[%s3 + $0x14] sm:$0xf]
          %v593 = vld [vmem:[%s3 + $0x18] sm:$0xf]
          %v594 = vld [vmem:[%s3 + $0x1c] sm:$0xf]
          %v595 = vld [vmem:[%s3 + $0x20] sm:$0xf]
          %v596 = vld [vmem:[%s3 + $0x24] sm:$0xf]
          %v597 = vld [vmem:[%s3 + $0x28] sm:$0xf]
          %v598 = vld [vmem:[%s3 + $0x2c] sm:$0xf]
          %v599 = vld [vmem:[%s3 + $0x30] sm:$0xf]
          %v600 = vld [vmem:[%s3 + $0x34] sm:$0xf]
          %v601 = vld [vmem:[%s3 + $0x38] sm:$0xf]
          %v602 = vld [vmem:[%s3 + $0x3c] sm:$0xf]
          %v603 = vld [vmem:[%s4] sm:$0x1]
          %v605 = vlaneseq
          %v606 = vshrl.u32 %v605, 7
          %v607 = vsub.s32 0, %v606
          %v608 = vrot.slane %v603, %v607
          %v612 = vunpack.c.l.b16 %v585
          %v613 = vunpack.c.l.b16 %v586
          %v614 = vpack.c.b16 %v613, %v612
          %v632 = vunpack.c.l.b16 %v587
          %v633 = vunpack.c.l.b16 %v588
          %v634 = vunpack.c.l.b16 %v589
          %v635 = vunpack.c.l.b16 %v590
          %v636 = vunpack.c.l.b16 %v591
          %v637 = vunpack.c.l.b16 %v592
          %v638 = vunpack.c.l.b16 %v593
          %v639 = vunpack.c.l.b16 %v594
          %v640 = vunpack.c.l.b16 %v595
          %v641 = vunpack.c.l.b16 %v596
          %v642 = vunpack.c.l.b16 %v597
          %v643 = vunpack.c.l.b16 %v598
          %v644 = vunpack.c.l.b16 %v599
          %v645 = vunpack.c.l.b16 %v600
          %v646 = vunpack.c.l.b16 %v601
          %v647 = vunpack.c.l.b16 %v602
          %v648 = vpack.c.b16 %v633, %v632
          %v649 = vpack.c.b16 %v635, %v634
          %v650 = vpack.c.b16 %v637, %v636
          %v651 = vpack.c.b16 %v639, %v638
          %v652 = vpack.c.b16 %v641, %v640
          %v653 = vpack.c.b16 %v643, %v642
          %v654 = vpack.c.b16 %v645, %v644
          %v655 = vpack.c.b16 %v647, %v646
          %664 = vmatprep.subr.bf16.mxu0 0
          %665 = vmatpush1.bf16.msra.mxu0 %v648
          %666 = vmatprep.subr.bf16.mxu0 0
          %667 = vmatpush1.bf16.msra.mxu0 %v649
          %668 = vmatprep.subr.bf16.mxu0 0
          %669 = vmatpush1.bf16.msra.mxu0 %v650
          %670 = vmatprep.subr.bf16.mxu0 0
          %671 = vmatpush1.bf16.msra.mxu0 %v651
          %672 = vmatprep.subr.bf16.mxu0 0
          %673 = vmatpush1.bf16.msra.mxu0 %v652
          %674 = vmatprep.subr.bf16.mxu0 0
          %675 = vmatpush1.bf16.msra.mxu0 %v653
          %676 = vmatprep.subr.bf16.mxu0 0
          %677 = vmatpush1.bf16.msra.mxu0 %v654
          %678 = vmatprep.subr.bf16.mxu0 0
          %679 = vmatpush1.bf16.msra.mxu0 %v655
          %680 = vmatprep.subr.bf16.mxu0 0
          %681 = vmatpush1.bf16.msra.mxu0 0
          %682 = vmatprep.subr.bf16.mxu0 0
          %683 = vmatpush1.bf16.msra.mxu0 0
          %684 = vmatprep.subr.bf16.mxu0 0
          %685 = vmatpush1.bf16.msra.mxu0 0
          %686 = vmatprep.subr.bf16.mxu0 0
          %687 = vmatpush1.bf16.msra.mxu0 0
          %688 = vmatprep.subr.bf16.mxu0 0
          %689 = vmatpush1.bf16.msra.mxu0 0
          %690 = vmatprep.subr.bf16.mxu0 0
          %691 = vmatpush1.bf16.msra.mxu0 0
          %692 = vmatprep.subr.bf16.mxu0 0
          %693 = vmatpush1.bf16.msra.mxu0 0
          %694 = vmatprep.subr.bf16.mxu0 0
          %695 = vmatpush1.bf16.msra.mxu0 0
          %696 = vmatprep.mubr.bf16.mxu0 0
          %697 = vmatmul.mubr.bf16.gmra.mrb[0].mxu0 %v614
          %v698 = vpop.f32.mrb[0].mxu0
          %v699 = vadd.f32 %v608, %v698
          %v700 = vpop.f32.mrb[0].mxu0
          %v701 = vpop.f32.mrb[0].mxu0
          %v702 = vadd.f32 %v608, %v701
          %v703 = vpop.f32.mrb[0].mxu0
          %704 = vdwg.mxu0
          %v705 = vlaneseq
          %v706 = vshrl.u32 %v705, 7
          %v707 = vsub.s32 2, %v706
          %v708 = vrot.slane %v584, %v707
          %v709 = vmul.f32 %v699, %v708
          %v710 = vmul.f32 %v702, %v708
          %v711 = vld [vmem:[%s563] sm:$0xff]
          %v712 = vld [vmem:[%s563 + $0x8] sm:$0xff]
          %v713 = vadd.f32 %v709, %v711
          %v714 = vadd.f32 %v710, %v712
          %715 = vst [vmem:[#allocation2] sm:$0xff] %v713
          %716 = vst [vmem:[#allocation2 + $0x8] sm:$0xff] %v714
          %v717 = vmul.f32 %v713, %v713
          %v718 = vmul.f32 %v714, %v714
          %719 = vadd.xlane.f32.xlu0 %v717
          %v720 = vpop.xlane.xlu0 %719
          %721 = vadd.xlane.f32.xlu0 %v718
          %v722 = vpop.xlane.xlu0 %721
          %v723 = vrcp.pop 128.0
          %v724 = vmul.f32 %v720, %v723
          %v725 = vmul.f32 %v722, %v723
          %v726 = vadd.f32 %v724, 1e-06
          %v727 = vadd.f32 %v725, 1e-06
          %v728 = vrsqrt.pop %v726
          %v729 = vrsqrt.pop %v727
          %v730 = vmul.f32 %v713, %v728
          %v731 = vmul.f32 %v714, %v729
          %v732 = vadd.f32 %v584, 1.0
          %v733 = vlaneseq
          %v734 = vshrl.u32 %v733, 7
          %v735 = vsub.s32 4, %v734
          %v736 = vrot.slane %v732, %v735
          %v737 = vmul.f32 %v730, %v736
          %v738 = vmul.f32 %v731, %v736
          %v739 = vlaneseq
          %v740 = vshrl.u32 %v739, 7
          %v741 = vsub.s32 3, %v740
          %v742 = vrot.slane %v584, %v741
          %v743 = vadd.f32 %v737, %v742
          %v744 = vadd.f32 %v738, %v742
          %v745 = vpack.c.bf16 %v744, %v743
          %746 = vst [vmem:[#allocation3] sm:$0xff] %v745
          %747 = vst [vmem:[#allocation4] sm:$0xff] 0.0
          %748 = vst [vmem:[#allocation4 + $0x8] sm:$0xff] 0.0
        $region101: #{joint_block_forward.8} parent=92 // pred_fallthru
          _
        %v749 = vld [vmem:[#allocation3] sm:$0xff]
        %v750 = vld [vmem:[%s482] sm:$0xf]
        %v751 = vld [vmem:[%s482 + $0x4] sm:$0xf]
        %v752 = vld [vmem:[%s482 + $0x8] sm:$0xf]
        %v753 = vld [vmem:[%s482 + $0xc] sm:$0xf]
        %v754 = vld [vmem:[%s482 + $0x10] sm:$0xf]
        %v755 = vld [vmem:[%s482 + $0x14] sm:$0xf]
        %v756 = vld [vmem:[%s482 + $0x18] sm:$0xf]
        %v757 = vld [vmem:[%s482 + $0x1c] sm:$0xf]
        %v758 = vld [vmem:[%s482 + $0x20] sm:$0xf]
        %v759 = vld [vmem:[%s482 + $0x24] sm:$0xf]
        %v760 = vld [vmem:[%s482 + $0x28] sm:$0xf]
        %v761 = vld [vmem:[%s482 + $0x2c] sm:$0xf]
        %v762 = vld [vmem:[%s482 + $0x30] sm:$0xf]
        %v763 = vld [vmem:[%s482 + $0x34] sm:$0xf]
        %v764 = vld [vmem:[%s482 + $0x38] sm:$0xf]
        %v765 = vld [vmem:[%s482 + $0x3c] sm:$0xf]
        %v766 = vld [vmem:[%s571] sm:$0x1]
        %v768 = vlaneseq
        %v769 = vshrl.u32 %v768, 7
        %v770 = vsub.s32 0, %v769
        %v771 = vrot.slane %v766, %v770
        %v789 = vunpack.c.l.b16 %v750
        %v790 = vunpack.c.l.b16 %v751
        %v791 = vunpack.c.l.b16 %v752
        %v792 = vunpack.c.l.b16 %v753
        %v793 = vunpack.c.l.b16 %v754
        %v794 = vunpack.c.l.b16 %v755
        %v795 = vunpack.c.l.b16 %v756
        %v796 = vunpack.c.l.b16 %v757
        %v797 = vunpack.c.l.b16 %v758
        %v798 = vunpack.c.l.b16 %v759
        %v799 = vunpack.c.l.b16 %v760
        %v800 = vunpack.c.l.b16 %v761
        %v801 = vunpack.c.l.b16 %v762
        %v802 = vunpack.c.l.b16 %v763
        %v803 = vunpack.c.l.b16 %v764
        %v804 = vunpack.c.l.b16 %v765
        %v805 = vpack.c.b16 %v790, %v789
        %v806 = vpack.c.b16 %v792, %v791
        %v807 = vpack.c.b16 %v794, %v793
        %v808 = vpack.c.b16 %v796, %v795
        %v809 = vpack.c.b16 %v798, %v797
        %v810 = vpack.c.b16 %v800, %v799
        %v811 = vpack.c.b16 %v802, %v801
        %v812 = vpack.c.b16 %v804, %v803
        %821 = vmatprep.subr.bf16.mxu0 0
        %822 = vmatpush1.bf16.msra.mxu0 %v805
        %823 = vmatprep.subr.bf16.mxu0 0
        %824 = vmatpush1.bf16.msra.mxu0 %v806
        %825 = vmatprep.subr.bf16.mxu0 0
        %826 = vmatpush1.bf16.msra.mxu0 %v807
        %827 = vmatprep.subr.bf16.mxu0 0
        %828 = vmatpush1.bf16.msra.mxu0 %v808
        %829 = vmatprep.subr.bf16.mxu0 0
        %830 = vmatpush1.bf16.msra.mxu0 %v809
        %831 = vmatprep.subr.bf16.mxu0 0
        %832 = vmatpush1.bf16.msra.mxu0 %v810
        %833 = vmatprep.subr.bf16.mxu0 0
        %834 = vmatpush1.bf16.msra.mxu0 %v811
        %835 = vmatprep.subr.bf16.mxu0 0
        %836 = vmatpush1.bf16.msra.mxu0 %v812
        %837 = vmatprep.subr.bf16.mxu0 0
        %838 = vmatpush1.bf16.msra.mxu0 0
        %839 = vmatprep.subr.bf16.mxu0 0
        %840 = vmatpush1.bf16.msra.mxu0 0
        %841 = vmatprep.subr.bf16.mxu0 0
        %842 = vmatpush1.bf16.msra.mxu0 0
        %843 = vmatprep.subr.bf16.mxu0 0
        %844 = vmatpush1.bf16.msra.mxu0 0
        %845 = vmatprep.subr.bf16.mxu0 0
        %846 = vmatpush1.bf16.msra.mxu0 0
        %847 = vmatprep.subr.bf16.mxu0 0
        %848 = vmatpush1.bf16.msra.mxu0 0
        %849 = vmatprep.subr.bf16.mxu0 0
        %850 = vmatpush1.bf16.msra.mxu0 0
        %851 = vmatprep.subr.bf16.mxu0 0
        %852 = vmatpush1.bf16.msra.mxu0 0
        %853 = vmatprep.mubr.bf16.mxu0 0
        %854 = vmatmul.mubr.bf16.gmra.mrb[0].mxu0 %v749
        %v855 = vpop.f32.mrb[0].mxu0
        %v856 = vadd.f32 %v771, %v855
        %v857 = vpop.f32.mrb[0].mxu0
        %v858 = vpop.f32.mrb[0].mxu0
        %v859 = vadd.f32 %v771, %v858
        %v860 = vpop.f32.mrb[0].mxu0
        %861 = vdwg.mxu0
        %v862 = vmul.f32 %v856, 0.5
        %v863 = vmul.f32 %v859, 0.5
        %v864 = vmul.f32 %v856, 0.044715
        %v865 = vmul.f32 %v859, 0.044715
        %v866 = vmul.f32 %v864, %v856
        %v867 = vmul.f32 %v865, %v859
        %v868 = vmul.f32 %v866, %v856
        %v869 = vmul.f32 %v867, %v859
        %v870 = vadd.f32 %v856, %v868
        %v871 = vadd.f32 %v859, %v869
        %v872 = vmul.f32 %v870, 0.7978846
        %v873 = vmul.f32 %v871, 0.7978846
        %v874 = vtanh.pop %v872
        %v875 = vtanh.pop %v873
        %v876 = vadd.f32 %v874, 1.0
        %v877 = vadd.f32 %v875, 1.0
        %v878 = vmul.f32 %v862, %v876
        %v879 = vmul.f32 %v863, %v877
        %v880 = vpack.c.bf16 %v879, %v878
        %v881 = vld [vmem:[#allocation4] sm:$0xff]
        %v882 = vld [vmem:[#allocation4 + $0x8] sm:$0xff]
        %v883 = vld [vmem:[%s576] sm:$0xf]
        %v884 = vld [vmem:[%s576 + $0x4] sm:$0xf]
        %v885 = vld [vmem:[%s576 + $0x8] sm:$0xf]
        %v886 = vld [vmem:[%s576 + $0xc] sm:$0xf]
        %v887 = vld [vmem:[%s576 + $0x10] sm:$0xf]
        %v888 = vld [vmem:[%s576 + $0x14] sm:$0xf]
        %v889 = vld [vmem:[%s576 + $0x18] sm:$0xf]
        %v890 = vld [vmem:[%s576 + $0x1c] sm:$0xf]
        %v891 = vld [vmem:[%s576 + $0x20] sm:$0xf]
        %v892 = vld [vmem:[%s576 + $0x24] sm:$0xf]
        %v893 = vld [vmem:[%s576 + $0x28] sm:$0xf]
        %v894 = vld [vmem:[%s576 + $0x2c] sm:$0xf]
        %v895 = vld [vmem:[%s576 + $0x30] sm:$0xf]
        %v896 = vld [vmem:[%s576 + $0x34] sm:$0xf]
        %v897 = vld [vmem:[%s576 + $0x38] sm:$0xf]
        %v898 = vld [vmem:[%s576 + $0x3c] sm:$0xf]
        %v915 = vunpack.c.l.b16 %v883
        %v916 = vunpack.c.l.b16 %v884
        %v917 = vunpack.c.l.b16 %v885
        %v918 = vunpack.c.l.b16 %v886
        %v919 = vunpack.c.l.b16 %v887
        %v920 = vunpack.c.l.b16 %v888
        %v921 = vunpack.c.l.b16 %v889
        %v922 = vunpack.c.l.b16 %v890
        %v923 = vunpack.c.l.b16 %v891
        %v924 = vunpack.c.l.b16 %v892
        %v925 = vunpack.c.l.b16 %v893
        %v926 = vunpack.c.l.b16 %v894
        %v927 = vunpack.c.l.b16 %v895
        %v928 = vunpack.c.l.b16 %v896
        %v929 = vunpack.c.l.b16 %v897
        %v930 = vunpack.c.l.b16 %v898
        %v931 = vpack.c.b16 %v916, %v915
        %v932 = vpack.c.b16 %v918, %v917
        %v933 = vpack.c.b16 %v920, %v919
        %v934 = vpack.c.b16 %v922, %v921
        %v935 = vpack.c.b16 %v924, %v923
        %v936 = vpack.c.b16 %v926, %v925
        %v937 = vpack.c.b16 %v928, %v927
        %v938 = vpack.c.b16 %v930, %v929
        %947 = vmatprep.subr.bf16.mxu0 0
        %948 = vmatpush1.bf16.msra.mxu0 %v931
        %949 = vmatprep.subr.bf16.mxu0 0
        %950 = vmatpush1.bf16.msra.mxu0 %v932
        %951 = vmatprep.subr.bf16.mxu0 0
        %952 = vmatpush1.bf16.msra.mxu0 %v933
        %953 = vmatprep.subr.bf16.mxu0 0
        %954 = vmatpush1.bf16.msra.mxu0 %v934
        %955 = vmatprep.subr.bf16.mxu0 0
        %956 = vmatpush1.bf16.msra.mxu0 %v935
        %957 = vmatprep.subr.bf16.mxu0 0
        %958 = vmatpush1.bf16.msra.mxu0 %v936
        %959 = vmatprep.subr.bf16.mxu0 0
        %960 = vmatpush1.bf16.msra.mxu0 %v937
        %961 = vmatprep.subr.bf16.mxu0 0
        %962 = vmatpush1.bf16.msra.mxu0 %v938
        %963 = vmatprep.subr.bf16.mxu0 0
        %964 = vmatpush1.bf16.msra.mxu0 0
        %965 = vmatprep.subr.bf16.mxu0 0
        %966 = vmatpush1.bf16.msra.mxu0 0
        %967 = vmatprep.subr.bf16.mxu0 0
        %968 = vmatpush1.bf16.msra.mxu0 0
        %969 = vmatprep.subr.bf16.mxu0 0
        %970 = vmatpush1.bf16.msra.mxu0 0
        %971 = vmatprep.subr.bf16.mxu0 0
        %972 = vmatpush1.bf16.msra.mxu0 0
        %973 = vmatprep.subr.bf16.mxu0 0
        %974 = vmatpush1.bf16.msra.mxu0 0
        %975 = vmatprep.subr.bf16.mxu0 0
        %976 = vmatpush1.bf16.msra.mxu0 0
        %977 = vmatprep.subr.bf16.mxu0 0
        %978 = vmatpush1.bf16.msra.mxu0 0
        %979 = vmatprep.mubr.bf16.mxu0 0
        %980 = vmatmul.mubr.bf16.gmra.mrb[0].mxu0 %v880
        %v981 = vpop.f32.mrb[0].mxu0
        %v982 = vadd.f32 0.0, %v981
        %v983 = vpop.f32.mrb[0].mxu0
        %v984 = vpop.f32.mrb[0].mxu0
        %v985 = vadd.f32 0.0, %v984
        %v986 = vpop.f32.mrb[0].mxu0
        %987 = vdwg.mxu0
        %v988 = vadd.f32 %v881, %v982
        %v989 = vadd.f32 %v882, %v985
        %990 = vst [vmem:[#allocation4] sm:$0xff] %v988
        %991 = vst [vmem:[#allocation4 + $0x8] sm:$0xff] %v989
        %p992 = scmp.eq.s32.totalorder %s30, 3
        // Predicated region
        $region102: #{joint_block_forward.8} parent=92 // pred_check
          %p993 = pneg %p992
        $region103: #{joint_block_forward.8} parent=92 // pred_check_branch
          %995 = sbr.rel (%p993) target = $region105
        $region104: #{joint_block_forward.8} parent=92 // pred_region
          %v996 = vld [vmem:[%s568] sm:$0x3f]
          %v997 = vld [vmem:[#allocation4] sm:$0xff]
          %v998 = vld [vmem:[#allocation4 + $0x8] sm:$0xff]
          %v999 = vld [vmem:[%s8] sm:$0x1]
          %v1001 = vlaneseq
          %v1002 = vshrl.u32 %v1001, 7
          %v1003 = vsub.s32 0, %v1002
          %v1004 = vrot.slane %v999, %v1003
          %v1006 = vadd.f32 %v997, %v1004
          %v1007 = vadd.f32 %v998, %v1004
          %v1008 = vlaneseq
          %v1009 = vshrl.u32 %v1008, 7
          %v1010 = vsub.s32 5, %v1009
          %v1011 = vrot.slane %v996, %v1010
          %v1012 = vmul.f32 %v1006, %v1011
          %v1013 = vmul.f32 %v1007, %v1011
          %v1014 = vld [vmem:[#allocation2] sm:$0xff]
          %v1015 = vld [vmem:[#allocation2 + $0x8] sm:$0xff]
          %v1016 = vadd.f32 %v1012, %v1014
          %v1017 = vadd.f32 %v1013, %v1015
          %1018 = vst [vmem:[%s544] sm:$0xff] %v1016
          %1019 = vst [vmem:[%s544 + $0x8] sm:$0xff] %v1017
        $region105: #{joint_block_forward.8} parent=92 // pred_fallthru
          _
        %s1020 = sand.u32 %s275, 1
        %s1021 = scalar_lea.sflag [#allocation7], %s1020
        %s1022 = sand.u32 %s275, 1
        %s1023 = smul.addr %s1022, 16
        %s1024 = scalar_lea.vmem [#allocation6], %s1023
        // Predicated region
        $region106: #{joint_block_forward.8} parent=92 // pred_check
          %p1025 = pneg %p285
        $region107: #{joint_block_forward.8} parent=92 // pred_check_branch
          %1027 = sbr.rel (%p1025) target = $region109
        $region108: #{joint_block_forward.8} parent=92 // pred_region
          %s1028 = smul.u32 2, %s29
          %s1030 = ssub.s32 256, 256
          %1031 = vsyncadd %s1021, %s1030
          %s1032 = smul.addr %s28, 2
          %s1033 = sadd.s32 %s1028, %s1032
          %s1034 = smul.addr %s1033, 128
          %s1035 = scalar_lea.hbm %s9, %s1034
          %s1036 = sshll.u32 %s1024, 4
          %s1037 = int_to_ptr.vmem [resolvable:$true] %s1036
          %1042 = dma.vmem_to_hbm [thread:$0]  %s1037, 256, %s1035, %s1021, 128, 128, 8
        $region109: #{joint_block_forward.8} parent=92 // pred_fallthru
          _
      $region93: #{joint_block_forward.8} parent=5 // pred_fallthru
        _
      %p1043 = scmp.le.s32.totalorder 2, %s18
      // Predicated region
      $region110: #{joint_block_forward.8} parent=5 // pred_check
        %p1044 = pneg %p1043
      $region111: #{joint_block_forward.8} parent=5 // pred_check_branch
        %1046 = sbr.rel (%p1044) target = $region113
      $region112: #{joint_block_forward.8} parent=5 // pred_region
        %s1047 = ssub.s32 %s18, 2
        // Predicated region
        $region114: #{joint_block_forward.8} parent=112 // pred_check
          %p1048 = pneg %p291
        $region115: #{joint_block_forward.8} parent=112 // pred_check_branch
          %1050 = sbr.rel (%p1048) target = $region117
        $region116: #{joint_block_forward.8} parent=112 // pred_region
          %s1051 = sand.u32 %s276, 1
          %s1052 = scalar_lea.sflag [#allocation7], %s1051
          %s1053 = sand.u32 %s276, 1
          %s1054 = smul.addr %s1053, 16
          %s1055 = scalar_lea.vmem [#allocation6], %s1054
          %1056 = dma.done %s1052, 256
        $region117: #{joint_block_forward.8} parent=112 // pred_fallthru
          _
      $region113: #{joint_block_forward.8} parent=5 // pred_fallthru
        _
    $region6: #{joint_block_forward.8} parent=1 // loop_footer
      %s22 = sadd.s32 1, %s18
    $region7: #{joint_block_forward.8} parent=1 // loop_footer_branch
      %17 = sbr.rel target = $region3
    $region8: #{joint_block_forward.8} parent=1 // loop_exit
      _
    %1057 = vsyncpa [#allocation7], 1
    %s1058 = scalar_lea.sflag [#allocation7], 1
    %1059 = vsyncpa %s1058, 1

// kernel: joint_block_forward.9
$region0: #{joint_block_forward.9}
  #allocation0 [shape = 'u32[]', space=smem, size = 0x4, offset = 0x4, fixed_abs, tag = 'smem constant byte address 0x4 - core index']
  #allocation1 [shape = 'u32[144,128]{1,0:T(1,128)}', space=vmem, size = 0x12000, scoped, tag = 'internal scratch']
  #allocation2 [shape = 'f32[16,128]{1,0:T(8,128)}', space=vmem, size = 0x2000, scoped, tag = 'scratch operand']
  #allocation3 [shape = 'bf16[16,128]{1,0:T(16,128)(2,1)}', space=vmem, size = 0x1000, scoped, tag = 'scratch operand']
  #allocation4 [shape = 'f32[16,128]{1,0:T(8,128)}', space=vmem, size = 0x2000, scoped, tag = 'scratch operand']
  %s0 = inlined_call_operand.vmem [shape: bf16[2,64,128], index: 0, kind: input, shape index: {}]
  %s1 = inlined_call_operand.vmem [shape: f32[2,48,128], index: 1, kind: input, shape index: {}]
  %s2 = inlined_call_operand.vmem [shape: f32[2,2,6,128], index: 2, kind: input, shape index: {}]
  %s3 = inlined_call_operand.vmem [shape: bf16[128,128], index: 3, kind: input, shape index: {}]
  %s4 = inlined_call_operand.vmem [shape: f32[1,128], index: 4, kind: input, shape index: {}]
  %s5 = inlined_call_operand.vmem [shape: bf16[128,512], index: 5, kind: input, shape index: {}]
  %s6 = inlined_call_operand.vmem [shape: f32[1,512], index: 6, kind: input, shape index: {}]
  %s7 = inlined_call_operand.vmem [shape: bf16[512,128], index: 7, kind: input, shape index: {}]
  %s8 = inlined_call_operand.vmem [shape: f32[1,128], index: 8, kind: input, shape index: {}]
  %s9 = inlined_call_operand.hbm [shape: f32[2,48,128], index: 9, kind: output, shape index: {}]
  %s10 = sld [smem:[#allocation0]]
  $region118: #{joint_block_forward.9} parent=0
    _
  %s12 = ssub.s32 1, %s10
  %s13 = scalar_select 0, %s12, %s10
  $region1: #{joint_block_forward.9} parent=0
    #allocation5 [shape = 'u8[65536]{0}', space=vmem, size = 0x10000, scoped, tag = 'input window, operand 5']
    #allocation6 [shape = 'u8[16384]{0}', space=vmem, size = 0x4000, scoped, tag = 'output window, operand 0']
    #allocation7 [shape = 's32[2]{0}', space=sflag, size = 0x8, scoped, tag = 'scoped memory for joint_block_forward.9']
    %14 = vsyncpa [#allocation7], 0
    %s15 = scalar_lea.sflag [#allocation7], 1
    %16 = vsyncpa %s15, 0
    loop: start=0, step=1, limit=26
    $region2: #{joint_block_forward.9} parent=1 // loop_pre_header
      _
    $region3: #{joint_block_forward.9} parent=1 // loop_header
      %s18 = sphi 0, %s22
      %p19 = scmp.ge.s32.totalorder %s18, 26
      %s25 = sphi 0, %s44
      %s26 = sphi 0, %s40
      %s27 = sphi 0, %s36
      %s28 = sphi 0, %s25
      %s29 = sphi 0, %s26
      %s30 = sphi 0, %s27
      %s31 = sphi 0, %s28
      %s32 = sphi 0, %s29
      %s33 = sphi 0, %s30
      %s51 = sphi 0, %s53
      %s54 = sphi 0, %s51
      %s55 = sphi 0, %s54
      %s71 = sphi 0, %s55
      %s79 = sphi 0, %s81
      %s82 = sphi 0, %s79
      %s83 = sphi 0, %s82
      %s99 = sphi 0, %s83
      %s105 = sphi 0, %s107
      %s108 = sphi 0, %s105
      %s109 = sphi 0, %s108
      %s125 = sphi 0, %s109
      %s129 = sphi 0, %s129
      %s131 = sphi 0, %s129
      %s132 = sphi 0, %s131
      %s146 = sphi 0, %s132
      %s150 = sphi 0, %s150
      %s152 = sphi 0, %s150
      %s153 = sphi 0, %s152
      %s167 = sphi 0, %s153
      %s173 = sphi 0, %s175
      %s176 = sphi 0, %s173
      %s177 = sphi 0, %s176
      %s193 = sphi 0, %s177
      %s199 = sphi 0, %s201
      %s202 = sphi 0, %s199
      %s203 = sphi 0, %s202
      %s219 = sphi 0, %s203
      %s225 = sphi 0, %s227
      %s228 = sphi 0, %s225
      %s229 = sphi 0, %s228
      %s245 = sphi 0, %s229
      %s249 = sphi 0, %s249
      %s251 = sphi 0, %s249
      %s252 = sphi 0, %s251
      %s266 = sphi 0, %s252
      %s274 = sphi 0, %s276
      %s277 = sphi 0, %s274
      %s278 = sphi 0, %s277
      %s294 = sphi 0, %s278
    $region4: #{joint_block_forward.9} parent=1 // loop_header_branch
      %21 = sbr.rel (%p19) target = $region8
    $region5: #{joint_block_forward.9} parent=1 // loop_body
      %s23 = ssub.s32 %s18, 1
      %s24 = ssub.s32 %s18, 2
      %s34 = sadd.s32 1, %s27
      %p35 = scmp.ge.s32.totalorder %s34, 4
      %s36 = scalar_select %p35, 0, %s34
      %s37 = sadd.s32 1, %s26
      %s38 = scalar_select %p35, %s37, %s26
      %p39 = scmp.ge.s32.totalorder %s38, 3
      %s40 = scalar_select %p39, 0, %s38
      %s41 = sadd.s32 1, %s25
      %s42 = scalar_select %p39, %s41, %s25
      %p43 = scmp.ge.s32.totalorder %s42, 2
      %s44 = scalar_select %p43, 0, %s42
      %s45 = sadd.s32 %s26, 1
      %s46 = sadd.s32 %s40, 1
      %s47 = ssub.s32 %s25, %s44
      %s48 = ssub.s32 %s45, %s46
      %s49 = sor.u32 %s47, %s48
      %p50 = scmp.eq.s32.totalorder %s49, 0
      %s52 = sadd.s32 %s51, 1
      %s53 = scalar_select %p50, %s51, %s52
      %p56 = pneg %p50
      %p57 = scmp.eq.s32.totalorder %s18, 23
      %p58 = por %p56, %p57
      %p59 = scmp.ne.s32.totalorder %s51, %s54
      %p60 = scmp.eq.s32.totalorder %s18, 0
      %p61 = por %p59, %p60
      %p62 = scmp.ne.s32.totalorder %s51, %s54
      %p63 = scmp.eq.s32.totalorder %s23, 23
      %p64 = por %p62, %p63
      %p65 = scmp.ne.s32.totalorder %s54, %s55
      %p66 = scmp.eq.s32.totalorder %s23, 0
      %p67 = por %p65, %p66
      %p68 = scmp.ne.s32.totalorder %s54, %s55
      %p69 = scmp.eq.s32.totalorder %s24, 23
      %p70 = por %p68, %p69
      %p72 = scmp.ne.s32.totalorder %s55, %s71
      %p73 = scmp.eq.s32.totalorder %s24, 0
      %p74 = por %p72, %p73
      %s75 = ssub.s32 %s25, %s44
      %s76 = ssub.s32 %s26, %s40
      %s77 = sor.u32 %s75, %s76
      %p78 = scmp.eq.s32.totalorder %s77, 0
      %s80 = sadd.s32 %s79, 1
      %s81 = scalar_select %p78, %s79, %s80
      %p84 = pneg %p78
      %p85 = scmp.eq.s32.totalorder %s18, 23
      %p86 = por %p84, %p85
      %p87 = scmp.ne.s32.totalorder %s79, %s82
      %p88 = scmp.eq.s32.totalorder %s18, 0
      %p89 = por %p87, %p88
      %p90 = scmp.ne.s32.totalorder %s79, %s82
      %p91 = scmp.eq.s32.totalorder %s23, 23
      %p92 = por %p90, %p91
      %p93 = scmp.ne.s32.totalorder %s82, %s83
      %p94 = scmp.eq.s32.totalorder %s23, 0
      %p95 = por %p93, %p94
      %p96 = scmp.ne.s32.totalorder %s82, %s83
      %p97 = scmp.eq.s32.totalorder %s24, 23
      %p98 = por %p96, %p97
      %p100 = scmp.ne.s32.totalorder %s83, %s99
      %p101 = scmp.eq.s32.totalorder %s24, 0
      %p102 = por %p100, %p101
      %s103 = ssub.s32 %s25, %s44
      %p104 = scmp.eq.s32.totalorder %s103, 0
      %s106 = sadd.s32 %s105, 1
      %s107 = scalar_select %p104, %s105, %s106
      %p110 = pneg %p104
      %p111 = scmp.eq.s32.totalorder %s18, 23
      %p112 = por %p110, %p111
      %p113 = scmp.ne.s32.totalorder %s105, %s108
      %p114 = scmp.eq.s32.totalorder %s18, 0
      %p115 = por %p113, %p114
      %p116 = scmp.ne.s32.totalorder %s105, %s108
      %p117 = scmp.eq.s32.totalorder %s23, 23
      %p118 = por %p116, %p117
      %p119 = scmp.ne.s32.totalorder %s108, %s109
      %p120 = scmp.eq.s32.totalorder %s23, 0
      %p121 = por %p119, %p120
      %p122 = scmp.ne.s32.totalorder %s108, %s109
      %p123 = scmp.eq.s32.totalorder %s24, 23
      %p124 = por %p122, %p123
      %p126 = scmp.ne.s32.totalorder %s109, %s125
      %p127 = scmp.eq.s32.totalorder %s24, 0
      %p128 = por %p126, %p127
      %s130 = sadd.s32 %s129, 1
      %p133 = scmp.eq.s32.totalorder %s18, 23
      %p134 = scmp.ne.s32.totalorder %s129, %s131
      %p135 = scmp.eq.s32.totalorder %s18, 0
      %p136 = por %p134, %p135
      %p137 = scmp.ne.s32.totalorder %s129, %s131
      %p138 = scmp.eq.s32.totalorder %s23, 23
      %p139 = por %p137, %p138
      %p140 = scmp.ne.s32.totalorder %s131, %s132
      %p141 = scmp.eq.s32.totalorder %s23, 0
      %p142 = por %p140, %p141
      %p143 = scmp.ne.s32.totalorder %s131, %s132
      %p144 = scmp.eq.s32.totalorder %s24, 23
      %p145 = por %p143, %p144
      %p147 = scmp.ne.s32.totalorder %s132, %s146
      %p148 = scmp.eq.s32.totalorder %s24, 0
      %p149 = por %p147, %p148
      %s151 = sadd.s32 %s150, 1
      %p154 = scmp.eq.s32.totalorder %s18, 23
      %p155 = scmp.ne.s32.totalorder %s150, %s152
      %p156 = scmp.eq.s32.totalorder %s18, 0
      %p157 = por %p155, %p156
      %p158 = scmp.ne.s32.totalorder %s150, %s152
      %p159 = scmp.eq.s32.totalorder %s23, 23
      %p160 = por %p158, %p159
      %p161 = scmp.ne.s32.totalorder %s152, %s153
      %p162 = scmp.eq.s32.totalorder %s23, 0
      %p163 = por %p161, %p162
      %p164 = scmp.ne.s32.totalorder %s152, %s153
      %p165 = scmp.eq.s32.totalorder %s24, 23
      %p166 = por %p164, %p165
      %p168 = scmp.ne.s32.totalorder %s153, %s167
      %p169 = scmp.eq.s32.totalorder %s24, 0
      %p170 = por %p168, %p169
      %s171 = ssub.s32 %s27, %s36
      %p172 = scmp.eq.s32.totalorder %s171, 0
      %s174 = sadd.s32 %s173, 1
      %s175 = scalar_select %p172, %s173, %s174
      %p178 = pneg %p172
      %p179 = scmp.eq.s32.totalorder %s18, 23
      %p180 = por %p178, %p179
      %p181 = scmp.ne.s32.totalorder %s173, %s176
      %p182 = scmp.eq.s32.totalorder %s18, 0
      %p183 = por %p181, %p182
      %p184 = scmp.ne.s32.totalorder %s173, %s176
      %p185 = scmp.eq.s32.totalorder %s23, 23
      %p186 = por %p184, %p185
      %p187 = scmp.ne.s32.totalorder %s176, %s177
      %p188 = scmp.eq.s32.totalorder %s23, 0
      %p189 = por %p187, %p188
      %p190 = scmp.ne.s32.totalorder %s176, %s177
      %p191 = scmp.eq.s32.totalorder %s24, 23
      %p192 = por %p190, %p191
      %p194 = scmp.ne.s32.totalorder %s177, %s193
      %p195 = scmp.eq.s32.totalorder %s24, 0
      %p196 = por %p194, %p195
      %s197 = ssub.s32 %s27, %s36
      %p198 = scmp.eq.s32.totalorder %s197, 0
      %s200 = sadd.s32 %s199, 1
      %s201 = scalar_select %p198, %s199, %s200
      %p204 = pneg %p198
      %p205 = scmp.eq.s32.totalorder %s18, 23
      %p206 = por %p204, %p205
      %p207 = scmp.ne.s32.totalorder %s199, %s202
      %p208 = scmp.eq.s32.totalorder %s18, 0
      %p209 = por %p207, %p208
      %p210 = scmp.ne.s32.totalorder %s199, %s202
      %p211 = scmp.eq.s32.totalorder %s23, 23
      %p212 = por %p210, %p211
      %p213 = scmp.ne.s32.totalorder %s202, %s203
      %p214 = scmp.eq.s32.totalorder %s23, 0
      %p215 = por %p213, %p214
      %p216 = scmp.ne.s32.totalorder %s202, %s203
      %p217 = scmp.eq.s32.totalorder %s24, 23
      %p218 = por %p216, %p217
      %p220 = scmp.ne.s32.totalorder %s203, %s219
      %p221 = scmp.eq.s32.totalorder %s24, 0
      %p222 = por %p220, %p221
      %s223 = ssub.s32 %s27, %s36
      %p224 = scmp.eq.s32.totalorder %s223, 0
      %s226 = sadd.s32 %s225, 1
      %s227 = scalar_select %p224, %s225, %s226
      %p230 = pneg %p224
      %p231 = scmp.eq.s32.totalorder %s18, 23
      %p232 = por %p230, %p231
      %p233 = scmp.ne.s32.totalorder %s225, %s228
      %p234 = scmp.eq.s32.totalorder %s18, 0
      %p235 = por %p233, %p234
      %p236 = scmp.ne.s32.totalorder %s225, %s228
      %p237 = scmp.eq.s32.totalorder %s23, 23
      %p238 = por %p236, %p237
      %p239 = scmp.ne.s32.totalorder %s228, %s229
      %p240 = scmp.eq.s32.totalorder %s23, 0
      %p241 = por %p239, %p240
      %p242 = scmp.ne.s32.totalorder %s228, %s229
      %p243 = scmp.eq.s32.totalorder %s24, 23
      %p244 = por %p242, %p243
      %p246 = scmp.ne.s32.totalorder %s229, %s245
      %p247 = scmp.eq.s32.totalorder %s24, 0
      %p248 = por %p246, %p247
      %s250 = sadd.s32 %s249, 1
      %p253 = scmp.eq.s32.totalorder %s18, 23
      %p254 = scmp.ne.s32.totalorder %s249, %s251
      %p255 = scmp.eq.s32.totalorder %s18, 0
      %p256 = por %p254, %p255
      %p257 = scmp.ne.s32.totalorder %s249, %s251
      %p258 = scmp.eq.s32.totalorder %s23, 23
      %p259 = por %p257, %p258
      %p260 = scmp.ne.s32.totalorder %s251, %s252
      %p261 = scmp.eq.s32.totalorder %s23, 0
      %p262 = por %p260, %p261
      %p263 = scmp.ne.s32.totalorder %s251, %s252
      %p264 = scmp.eq.s32.totalorder %s24, 23
      %p265 = por %p263, %p264
      %p267 = scmp.ne.s32.totalorder %s252, %s266
      %p268 = scmp.eq.s32.totalorder %s24, 0
      %p269 = por %p267, %p268
      %s270 = ssub.s32 %s25, %s44
      %s271 = ssub.s32 %s26, %s40
      %s272 = sor.u32 %s270, %s271
      %p273 = scmp.eq.s32.totalorder %s272, 0
      %s275 = sadd.s32 %s274, 1
      %s276 = scalar_select %p273, %s274, %s275
      %p279 = pneg %p273
      %p280 = scmp.eq.s32.totalorder %s18, 23
      %p281 = por %p279, %p280
      %p282 = scmp.ne.s32.totalorder %s274, %s277
      %p283 = scmp.eq.s32.totalorder %s18, 0
      %p284 = por %p282, %p283
      %p285 = scmp.ne.s32.totalorder %s274, %s277
      %p286 = scmp.eq.s32.totalorder %s23, 23
      %p287 = por %p285, %p286
      %p288 = scmp.ne.s32.totalorder %s277, %s278
      %p289 = scmp.eq.s32.totalorder %s23, 0
      %p290 = por %p288, %p289
      %p291 = scmp.ne.s32.totalorder %s277, %s278
      %p292 = scmp.eq.s32.totalorder %s24, 23
      %p293 = por %p291, %p292
      %p295 = scmp.ne.s32.totalorder %s278, %s294
      %p296 = scmp.eq.s32.totalorder %s24, 0
      %p297 = por %p295, %p296
      %p298 = scmp.le.s32.totalorder 1, %s18
      %p299 = scmp.lt.s32.totalorder %s18, 25
      %p300 = pnand %p298, %p299
      %p301 = pneg %p300
      // Predicated region
      $region9: #{joint_block_forward.9} parent=5 // pred_check
        _
      $region10: #{joint_block_forward.9} parent=5 // pred_check_branch
        %303 = sbr.rel (%p300) target = $region12
      $region11: #{joint_block_forward.9} parent=5 // pred_region
        %s304 = ssub.s32 %s18, 1
        // Predicated region
        $region13: #{joint_block_forward.9} parent=11 // pred_check
          %p305 = pneg %p142
        $region14: #{joint_block_forward.9} parent=11 // pred_check_branch
          %307 = sbr.rel (%p305) target = $region16
        $region15: #{joint_block_forward.9} parent=11 // pred_region
          _
        $region16: #{joint_block_forward.9} parent=11 // pred_fallthru
          _
        // Predicated region
        $region17: #{joint_block_forward.9} parent=11 // pred_check
          %p308 = pneg %p163
        $region18: #{joint_block_forward.9} parent=11 // pred_check_branch
          %310 = sbr.rel (%p308) target = $region20
        $region19: #{joint_block_forward.9} parent=11 // pred_region
          _
        $region20: #{joint_block_forward.9} parent=11 // pred_fallthru
          _
        // Predicated region
        $region21: #{joint_block_forward.9} parent=11 // pred_check
          %p311 = pneg %p262
        $region22: #{joint_block_forward.9} parent=11 // pred_check_branch
          %313 = sbr.rel (%p311) target = $region24
        $region23: #{joint_block_forward.9} parent=11 // pred_region
          _
        $region24: #{joint_block_forward.9} parent=11 // pred_fallthru
          _
      $region12: #{joint_block_forward.9} parent=5 // pred_fallthru
        _
      %p314 = scmp.lt.s32.totalorder %s18, 24
      // Predicated region
      $region25: #{joint_block_forward.9} parent=5 // pred_check
        %p315 = pneg %p314
      $region26: #{joint_block_forward.9} parent=5 // pred_check_branch
        %317 = sbr.rel (%p315) target = $region28
      $region27: #{joint_block_forward.9} parent=5 // pred_region
        // Predicated region
        $region29: #{joint_block_forward.9} parent=27 // pred_check
          %p318 = pneg %p61
        $region30: #{joint_block_forward.9} parent=27 // pred_check_branch
          %320 = sbr.rel (%p318) target = $region32
        $region31: #{joint_block_forward.9} parent=27 // pred_region
          %s321 = sadd.s32 %s26, 1
          %s322 = smul.u32 2, %s321
          %p323 = scmp.lt.s32.totalorder %s25, 1
          %s324 = scalar_select %p323, %s25, 1
          %p325 = scmp.lt.s32.totalorder %s322, 7
          %s326 = scalar_select %p325, %s322, 7
          %s327 = smul.addr %s324, 8
          %s328 = sadd.s32 %s326, %s327
          %s329 = smul.addr %s328, 4
          %s330 = scalar_lea.vmem %s0, %s329
          %s331 = sadd.s32 %s26, 1
          %s332 = smul.u32 2, %s331
        $region32: #{joint_block_forward.9} parent=27 // pred_fallthru
          _
        // Predicated region
        $region33: #{joint_block_forward.9} parent=27 // pred_check
          %p333 = pneg %p89
        $region34: #{joint_block_forward.9} parent=27 // pred_check_branch
          %335 = sbr.rel (%p333) target = $region36
        $region35: #{joint_block_forward.9} parent=27 // pred_region
          %s336 = smul.u32 2, %s26
          %p337 = scmp.lt.s32.totalorder %s25, 1
          %s338 = scalar_select %p337, %s25, 1
          %p339 = scmp.lt.s32.totalorder %s336, 5
          %s340 = scalar_select %p339, %s336, 5
          %s341 = smul.addr %s338, 6
          %s342 = sadd.s32 %s340, %s341
          %s343 = smul.addr %s342, 8
          %s344 = scalar_lea.vmem %s1, %s343
          %s345 = smul.u32 2, %s26
        $region36: #{joint_block_forward.9} parent=27 // pred_fallthru
          _
        // Predicated region
        $region37: #{joint_block_forward.9} parent=27 // pred_check
          %p346 = pneg %p115
        $region38: #{joint_block_forward.9} parent=27 // pred_check_branch
          %348 = sbr.rel (%p346) target = $region40
        $region39: #{joint_block_forward.9} parent=27 // pred_region
          %p349 = scmp.lt.s32.totalorder %s25, 1
          %s350 = scalar_select %p349, %s25, 1
          %s351 = sadd.s32 %s350, 2
          %s352 = smul.addr %s351, 8
          %s353 = scalar_lea.vmem %s2, %s352
        $region40: #{joint_block_forward.9} parent=27 // pred_fallthru
          _
        // Predicated region
        $region41: #{joint_block_forward.9} parent=27 // pred_check
          %p354 = pneg %p183
        $region42: #{joint_block_forward.9} parent=27 // pred_check_branch
          %356 = sbr.rel (%p354) target = $region44
        $region43: #{joint_block_forward.9} parent=27 // pred_region
          %s357 = sand.u32 %s173, 1
          %s358 = sand.u32 %s173, 1
          %s359 = smul.addr %s358, 64
          %s360 = scalar_lea.vmem [#allocation5], %s359
          %s361 = smul.addr %s27, 4
          %s362 = scalar_lea.vmem %s5, %s361
          // Predicated region
          $region45: #{joint_block_forward.9} parent=43 // pred_check
            _
          $region46: #{joint_block_forward.9} parent=43 // pred_check_branch
            %364 = sbr.rel (0) target = $region48
          $region47: #{joint_block_forward.9} parent=43 // pred_region
            // Predicated region
            $region49: #{joint_block_forward.9} parent=47 // pred_check
              _
            $region50: #{joint_block_forward.9} parent=47 // pred_check_branch
              %366 = sbr.rel target = $region52
            $region51: #{joint_block_forward.9} parent=47 // pred_region
              // Predicated region
              $region64: #{joint_block_forward.9} parent=51 // pred_check
                _
              $region65: #{joint_block_forward.9} parent=51 // pred_check_branch
                %411 = sbr.rel (0) target = $region67
              $region66: #{joint_block_forward.9} parent=51 // pred_region
                loop: start=0, step=1, limit=1
                $region68: #{joint_block_forward.9} parent=66 // loop_pre_header
                  _
                $region69: #{joint_block_forward.9} parent=66 // loop_header
                  %s413 = sphi 0, %s417
                  %p414 = scmp.ge.s32.totalorder %s413, 1
                  %s418 = sphi %s362, %s362
                  %s419 = sphi %s360, %s360
                $region70: #{joint_block_forward.9} parent=66 // loop_header_branch
                  %416 = sbr.rel (%p414) target = $region74
                $region71: #{joint_block_forward.9} parent=66 // loop_body
                  _
                $region72: #{joint_block_forward.9} parent=66 // loop_footer
                  %s417 = sadd.s32 1, %s413
                $region73: #{joint_block_forward.9} parent=66 // loop_footer_branch
                  %412 = sbr.rel target = $region69
                $region74: #{joint_block_forward.9} parent=66 // loop_exit
                  _
                loop: start=0, step=1, limit=1
                $region75: #{joint_block_forward.9} parent=66 // loop_pre_header
                  _
                $region76: #{joint_block_forward.9} parent=66 // loop_header
                  %s422 = sphi 0, %s426
                  %p423 = scmp.ge.s32.totalorder %s422, 1
                  %s427 = sphi %s362, %s362
                  %s428 = sphi %s360, %s360
                $region77: #{joint_block_forward.9} parent=66 // loop_header_branch
                  %425 = sbr.rel (%p423) target = $region81
                $region78: #{joint_block_forward.9} parent=66 // loop_body
                  %v429 = vld [vmem:[%s427] sm:$0xf]
                  %430 = vst [vmem:[%s428] sm:$0xf] %v429
                  %v431 = vld [vmem:[%s427 + $0x10] sm:$0xf]
                  %432 = vst [vmem:[%s428 + $0x4] sm:$0xf] %v431
                  %v433 = vld [vmem:[%s427 + $0x20] sm:$0xf]
                  %434 = vst [vmem:[%s428 + $0x8] sm:$0xf] %v433
                  %v435 = vld [vmem:[%s427 + $0x30] sm:$0xf]
                  %436 = vst [vmem:[%s428 + $0xc] sm:$0xf] %v435
                  %v437 = vld [vmem:[%s427 + $0x40] sm:$0xf]
                  %438 = vst [vmem:[%s428 + $0x10] sm:$0xf] %v437
                  %v439 = vld [vmem:[%s427 + $0x50] sm:$0xf]
                  %440 = vst [vmem:[%s428 + $0x14] sm:$0xf] %v439
                  %v441 = vld [vmem:[%s427 + $0x60] sm:$0xf]
                  %442 = vst [vmem:[%s428 + $0x18] sm:$0xf] %v441
                  %v443 = vld [vmem:[%s427 + $0x70] sm:$0xf]
                  %444 = vst [vmem:[%s428 + $0x1c] sm:$0xf] %v443
                  %v445 = vld [vmem:[%s427 + $0x80] sm:$0xf]
                  %446 = vst [vmem:[%s428 + $0x20] sm:$0xf] %v445
                  %v447 = vld [vmem:[%s427 + $0x90] sm:$0xf]
                  %448 = vst [vmem:[%s428 + $0x24] sm:$0xf] %v447
                  %v449 = vld [vmem:[%s427 + $0xa0] sm:$0xf]
                  %450 = vst [vmem:[%s428 + $0x28] sm:$0xf] %v449
                  %v451 = vld [vmem:[%s427 + $0xb0] sm:$0xf]
                  %452 = vst [vmem:[%s428 + $0x2c] sm:$0xf] %v451
                  %v453 = vld [vmem:[%s427 + $0xc0] sm:$0xf]
                  %454 = vst [vmem:[%s428 + $0x30] sm:$0xf] %v453
                  %v455 = vld [vmem:[%s427 + $0xd0] sm:$0xf]
                  %456 = vst [vmem:[%s428 + $0x34] sm:$0xf] %v455
                  %v457 = vld [vmem:[%s427 + $0xe0] sm:$0xf]
                  %458 = vst [vmem:[%s428 + $0x38] sm:$0xf] %v457
                  %v459 = vld [vmem:[%s427 + $0xf0] sm:$0xf]
                  %460 = vst [vmem:[%s428 + $0x3c] sm:$0xf] %v459
                $region79: #{joint_block_forward.9} parent=66 // loop_footer
                  %s426 = sadd.s32 1, %s422
                $region80: #{joint_block_forward.9} parent=66 // loop_footer_branch
                  %421 = sbr.rel target = $region76
                $region81: #{joint_block_forward.9} parent=66 // loop_exit
                  _
              $region67: #{joint_block_forward.9} parent=51 // pred_fallthru
                _
            $region52: #{joint_block_forward.9} parent=47 // pred_fallthru
              _
            // Predicated region
            $region53: #{joint_block_forward.9} parent=47 // pred_check
              _
            $region54: #{joint_block_forward.9} parent=47 // pred_check_branch
              %368 = sbr.rel (0) target = $region56
            $region55: #{joint_block_forward.9} parent=47 // pred_region
              loop: start=0, step=1, limit=1
              $region57: #{joint_block_forward.9} parent=55 // loop_pre_header
                _
              $region58: #{joint_block_forward.9} parent=55 // loop_header
                %s371 = sphi 0, %s375
                %p372 = scmp.ge.s32.totalorder %s371, 1
                %s376 = sphi %s362, %s362
                %s377 = sphi %s360, %s360
              $region59: #{joint_block_forward.9} parent=55 // loop_header_branch
                %374 = sbr.rel (%p372) target = $region63
              $region60: #{joint_block_forward.9} parent=55 // loop_body
                %v378 = vld [vmem:[%s376] sm:$0xf]
                %379 = vst [vmem:[%s377] sm:$0xf] %v378
                %v380 = vld [vmem:[%s376 + $0x10] sm:$0xf]
                %381 = vst [vmem:[%s377 + $0x4] sm:$0xf] %v380
                %v382 = vld [vmem:[%s376 + $0x20] sm:$0xf]
                %383 = vst [vmem:[%s377 + $0x8] sm:$0xf] %v382
                %v384 = vld [vmem:[%s376 + $0x30] sm:$0xf]
                %385 = vst [vmem:[%s377 + $0xc] sm:$0xf] %v384
                %v386 = vld [vmem:[%s376 + $0x40] sm:$0xf]
                %387 = vst [vmem:[%s377 + $0x10] sm:$0xf] %v386
                %v388 = vld [vmem:[%s376 + $0x50] sm:$0xf]
                %389 = vst [vmem:[%s377 + $0x14] sm:$0xf] %v388
                %v390 = vld [vmem:[%s376 + $0x60] sm:$0xf]
                %391 = vst [vmem:[%s377 + $0x18] sm:$0xf] %v390
                %v392 = vld [vmem:[%s376 + $0x70] sm:$0xf]
                %393 = vst [vmem:[%s377 + $0x1c] sm:$0xf] %v392
                %v394 = vld [vmem:[%s376 + $0x80] sm:$0xf]
                %395 = vst [vmem:[%s377 + $0x20] sm:$0xf] %v394
                %v396 = vld [vmem:[%s376 + $0x90] sm:$0xf]
                %397 = vst [vmem:[%s377 + $0x24] sm:$0xf] %v396
                %v398 = vld [vmem:[%s376 + $0xa0] sm:$0xf]
                %399 = vst [vmem:[%s377 + $0x28] sm:$0xf] %v398
                %v400 = vld [vmem:[%s376 + $0xb0] sm:$0xf]
                %401 = vst [vmem:[%s377 + $0x2c] sm:$0xf] %v400
                %v402 = vld [vmem:[%s376 + $0xc0] sm:$0xf]
                %403 = vst [vmem:[%s377 + $0x30] sm:$0xf] %v402
                %v404 = vld [vmem:[%s376 + $0xd0] sm:$0xf]
                %405 = vst [vmem:[%s377 + $0x34] sm:$0xf] %v404
                %v406 = vld [vmem:[%s376 + $0xe0] sm:$0xf]
                %407 = vst [vmem:[%s377 + $0x38] sm:$0xf] %v406
                %v408 = vld [vmem:[%s376 + $0xf0] sm:$0xf]
                %409 = vst [vmem:[%s377 + $0x3c] sm:$0xf] %v408
              $region61: #{joint_block_forward.9} parent=55 // loop_footer
                %s375 = sadd.s32 1, %s371
              $region62: #{joint_block_forward.9} parent=55 // loop_footer_branch
                %370 = sbr.rel target = $region58
              $region63: #{joint_block_forward.9} parent=55 // loop_exit
                _
            $region56: #{joint_block_forward.9} parent=47 // pred_fallthru
              _
          $region48: #{joint_block_forward.9} parent=43 // pred_fallthru
            _
          %461 = vnop
        $region44: #{joint_block_forward.9} parent=27 // pred_fallthru
          _
        // Predicated region
        $region82: #{joint_block_forward.9} parent=27 // pred_check
          %p462 = pneg %p209
        $region83: #{joint_block_forward.9} parent=27 // pred_check_branch
          %464 = sbr.rel (%p462) target = $region85
        $region84: #{joint_block_forward.9} parent=27 // pred_region
          %p465 = scmp.lt.s32.totalorder %s27, 3
          %s466 = scalar_select %p465, %s27, 3
          %s467 = scalar_lea.vmem %s6, %s466
        $region85: #{joint_block_forward.9} parent=27 // pred_fallthru
          _
        // Predicated region
        $region86: #{joint_block_forward.9} parent=27 // pred_check
          %p468 = pneg %p235
        $region87: #{joint_block_forward.9} parent=27 // pred_check_branch
          %470 = sbr.rel (%p468) target = $region89
        $region88: #{joint_block_forward.9} parent=27 // pred_region
          %s471 = smul.u32 16, %s27
          %p472 = scmp.lt.s32.totalorder %s471, 63
          %s473 = scalar_select %p472, %s471, 63
          %s474 = smul.addr %s473, 4
          %s475 = scalar_lea.vmem %s7, %s474
          %s476 = smul.u32 16, %s27
        $region89: #{joint_block_forward.9} parent=27 // pred_fallthru
          _
      $region28: #{joint_block_forward.9} parent=5 // pred_fallthru
        _
      %p477 = scmp.le.s32.totalorder 1, %s18
      %p478 = scmp.lt.s32.totalorder %s18, 25
      %p479 = pnand %p477, %p478
      %p480 = pneg %p479
      // Predicated region
      $region90: #{joint_block_forward.9} parent=5 // pred_check
        _
      $region91: #{joint_block_forward.9} parent=5 // pred_check_branch
        %482 = sbr.rel (%p479) target = $region93
      $region92: #{joint_block_forward.9} parent=5 // pred_region
        %s483 = ssub.s32 %s18, 1
        %s484 = sand.u32 %s176, 1
        %s485 = sand.u32 %s176, 1
        %s486 = smul.addr %s485, 64
        %s487 = scalar_lea.vmem [#allocation5], %s486
        // Predicated region
        $region94: #{joint_block_forward.9} parent=92 // pred_check
          %p488 = pneg %p189
        $region95: #{joint_block_forward.9} parent=92 // pred_check_branch
          %490 = sbr.rel (%p488) target = $region97
        $region96: #{joint_block_forward.9} parent=92 // pred_region
          _
        $region97: #{joint_block_forward.9} parent=92 // pred_fallthru
          _
        %s491 = sadd.s32 %s29, 1
        %s492 = smul.u32 2, %s491
        %p493 = scmp.lt.s32.totalorder %s28, 1
        %s494 = scalar_select %p493, %s28, 1
        %p495 = scmp.lt.s32.totalorder %s492, 7
        %s496 = scalar_select %p495, %s492, 7
        %s497 = smul.addr %s494, 8
        %s498 = sadd.s32 %s496, %s497
        %s499 = smul.addr %s498, 4
        %s500 = scalar_lea.vmem %s0, %s499
        %p501 = pneg %p67
        %p502 = pneg %p64
        %s503 = smul.u32 2, %s29
        %p504 = scmp.lt.s32.totalorder %s28, 1
        %s505 = scalar_select %p504, %s28, 1
        %p506 = scmp.lt.s32.totalorder %s503, 5
        %s507 = scalar_select %p506, %s503, 5
        %s508 = smul.addr %s505, 6
        %s509 = sadd.s32 %s507, %s508
        %s510 = smul.addr %s509, 8
        %s511 = scalar_lea.vmem %s1, %s510
        %p512 = pneg %p95
        %p513 = pneg %p92
        %p514 = scmp.lt.s32.totalorder %s28, 1
        %s515 = scalar_select %p514, %s28, 1
        %s516 = sadd.s32 %s515, 2
        %s517 = smul.addr %s516, 8
        %s518 = scalar_lea.vmem %s2, %s517
        %p519 = pneg %p121
        %p520 = pneg %p118
        %p521 = pneg %p142
        %p522 = pneg %p139
        %p523 = pneg %p163
        %p524 = pneg %p160
        %s525 = sand.u32 %s176, 1
        %s526 = sand.u32 %s176, 1
        %s527 = smul.addr %s526, 64
        %s528 = scalar_lea.vmem [#allocation5], %s527
        %p529 = pneg %p189
        %p530 = pneg %p186
        %p531 = scmp.lt.s32.totalorder %s30, 3
        %s532 = scalar_select %p531, %s30, 3
        %s533 = scalar_lea.vmem %s6, %s532
        %p534 = pneg %p215
        %p535 = pneg %p212
        %s536 = smul.u32 16, %s30
        %p537 = scmp.lt.s32.totalorder %s536, 63
        %s538 = scalar_select %p537, %s536, 63
        %s539 = smul.addr %s538, 4
        %s540 = scalar_lea.vmem %s7, %s539
        %p541 = pneg %p241
        %p542 = pneg %p238
        %p543 = pneg %p262
        %p544 = pneg %p259
        %p545 = pneg %p290
        %p546 = pneg %p287
        %s547 = sand.u32 %s277, 1
        %s548 = scalar_lea.sflag [#allocation7], %s547
        %s549 = sand.u32 %s277, 1
        %s550 = smul.addr %s549, 16
        %s551 = scalar_lea.vmem [#allocation6], %s550
        %s552 = sadd.s32 %s29, 1
        %s553 = smul.u32 2, %s552
        %p554 = scmp.lt.s32.totalorder %s28, 1
        %s555 = scalar_select %p554, %s28, 1
        %p556 = scmp.lt.s32.totalorder %s553, 7
        %s557 = scalar_select %p556, %s553, 7
        %s558 = smul.addr %s555, 8
        %s559 = sadd.s32 %s557, %s558
        %s560 = smul.addr %s559, 4
        %s561 = scalar_lea.vmem %s0, %s560
        %s562 = sadd.s32 %s29, 1
        %s563 = smul.u32 2, %s562
        %s564 = smul.u32 2, %s29
        %p565 = scmp.lt.s32.totalorder %s28, 1
        %s566 = scalar_select %p565, %s28, 1
        %p567 = scmp.lt.s32.totalorder %s564, 5
        %s568 = scalar_select %p567, %s564, 5
        %s569 = smul.addr %s566, 6
        %s570 = sadd.s32 %s568, %s569
        %s571 = smul.addr %s570, 8
        %s572 = scalar_lea.vmem %s1, %s571
        %s573 = smul.u32 2, %s29
        %p574 = scmp.lt.s32.totalorder %s28, 1
        %s575 = scalar_select %p574, %s28, 1
        %s576 = sadd.s32 %s575, 2
        %s577 = smul.addr %s576, 8
        %s578 = scalar_lea.vmem %s2, %s577
        %p579 = scmp.lt.s32.totalorder %s30, 3
        %s580 = scalar_select %p579, %s30, 3
        %s581 = scalar_lea.vmem %s6, %s580
        %s582 = smul.u32 16, %s30
        %p583 = scmp.lt.s32.totalorder %s582, 63
        %s584 = scalar_select %p583, %s582, 63
        %s585 = smul.addr %s584, 4
        %s586 = scalar_lea.vmem %s7, %s585
        %s587 = smul.u32 16, %s30
        %s588 = smul.u32 2, %s29
        %p590 = scmp.eq.s32.totalorder %s30, 0
        // Predicated region
        $region98: #{joint_block_forward.9} parent=92 // pred_check
          %p591 = pneg %p590
        $region99: #{joint_block_forward.9} parent=92 // pred_check_branch
          %593 = sbr.rel (%p591) target = $region101
        $region100: #{joint_block_forward.9} parent=92 // pred_region
          %v594 = vld [vmem:[%s578] sm:$0x3f]
          %v595 = vld [vmem:[%s561] sm:$0xf]
          %v596 = vld [vmem:[%s561 + $0x4] sm:$0xf]
          %v597 = vld [vmem:[%s3] sm:$0xf]
          %v598 = vld [vmem:[%s3 + $0x4] sm:$0xf]
          %v599 = vld [vmem:[%s3 + $0x8] sm:$0xf]
          %v600 = vld [vmem:[%s3 + $0xc] sm:$0xf]
          %v601 = vld [vmem:[%s3 + $0x10] sm:$0xf]
          %v602 = vld [vmem:[%s3 + $0x14] sm:$0xf]
          %v603 = vld [vmem:[%s3 + $0x18] sm:$0xf]
          %v604 = vld [vmem:[%s3 + $0x1c] sm:$0xf]
          %v605 = vld [vmem:[%s3 + $0x20] sm:$0xf]
          %v606 = vld [vmem:[%s3 + $0x24] sm:$0xf]
          %v607 = vld [vmem:[%s3 + $0x28] sm:$0xf]
          %v608 = vld [vmem:[%s3 + $0x2c] sm:$0xf]
          %v609 = vld [vmem:[%s3 + $0x30] sm:$0xf]
          %v610 = vld [vmem:[%s3 + $0x34] sm:$0xf]
          %v611 = vld [vmem:[%s3 + $0x38] sm:$0xf]
          %v612 = vld [vmem:[%s3 + $0x3c] sm:$0xf]
          %v613 = vld [vmem:[%s4] sm:$0x1]
          %v615 = vlaneseq
          %v616 = vshrl.u32 %v615, 7
          %v617 = vsub.s32 0, %v616
          %v618 = vrot.slane %v613, %v617
          %v622 = vunpack.c.l.b16 %v595
          %v623 = vunpack.c.l.b16 %v596
          %v624 = vpack.c.b16 %v623, %v622
          %v642 = vunpack.c.l.b16 %v597
          %v643 = vunpack.c.l.b16 %v598
          %v644 = vunpack.c.l.b16 %v599
          %v645 = vunpack.c.l.b16 %v600
          %v646 = vunpack.c.l.b16 %v601
          %v647 = vunpack.c.l.b16 %v602
          %v648 = vunpack.c.l.b16 %v603
          %v649 = vunpack.c.l.b16 %v604
          %v650 = vunpack.c.l.b16 %v605
          %v651 = vunpack.c.l.b16 %v606
          %v652 = vunpack.c.l.b16 %v607
          %v653 = vunpack.c.l.b16 %v608
          %v654 = vunpack.c.l.b16 %v609
          %v655 = vunpack.c.l.b16 %v610
          %v656 = vunpack.c.l.b16 %v611
          %v657 = vunpack.c.l.b16 %v612
          %v658 = vpack.c.b16 %v643, %v642
          %v659 = vpack.c.b16 %v645, %v644
          %v660 = vpack.c.b16 %v647, %v646
          %v661 = vpack.c.b16 %v649, %v648
          %v662 = vpack.c.b16 %v651, %v650
          %v663 = vpack.c.b16 %v653, %v652
          %v664 = vpack.c.b16 %v655, %v654
          %v665 = vpack.c.b16 %v657, %v656
          %674 = vmatprep.subr.bf16.mxu0 0
          %675 = vmatpush1.bf16.msra.mxu0 %v658
          %676 = vmatprep.subr.bf16.mxu0 0
          %677 = vmatpush1.bf16.msra.mxu0 %v659
          %678 = vmatprep.subr.bf16.mxu0 0
          %679 = vmatpush1.bf16.msra.mxu0 %v660
          %680 = vmatprep.subr.bf16.mxu0 0
          %681 = vmatpush1.bf16.msra.mxu0 %v661
          %682 = vmatprep.subr.bf16.mxu0 0
          %683 = vmatpush1.bf16.msra.mxu0 %v662
          %684 = vmatprep.subr.bf16.mxu0 0
          %685 = vmatpush1.bf16.msra.mxu0 %v663
          %686 = vmatprep.subr.bf16.mxu0 0
          %687 = vmatpush1.bf16.msra.mxu0 %v664
          %688 = vmatprep.subr.bf16.mxu0 0
          %689 = vmatpush1.bf16.msra.mxu0 %v665
          %690 = vmatprep.subr.bf16.mxu0 0
          %691 = vmatpush1.bf16.msra.mxu0 0
          %692 = vmatprep.subr.bf16.mxu0 0
          %693 = vmatpush1.bf16.msra.mxu0 0
          %694 = vmatprep.subr.bf16.mxu0 0
          %695 = vmatpush1.bf16.msra.mxu0 0
          %696 = vmatprep.subr.bf16.mxu0 0
          %697 = vmatpush1.bf16.msra.mxu0 0
          %698 = vmatprep.subr.bf16.mxu0 0
          %699 = vmatpush1.bf16.msra.mxu0 0
          %700 = vmatprep.subr.bf16.mxu0 0
          %701 = vmatpush1.bf16.msra.mxu0 0
          %702 = vmatprep.subr.bf16.mxu0 0
          %703 = vmatpush1.bf16.msra.mxu0 0
          %704 = vmatprep.subr.bf16.mxu0 0
          %705 = vmatpush1.bf16.msra.mxu0 0
          %706 = vmatprep.mubr.bf16.mxu0 0
          %707 = vmatmul.mubr.bf16.gmra.mrb[0].mxu0 %v624
          %v708 = vpop.f32.mrb[0].mxu0
          %v709 = vadd.f32 %v618, %v708
          %v710 = vpop.f32.mrb[0].mxu0
          %v711 = vpop.f32.mrb[0].mxu0
          %v712 = vadd.f32 %v618, %v711
          %v713 = vpop.f32.mrb[0].mxu0
          %714 = vdwg.mxu0
          %v715 = vlaneseq
          %v716 = vshrl.u32 %v715, 7
          %v717 = vsub.s32 2, %v716
          %v718 = vrot.slane %v594, %v717
          %v719 = vmul.f32 %v709, %v718
          %v720 = vmul.f32 %v712, %v718
          %v721 = vld [vmem:[%s572] sm:$0xff]
          %v722 = vld [vmem:[%s572 + $0x8] sm:$0xff]
          %v723 = vadd.f32 %v719, %v721
          %v724 = vadd.f32 %v720, %v722
          %725 = vst [vmem:[#allocation2] sm:$0xff] %v723
          %726 = vst [vmem:[#allocation2 + $0x8] sm:$0xff] %v724
          %v727 = vmul.f32 %v723, %v723
          %v728 = vmul.f32 %v724, %v724
          %729 = vadd.xlane.f32.xlu0 %v727
          %v730 = vpop.xlane.xlu0 %729
          %731 = vadd.xlane.f32.xlu0 %v728
          %v732 = vpop.xlane.xlu0 %731
          %v733 = vrcp.pop 128.0
          %v734 = vmul.f32 %v730, %v733
          %v735 = vmul.f32 %v732, %v733
          %v736 = vadd.f32 %v734, 1e-06
          %v737 = vadd.f32 %v735, 1e-06
          %v738 = vrsqrt.pop %v736
          %v739 = vrsqrt.pop %v737
          %v740 = vmul.f32 %v723, %v738
          %v741 = vmul.f32 %v724, %v739
          %v742 = vadd.f32 %v594, 1.0
          %v743 = vlaneseq
          %v744 = vshrl.u32 %v743, 7
          %v745 = vsub.s32 4, %v744
          %v746 = vrot.slane %v742, %v745
          %v747 = vmul.f32 %v740, %v746
          %v748 = vmul.f32 %v741, %v746
          %v749 = vlaneseq
          %v750 = vshrl.u32 %v749, 7
          %v751 = vsub.s32 3, %v750
          %v752 = vrot.slane %v594, %v751
          %v753 = vadd.f32 %v747, %v752
          %v754 = vadd.f32 %v748, %v752
          %v755 = vpack.c.bf16 %v754, %v753
          %756 = vst [vmem:[#allocation3] sm:$0xff] %v755
          %757 = vst [vmem:[#allocation4] sm:$0xff] 0.0
          %758 = vst [vmem:[#allocation4 + $0x8] sm:$0xff] 0.0
        $region101: #{joint_block_forward.9} parent=92 // pred_fallthru
          _
        %v759 = vld [vmem:[#allocation3] sm:$0xff]
        %v760 = vld [vmem:[%s487] sm:$0xf]
        %v761 = vld [vmem:[%s487 + $0x4] sm:$0xf]
        %v762 = vld [vmem:[%s487 + $0x8] sm:$0xf]
        %v763 = vld [vmem:[%s487 + $0xc] sm:$0xf]
        %v764 = vld [vmem:[%s487 + $0x10] sm:$0xf]
        %v765 = vld [vmem:[%s487 + $0x14] sm:$0xf]
        %v766 = vld [vmem:[%s487 + $0x18] sm:$0xf]
        %v767 = vld [vmem:[%s487 + $0x1c] sm:$0xf]
        %v768 = vld [vmem:[%s487 + $0x20] sm:$0xf]
        %v769 = vld [vmem:[%s487 + $0x24] sm:$0xf]
        %v770 = vld [vmem:[%s487 + $0x28] sm:$0xf]
        %v771 = vld [vmem:[%s487 + $0x2c] sm:$0xf]
        %v772 = vld [vmem:[%s487 + $0x30] sm:$0xf]
        %v773 = vld [vmem:[%s487 + $0x34] sm:$0xf]
        %v774 = vld [vmem:[%s487 + $0x38] sm:$0xf]
        %v775 = vld [vmem:[%s487 + $0x3c] sm:$0xf]
        %v776 = vld [vmem:[%s581] sm:$0x1]
        %v778 = vlaneseq
        %v779 = vshrl.u32 %v778, 7
        %v780 = vsub.s32 0, %v779
        %v781 = vrot.slane %v776, %v780
        %v799 = vunpack.c.l.b16 %v760
        %v800 = vunpack.c.l.b16 %v761
        %v801 = vunpack.c.l.b16 %v762
        %v802 = vunpack.c.l.b16 %v763
        %v803 = vunpack.c.l.b16 %v764
        %v804 = vunpack.c.l.b16 %v765
        %v805 = vunpack.c.l.b16 %v766
        %v806 = vunpack.c.l.b16 %v767
        %v807 = vunpack.c.l.b16 %v768
        %v808 = vunpack.c.l.b16 %v769
        %v809 = vunpack.c.l.b16 %v770
        %v810 = vunpack.c.l.b16 %v771
        %v811 = vunpack.c.l.b16 %v772
        %v812 = vunpack.c.l.b16 %v773
        %v813 = vunpack.c.l.b16 %v774
        %v814 = vunpack.c.l.b16 %v775
        %v815 = vpack.c.b16 %v800, %v799
        %v816 = vpack.c.b16 %v802, %v801
        %v817 = vpack.c.b16 %v804, %v803
        %v818 = vpack.c.b16 %v806, %v805
        %v819 = vpack.c.b16 %v808, %v807
        %v820 = vpack.c.b16 %v810, %v809
        %v821 = vpack.c.b16 %v812, %v811
        %v822 = vpack.c.b16 %v814, %v813
        %831 = vmatprep.subr.bf16.mxu0 0
        %832 = vmatpush1.bf16.msra.mxu0 %v815
        %833 = vmatprep.subr.bf16.mxu0 0
        %834 = vmatpush1.bf16.msra.mxu0 %v816
        %835 = vmatprep.subr.bf16.mxu0 0
        %836 = vmatpush1.bf16.msra.mxu0 %v817
        %837 = vmatprep.subr.bf16.mxu0 0
        %838 = vmatpush1.bf16.msra.mxu0 %v818
        %839 = vmatprep.subr.bf16.mxu0 0
        %840 = vmatpush1.bf16.msra.mxu0 %v819
        %841 = vmatprep.subr.bf16.mxu0 0
        %842 = vmatpush1.bf16.msra.mxu0 %v820
        %843 = vmatprep.subr.bf16.mxu0 0
        %844 = vmatpush1.bf16.msra.mxu0 %v821
        %845 = vmatprep.subr.bf16.mxu0 0
        %846 = vmatpush1.bf16.msra.mxu0 %v822
        %847 = vmatprep.subr.bf16.mxu0 0
        %848 = vmatpush1.bf16.msra.mxu0 0
        %849 = vmatprep.subr.bf16.mxu0 0
        %850 = vmatpush1.bf16.msra.mxu0 0
        %851 = vmatprep.subr.bf16.mxu0 0
        %852 = vmatpush1.bf16.msra.mxu0 0
        %853 = vmatprep.subr.bf16.mxu0 0
        %854 = vmatpush1.bf16.msra.mxu0 0
        %855 = vmatprep.subr.bf16.mxu0 0
        %856 = vmatpush1.bf16.msra.mxu0 0
        %857 = vmatprep.subr.bf16.mxu0 0
        %858 = vmatpush1.bf16.msra.mxu0 0
        %859 = vmatprep.subr.bf16.mxu0 0
        %860 = vmatpush1.bf16.msra.mxu0 0
        %861 = vmatprep.subr.bf16.mxu0 0
        %862 = vmatpush1.bf16.msra.mxu0 0
        %863 = vmatprep.mubr.bf16.mxu0 0
        %864 = vmatmul.mubr.bf16.gmra.mrb[0].mxu0 %v759
        %v865 = vpop.f32.mrb[0].mxu0
        %v866 = vadd.f32 %v781, %v865
        %v867 = vpop.f32.mrb[0].mxu0
        %v868 = vpop.f32.mrb[0].mxu0
        %v869 = vadd.f32 %v781, %v868
        %v870 = vpop.f32.mrb[0].mxu0
        %871 = vdwg.mxu0
        %v872 = vmul.f32 %v866, 0.5
        %v873 = vmul.f32 %v869, 0.5
        %v874 = vmul.f32 %v866, 0.044715
        %v875 = vmul.f32 %v869, 0.044715
        %v876 = vmul.f32 %v874, %v866
        %v877 = vmul.f32 %v875, %v869
        %v878 = vmul.f32 %v876, %v866
        %v879 = vmul.f32 %v877, %v869
        %v880 = vadd.f32 %v866, %v878
        %v881 = vadd.f32 %v869, %v879
        %v882 = vmul.f32 %v880, 0.7978846
        %v883 = vmul.f32 %v881, 0.7978846
        %v884 = vtanh.pop %v882
        %v885 = vtanh.pop %v883
        %v886 = vadd.f32 %v884, 1.0
        %v887 = vadd.f32 %v885, 1.0
        %v888 = vmul.f32 %v872, %v886
        %v889 = vmul.f32 %v873, %v887
        %v890 = vpack.c.bf16 %v889, %v888
        %v891 = vld [vmem:[#allocation4] sm:$0xff]
        %v892 = vld [vmem:[#allocation4 + $0x8] sm:$0xff]
        %v893 = vld [vmem:[%s586] sm:$0xf]
        %v894 = vld [vmem:[%s586 + $0x4] sm:$0xf]
        %v895 = vld [vmem:[%s586 + $0x8] sm:$0xf]
        %v896 = vld [vmem:[%s586 + $0xc] sm:$0xf]
        %v897 = vld [vmem:[%s586 + $0x10] sm:$0xf]
        %v898 = vld [vmem:[%s586 + $0x14] sm:$0xf]
        %v899 = vld [vmem:[%s586 + $0x18] sm:$0xf]
        %v900 = vld [vmem:[%s586 + $0x1c] sm:$0xf]
        %v901 = vld [vmem:[%s586 + $0x20] sm:$0xf]
        %v902 = vld [vmem:[%s586 + $0x24] sm:$0xf]
        %v903 = vld [vmem:[%s586 + $0x28] sm:$0xf]
        %v904 = vld [vmem:[%s586 + $0x2c] sm:$0xf]
        %v905 = vld [vmem:[%s586 + $0x30] sm:$0xf]
        %v906 = vld [vmem:[%s586 + $0x34] sm:$0xf]
        %v907 = vld [vmem:[%s586 + $0x38] sm:$0xf]
        %v908 = vld [vmem:[%s586 + $0x3c] sm:$0xf]
        %v925 = vunpack.c.l.b16 %v893
        %v926 = vunpack.c.l.b16 %v894
        %v927 = vunpack.c.l.b16 %v895
        %v928 = vunpack.c.l.b16 %v896
        %v929 = vunpack.c.l.b16 %v897
        %v930 = vunpack.c.l.b16 %v898
        %v931 = vunpack.c.l.b16 %v899
        %v932 = vunpack.c.l.b16 %v900
        %v933 = vunpack.c.l.b16 %v901
        %v934 = vunpack.c.l.b16 %v902
        %v935 = vunpack.c.l.b16 %v903
        %v936 = vunpack.c.l.b16 %v904
        %v937 = vunpack.c.l.b16 %v905
        %v938 = vunpack.c.l.b16 %v906
        %v939 = vunpack.c.l.b16 %v907
        %v940 = vunpack.c.l.b16 %v908
        %v941 = vpack.c.b16 %v926, %v925
        %v942 = vpack.c.b16 %v928, %v927
        %v943 = vpack.c.b16 %v930, %v929
        %v944 = vpack.c.b16 %v932, %v931
        %v945 = vpack.c.b16 %v934, %v933
        %v946 = vpack.c.b16 %v936, %v935
        %v947 = vpack.c.b16 %v938, %v937
        %v948 = vpack.c.b16 %v940, %v939
        %957 = vmatprep.subr.bf16.mxu0 0
        %958 = vmatpush1.bf16.msra.mxu0 %v941
        %959 = vmatprep.subr.bf16.mxu0 0
        %960 = vmatpush1.bf16.msra.mxu0 %v942
        %961 = vmatprep.subr.bf16.mxu0 0
        %962 = vmatpush1.bf16.msra.mxu0 %v943
        %963 = vmatprep.subr.bf16.mxu0 0
        %964 = vmatpush1.bf16.msra.mxu0 %v944
        %965 = vmatprep.subr.bf16.mxu0 0
        %966 = vmatpush1.bf16.msra.mxu0 %v945
        %967 = vmatprep.subr.bf16.mxu0 0
        %968 = vmatpush1.bf16.msra.mxu0 %v946
        %969 = vmatprep.subr.bf16.mxu0 0
        %970 = vmatpush1.bf16.msra.mxu0 %v947
        %971 = vmatprep.subr.bf16.mxu0 0
        %972 = vmatpush1.bf16.msra.mxu0 %v948
        %973 = vmatprep.subr.bf16.mxu0 0
        %974 = vmatpush1.bf16.msra.mxu0 0
        %975 = vmatprep.subr.bf16.mxu0 0
        %976 = vmatpush1.bf16.msra.mxu0 0
        %977 = vmatprep.subr.bf16.mxu0 0
        %978 = vmatpush1.bf16.msra.mxu0 0
        %979 = vmatprep.subr.bf16.mxu0 0
        %980 = vmatpush1.bf16.msra.mxu0 0
        %981 = vmatprep.subr.bf16.mxu0 0
        %982 = vmatpush1.bf16.msra.mxu0 0
        %983 = vmatprep.subr.bf16.mxu0 0
        %984 = vmatpush1.bf16.msra.mxu0 0
        %985 = vmatprep.subr.bf16.mxu0 0
        %986 = vmatpush1.bf16.msra.mxu0 0
        %987 = vmatprep.subr.bf16.mxu0 0
        %988 = vmatpush1.bf16.msra.mxu0 0
        %989 = vmatprep.mubr.bf16.mxu0 0
        %990 = vmatmul.mubr.bf16.gmra.mrb[0].mxu0 %v890
        %v991 = vpop.f32.mrb[0].mxu0
        %v992 = vadd.f32 0.0, %v991
        %v993 = vpop.f32.mrb[0].mxu0
        %v994 = vpop.f32.mrb[0].mxu0
        %v995 = vadd.f32 0.0, %v994
        %v996 = vpop.f32.mrb[0].mxu0
        %997 = vdwg.mxu0
        %v998 = vadd.f32 %v891, %v992
        %v999 = vadd.f32 %v892, %v995
        %1000 = vst [vmem:[#allocation4] sm:$0xff] %v998
        %1001 = vst [vmem:[#allocation4 + $0x8] sm:$0xff] %v999
        %p1002 = scmp.eq.s32.totalorder %s30, 3
        // Predicated region
        $region102: #{joint_block_forward.9} parent=92 // pred_check
          %p1003 = pneg %p1002
        $region103: #{joint_block_forward.9} parent=92 // pred_check_branch
          %1005 = sbr.rel (%p1003) target = $region105
        $region104: #{joint_block_forward.9} parent=92 // pred_region
          %v1006 = vld [vmem:[%s578] sm:$0x3f]
          %v1007 = vld [vmem:[#allocation4] sm:$0xff]
          %v1008 = vld [vmem:[#allocation4 + $0x8] sm:$0xff]
          %v1009 = vld [vmem:[%s8] sm:$0x1]
          %v1011 = vlaneseq
          %v1012 = vshrl.u32 %v1011, 7
          %v1013 = vsub.s32 0, %v1012
          %v1014 = vrot.slane %v1009, %v1013
          %v1016 = vadd.f32 %v1007, %v1014
          %v1017 = vadd.f32 %v1008, %v1014
          %v1018 = vlaneseq
          %v1019 = vshrl.u32 %v1018, 7
          %v1020 = vsub.s32 5, %v1019
          %v1021 = vrot.slane %v1006, %v1020
          %v1022 = vmul.f32 %v1016, %v1021
          %v1023 = vmul.f32 %v1017, %v1021
          %v1024 = vld [vmem:[#allocation2] sm:$0xff]
          %v1025 = vld [vmem:[#allocation2 + $0x8] sm:$0xff]
          %v1026 = vadd.f32 %v1022, %v1024
          %v1027 = vadd.f32 %v1023, %v1025
          %1028 = vst [vmem:[%s551] sm:$0xff] %v1026
          %1029 = vst [vmem:[%s551 + $0x8] sm:$0xff] %v1027
        $region105: #{joint_block_forward.9} parent=92 // pred_fallthru
          _
        %s1030 = sand.u32 %s277, 1
        %s1031 = scalar_lea.sflag [#allocation7], %s1030
        %s1032 = sand.u32 %s277, 1
        %s1033 = smul.addr %s1032, 16
        %s1034 = scalar_lea.vmem [#allocation6], %s1033
        // Predicated region
        $region106: #{joint_block_forward.9} parent=92 // pred_check
          %p1035 = pneg %p287
        $region107: #{joint_block_forward.9} parent=92 // pred_check_branch
          %1037 = sbr.rel (%p1035) target = $region109
        $region108: #{joint_block_forward.9} parent=92 // pred_region
          %s1038 = smul.u32 2, %s29
          %s1040 = ssub.s32 256, 256
          %1041 = vsyncadd %s1031, %s1040
          %s1042 = smul.addr %s28, 6
          %s1043 = sadd.s32 %s1038, %s1042
          %s1044 = smul.addr %s1043, 128
          %s1045 = scalar_lea.hbm %s9, %s1044
          %s1046 = sshll.u32 %s1034, 4
          %s1047 = int_to_ptr.vmem [resolvable:$true] %s1046
          %1052 = dma.vmem_to_hbm [thread:$0]  %s1047, 256, %s1045, %s1031, 128, 128, 8
        $region109: #{joint_block_forward.9} parent=92 // pred_fallthru
          _
      $region93: #{joint_block_forward.9} parent=5 // pred_fallthru
        _
      %p1053 = scmp.le.s32.totalorder 2, %s18
      // Predicated region
      $region110: #{joint_block_forward.9} parent=5 // pred_check
        %p1054 = pneg %p1053
      $region111: #{joint_block_forward.9} parent=5 // pred_check_branch
        %1056 = sbr.rel (%p1054) target = $region113
      $region112: #{joint_block_forward.9} parent=5 // pred_region
        %s1057 = ssub.s32 %s18, 2
        // Predicated region
        $region114: #{joint_block_forward.9} parent=112 // pred_check
          %p1058 = pneg %p293
        $region115: #{joint_block_forward.9} parent=112 // pred_check_branch
          %1060 = sbr.rel (%p1058) target = $region117
        $region116: #{joint_block_forward.9} parent=112 // pred_region
          %s1061 = sand.u32 %s278, 1
          %s1062 = scalar_lea.sflag [#allocation7], %s1061
          %s1063 = sand.u32 %s278, 1
          %s1064 = smul.addr %s1063, 16
          %s1065 = scalar_lea.vmem [#allocation6], %s1064
          %1066 = dma.done %s1062, 256
        $region117: #{joint_block_forward.9} parent=112 // pred_fallthru
          _
      $region113: #{joint_block_forward.9} parent=5 // pred_fallthru
        _
    $region6: #{joint_block_forward.9} parent=1 // loop_footer
      %s22 = sadd.s32 1, %s18
    $region7: #{joint_block_forward.9} parent=1 // loop_footer_branch
      %17 = sbr.rel target = $region3
    $region8: #{joint_block_forward.9} parent=1 // loop_exit
      _
    %1067 = vsyncpa [#allocation7], 1
    %s1068 = scalar_lea.sflag [#allocation7], 1
    %1069 = vsyncpa %s1068, 1

</llo_original>
